<compile_context>
chip_gen: v7x
topology: tpu7x:2x2x1
jax: 0.10.0
libtpu: 0.0.40
codegen_flags: <defaults>
</compile_context>

<pallas_src>
import functools

import jax
import jax.numpy as jnp
from jax import lax
from jax.experimental import pallas as pl
from jax.experimental.pallas import tpu as pltpu


# ----------------------------------------------------------------------------
# helpers
# ----------------------------------------------------------------------------
def _pick_tile(dim, target, aligns=(256, 128, 8)):
    """Largest tile <= target that is a multiple of one of `aligns` (tried in
    order) and divides `dim`; falls back to the full dimension (always a legal
    block shape)."""
    if dim <= target:
        return dim
    for align in aligns:
        t = (target // align) * align
        while t >= align:
            if dim % t == 0:
                return t
            t -= align
    return dim


def _heads_per_block(num_heads, head_dim):
    """Smallest divisor of num_heads whose lane span (d*head_dim) is a
    multiple of 128 (lane-dense loads/stores); falls back to all heads."""
    for d in range(1, num_heads + 1):
        if num_heads % d == 0 and (d * head_dim) % 128 == 0:
            return d
    return num_heads


# ----------------------------------------------------------------------------
# Kernel 1: tiled linear  y = x @ W (+ b)    (grid = (M/tm, N/tn, K/tk))
#   x may be f32; it is cast to the weight dtype per-tile inside the kernel
#   (fuses the bf16 cast into the matmul -> one HBM pass over x).
# ----------------------------------------------------------------------------
def _matmul_kernel(x_ref, w_ref, o_ref, acc_ref):
    @pl.when(pl.program_id(2) == 0)
    def _():
        acc_ref[...] = jnp.zeros_like(acc_ref)

    acc_ref[...] += jnp.dot(x_ref[...].astype(w_ref.dtype), w_ref[...],
                            preferred_element_type=jnp.float32)

    @pl.when(pl.program_id(2) == pl.num_programs(2) - 1)
    def _():
        o_ref[...] = acc_ref[...].astype(o_ref.dtype)


def _matmul_bias_kernel(x_ref, w_ref, b_ref, o_ref, acc_ref):
    @pl.when(pl.program_id(2) == 0)
    def _():
        acc_ref[...] = jnp.zeros_like(acc_ref)

    acc_ref[...] += jnp.dot(x_ref[...].astype(w_ref.dtype), w_ref[...],
                            preferred_element_type=jnp.float32)

    @pl.when(pl.program_id(2) == pl.num_programs(2) - 1)
    def _():
        # bias added once per output tile (f32), then cast to out dtype
        o_ref[...] = (acc_ref[...] + b_ref[...]).astype(o_ref.dtype)


def linear(x, w, b=None, *, out_dtype=None, tm=256, tn=256, tk=512):
    """x: (M, K) (any float dtype), w: (K, Nout) in (in, out) layout (bf16),
    b: (Nout,) f32 or None."""
    M, K = x.shape
    K2, Nout = w.shape
    assert K == K2
    out_dtype = out_dtype if out_dtype is not None else x.dtype

    # MXU-shaped tiles (multiples of 256/128), sized well inside a 32 MiB
    # scoped VMEM budget (safe on v7x's 64 MiB physical VMEM too).
    tm = _pick_tile(M, tm, aligns=(256, 128, 8))
    tn = _pick_tile(Nout, tn, aligns=(256, 128))
    tk = _pick_tile(K, tk, aligns=(256, 128))
    grid = (M // tm, Nout // tn, K // tk)

    in_specs = [
        pl.BlockSpec((tm, tk), lambda i, j, k: (i, k)),
        pl.BlockSpec((tk, tn), lambda i, j, k: (k, j)),
    ]
    operands = [x, w]
    if b is not None:
        in_specs.append(pl.BlockSpec((1, tn), lambda i, j, k: (0, j)))
        operands.append(b.reshape(1, Nout))
        kernel = _matmul_bias_kernel
    else:
        kernel = _matmul_kernel

    bytes_accessed = (M * K * x.dtype.itemsize
                      + K * Nout * w.dtype.itemsize
                      + M * Nout * jnp.dtype(out_dtype).itemsize)
    return pl.pallas_call(
        kernel,
        out_shape=jax.ShapeDtypeStruct((M, Nout), out_dtype),
        grid=grid,
        in_specs=in_specs,
        out_specs=pl.BlockSpec((tm, tn), lambda i, j, k: (i, j)),
        scratch_shapes=[pltpu.VMEM((tm, tn), jnp.float32)],
        compiler_params=pltpu.CompilerParams(
            dimension_semantics=("parallel", "parallel", "arbitrary"),
            vmem_limit_bytes=32 * 1024 * 1024,
        ),
        cost_estimate=pl.CostEstimate(
            flops=int(2 * M * Nout * K),
            transcendentals=0,
            bytes_accessed=int(bytes_accessed),
        ),
    )(*operands)


# ----------------------------------------------------------------------------
# Kernel 2: fused multi-head attention.
#   grid = (B, num_head_groups); each step sees lane-dense (1, N, hg*Dh)
#   windows of q / k / v cut straight out of the fused (B, N, 3C) qkv slab
#   and writes the matching window of the token-major (B, N, C) output.
#   The softmax scale is pre-folded into the qkv weight, scores/softmax stay
#   in f32, and the 1/l normalization is applied to the (N, Dh) output.
# ----------------------------------------------------------------------------
def _mhsa_kernel(q_ref, k_ref, v_ref, o_ref, *, heads_per_block, head_dim):
    for hi in range(heads_per_block):        # hg is 1 or 2 in practice
        sl = slice(hi * head_dim, (hi + 1) * head_dim)
        qh = q_ref[0, :, sl]                  # (N, Dh) bf16, scale pre-folded
        kh = k_ref[0, :, sl]
        vh = v_ref[0, :, sl]

        # s = qh @ kh^T without an explicit transpose (contract last dims).
        s = lax.dot_general(qh, kh, (((1,), (1,)), ((), ())),
                            preferred_element_type=jnp.float32)   # (N, N) f32

        # numerically-stable softmax in f32 (v5e VPU/EUP have no bf16);
        # normalize the small (N, Dh) output, not the (N, N) probabilities.
        m = jnp.max(s, axis=-1, keepdims=True)
        p = jnp.exp(s - m)
        l = jnp.sum(p, axis=-1, keepdims=True)

        oh = jnp.dot(p.astype(vh.dtype), vh,
                     preferred_element_type=jnp.float32)          # (N, Dh)
        oh = oh * pl.reciprocal(l, approx=True)   # EUP recip, N*Dh VALU muls
        o_ref[0, :, sl] = oh.astype(o_ref.dtype)

    # TODO(synk): for long sequences (N >~ 2k) add flash-style KV tiling
    # (query-tile "parallel" axis + KV "arbitrary" axis with m/l/acc scratch)
    # so only a (tq, tk) score block is live — required on v7x's 64 MiB VMEM.
    # TODO(synk): attn_drop > 0 would need a pltpu.prng_* dropout mask here;
    # module default is 0 (eval-mode no-op).


def mhsa(qkv, *, num_heads):
    """qkv: (B, N, 3C) (torch [q | k | v] layout, head-major) -> (B, N, C)."""
    B, N, C3 = qkv.shape
    C = C3 // 3
    Dh = C // num_heads
    hg = _heads_per_block(num_heads, Dh)      # heads per lane-dense block
    num_groups = num_heads // hg
    bw = hg * Dh                              # block lane width (>=128)

    kernel = functools.partial(_mhsa_kernel, heads_per_block=hg, head_dim=Dh)
    flops = 4 * B * num_heads * N * N * Dh
    bytes_accessed = B * N * (C3 + C) * qkv.dtype.itemsize
    return pl.pallas_call(
        kernel,
        out_shape=jax.ShapeDtypeStruct((B, N, C), qkv.dtype),
        grid=(B, num_groups),
        in_specs=[
            pl.BlockSpec((1, N, bw), lambda b, g: (b, 0, g)),                   # q
            pl.BlockSpec((1, N, bw), lambda b, g: (b, 0, num_groups + g)),      # k
            pl.BlockSpec((1, N, bw), lambda b, g: (b, 0, 2 * num_groups + g)),  # v
        ],
        out_specs=pl.BlockSpec((1, N, bw), lambda b, g: (b, 0, g)),
        compiler_params=pltpu.CompilerParams(
            dimension_semantics=("parallel", "parallel"),
            vmem_limit_bytes=32 * 1024 * 1024,
        ),
        cost_estimate=pl.CostEstimate(
            flops=int(flops),
            transcendentals=int(B * num_heads * N * N),
            bytes_accessed=int(bytes_accessed),
        ),
    )(qkv, qkv, qkv)


# ----------------------------------------------------------------------------
# Weight preparation: done ONCE outside the forward.
#   * transpose torch (out, in) weights to (in, out)
#   * fold the 1/sqrt(Dh) softmax scale into the q output columns (in f32)
#   * cast weights to the bf16 compute dtype once (not per call)
# ----------------------------------------------------------------------------
def prepare_attention_weights(w_qkv, w_proj, b_proj, num_heads,
                              *, compute_dtype=jnp.bfloat16):
    C = w_proj.shape[0]
    Dh = C // num_heads
    scale = float(Dh) ** -0.5
    w_qkv_t = jnp.transpose(w_qkv)            # (C, 3C), (in, out) layout
    w_qkv_t = w_qkv_t.at[:, :C].multiply(scale)   # fold softmax scale into q
    # qkv_bias=False in the module; if it were True, b_qkv[:C] would need the
    # same scale fold.
    w_proj_t = jnp.transpose(w_proj)          # (C, C), (in, out) layout
    return (w_qkv_t.astype(compute_dtype),
            w_proj_t.astype(compute_dtype),
            b_proj.astype(jnp.float32))


# ----------------------------------------------------------------------------
# Full Attention forward.
# ----------------------------------------------------------------------------
def attention_forward(x, w_qkv_t, w_proj_t, b_proj, num_heads):
    """
    x:        (B, N, C) float32
    w_qkv_t:  (C, 3C)   bf16, (in, out) layout, q columns pre-scaled
    w_proj_t: (C, C)    bf16, (in, out) layout
    b_proj:   (C,)      f32
    """
    B, N, C = x.shape
    assert C % num_heads == 0
    # TODO(synk): pad N to a multiple of 8/128 (with key masking) for real ViT
    # token counts like N=197; test shapes are already aligned.

    # qkv projection (qkv_bias=False -> no bias operand); x stays f32 in HBM,
    # the bf16 cast happens per-tile inside the matmul kernel.
    x2 = x.reshape(B * N, C)                                  # free reshape
    qkv = linear(x2, w_qkv_t, out_dtype=w_qkv_t.dtype)        # (B*N, 3C) bf16
    qkv = qkv.reshape(B, N, 3 * C)                            # free reshape

    # q_norm / k_norm are nn.Identity (qk_norm=False); attn_drop=0.
    o = mhsa(qkv, num_heads=num_heads)                        # (B, N, C) bf16

    # output projection with bias (proj_drop=0)
    out = linear(o.reshape(B * N, C), w_proj_t, b_proj, out_dtype=x.dtype)
    return out.reshape(B, N, C)


# ----------------------------------------------------------------------------
# Pure-JAX f32 reference (faithful to the PyTorch module)
# ----------------------------------------------------------------------------
def attention_reference(x, w_qkv, w_proj, b_proj, num_heads):
    B, N, C = x.shape
    Dh = C // num_heads
    qkv = x @ w_qkv.T
    qkv = qkv.reshape(B, N, 3, num_heads, Dh).transpose(2, 0, 3, 1, 4)
    q, k, v = qkv[0], qkv[1], qkv[2]
    s = jnp.einsum("bhqd,bhkd->bhqk", q, k) * (float(Dh) ** -0.5)
    p = jax.nn.softmax(s, axis=-1)
    o = jnp.einsum("bhqk,bhkd->bhqd", p, v)
    o = o.transpose(0, 2, 1, 3).reshape(B, N, C)
    return o @ w_proj.T + b_proj


if __name__ == "__main__":
    # Small but TPU-friendly shapes: C multiple of 128, head_dim = 128.
    B, N, C = 2, 128, 256
    num_heads = 2

    key = jax.random.PRNGKey(0)
    kx, kw1, kw2, kb2 = jax.random.split(key, 4)

    x = jax.random.normal(kx, (B, N, C), dtype=jnp.float32)
    w_qkv = jax.random.normal(kw1, (3 * C, C), dtype=jnp.float32) * 0.05  # torch (out, in)
    w_proj = jax.random.normal(kw2, (C, C), dtype=jnp.float32) * 0.05
    b_proj = jax.random.normal(kb2, (C,), dtype=jnp.float32) * 0.1

    # Pre-transpose / pre-scale / pre-cast weights ONCE (outside the forward).
    w_qkv_t, w_proj_t, b_proj_f32 = prepare_attention_weights(
        w_qkv, w_proj, b_proj, num_heads)

    fwd = jax.jit(functools.partial(attention_forward, num_heads=num_heads))
    out = jax.block_until_ready(fwd(x, w_qkv_t, w_proj_t, b_proj_f32))

    ref = attention_reference(x, w_qkv, w_proj, b_proj, num_heads)
    assert out.shape == (B, N, C)
    max_err = float(jnp.max(jnp.abs(out.astype(jnp.float32) - ref)))
    # bf16 MXU inputs + approx reciprocal -> compare loosely vs the f32 ref.
    assert jnp.allclose(out.astype(jnp.float32), ref, atol=1e-2, rtol=1e-2), (
        f"mismatch vs reference (max abs err {max_err:.3e})")

    print("KERNEL_OK")
</pallas_src>

<mosaic_0001>
module attributes {stable_mosaic.version = 11 : i64} {
  func.func @_matmul_kernel(%arg0: i32, %arg1: i32, %arg2: i32, %arg3: memref<256x256xf32, #tpu.memory_space<vmem>>, %arg4: memref<256x256xbf16, #tpu.memory_space<vmem>>, %arg5: memref<256x256xbf16, #tpu.memory_space<vmem>>, %arg6: memref<256x256xf32, #tpu.memory_space<vmem>>) attributes {dimension_semantics = [#tpu.dimension_semantics<parallel>, #tpu.dimension_semantics<parallel>, #tpu.dimension_semantics<arbitrary>], iteration_bounds = array<i64: 1, 3, 1>, scalar_prefetch = 0 : i64, scratch_operands = 1 : i64, tpu.core_type = #tpu.core_type<tc>, window_params = [{transform_indices = @transform_0, window_bounds = array<i64: 256, 256>}, {transform_indices = @transform_1, window_bounds = array<i64: 256, 256>}, {transform_indices = @transform_2, window_bounds = array<i64: 256, 256>}]} {
    %c0_i32 = arith.constant 0 : i32
    %0 = arith.cmpi eq, %arg2, %c0_i32 : i32
    %1 = arith.extui %0 : i1 to i32
    %c0_i32_0 = arith.constant 0 : i32
    %2 = arith.cmpi ne, %1, %c0_i32_0 : i32
    scf.if %2 {
      %cst_10 = arith.constant 0.000000e+00 : f32
      %13 = vector.broadcast %cst_10 : f32 to vector<256x256xf32>
      %c0_11 = arith.constant 0 : index
      %c0_12 = arith.constant 0 : index
      %14 = vector.load %arg6[%c0_11, %c0_12] : memref<256x256xf32, #tpu.memory_space<vmem>>, vector<256x256xf32>
      tpu.vector_store %arg6[%c0_11, %c0_12], %13 {strides = array<i32>} : memref<256x256xf32, #tpu.memory_space<vmem>>, vector<256x256xf32>,
    } else {
    }
    %c0 = arith.constant 0 : index
    %c0_1 = arith.constant 0 : index
    %3 = vector.load %arg6[%c0, %c0_1] : memref<256x256xf32, #tpu.memory_space<vmem>>, vector<256x256xf32>
    %c0_2 = arith.constant 0 : index
    %c0_3 = arith.constant 0 : index
    %4 = vector.load %arg3[%c0_2, %c0_3] : memref<256x256xf32, #tpu.memory_space<vmem>>, vector<256x256xf32>
    %5 = arith.truncf %4 : vector<256x256xf32> to vector<256x256xbf16>
    %c0_4 = arith.constant 0 : index
    %c0_5 = arith.constant 0 : index
    %6 = vector.load %arg4[%c0_4, %c0_5] : memref<256x256xbf16, #tpu.memory_space<vmem>>, vector<256x256xbf16>
    %cst = arith.constant dense<0.000000e+00> : vector<256x256xf32>
    %7 = tpu.matmul %5, %6, %cst {dimension_numbers = #tpu.dot_dimension_numbers<[1], [0], [0], [1], [0, 0, 1, 1], [], []>} : vector<256x256xbf16>, vector<256x256xbf16>, vector<256x256xf32> -> vector<256x256xf32>
    %8 = arith.addf %3, %7 : vector<256x256xf32>
    %c0_6 = arith.constant 0 : index
    %c0_7 = arith.constant 0 : index
    %9 = vector.load %arg6[%c0_6, %c0_7] : memref<256x256xf32, #tpu.memory_space<vmem>>, vector<256x256xf32>
    tpu.vector_store %arg6[%c0_6, %c0_7], %8 {strides = array<i32>} : memref<256x256xf32, #tpu.memory_space<vmem>>, vector<256x256xf32>,
    %c0_i32_8 = arith.constant 0 : i32
    %10 = arith.cmpi eq, %arg2, %c0_i32_8 : i32
    %11 = arith.extui %10 : i1 to i32
    %c0_i32_9 = arith.constant 0 : i32
    %12 = arith.cmpi ne, %11, %c0_i32_9 : i32
    scf.if %12 {
      %c0_10 = arith.constant 0 : index
      %c0_11 = arith.constant 0 : index
      %13 = vector.load %arg6[%c0_10, %c0_11] : memref<256x256xf32, #tpu.memory_space<vmem>>, vector<256x256xf32>
      %14 = arith.truncf %13 : vector<256x256xf32> to vector<256x256xbf16>
      %c0_12 = arith.constant 0 : index
      %c0_13 = arith.constant 0 : index
      %15 = vector.load %arg5[%c0_12, %c0_13] : memref<256x256xbf16, #tpu.memory_space<vmem>>, vector<256x256xbf16>
      tpu.vector_store %arg5[%c0_12, %c0_13], %14 {strides = array<i32>} : memref<256x256xbf16, #tpu.memory_space<vmem>>, vector<256x256xbf16>,
    } else {
    }
    return
  }
  func.func @transform_0(%arg0: i32, %arg1: i32, %arg2: i32) -> (i32, i32) {
    %c0_i32 = arith.constant 0 : i32
    return %arg0, %arg2 : i32, i32
  }
  func.func @transform_1(%arg0: i32, %arg1: i32, %arg2: i32) -> (i32, i32) {
    %c0_i32 = arith.constant 0 : i32
    return %arg2, %arg1 : i32, i32
  }
  func.func @transform_2(%arg0: i32, %arg1: i32, %arg2: i32) -> (i32, i32) {
    %c0_i32 = arith.constant 0 : i32
    return %arg0, %arg1 : i32, i32
  }
}

module attributes {stable_mosaic.version = 11 : i64} {
  func.func @_mhsa_kernel(%arg0: i32, %arg1: i32, %arg2: memref<1x128x128xbf16, #tpu.memory_space<vmem>>, %arg3: memref<1x128x128xbf16, #tpu.memory_space<vmem>>, %arg4: memref<1x128x128xbf16, #tpu.memory_space<vmem>>, %arg5: memref<1x128x128xbf16, #tpu.memory_space<vmem>>) attributes {dimension_semantics = [#tpu.dimension_semantics<parallel>, #tpu.dimension_semantics<parallel>], iteration_bounds = array<i64: 2, 2>, scalar_prefetch = 0 : i64, scratch_operands = 0 : i64, tpu.core_type = #tpu.core_type<tc>, window_params = [{transform_indices = @transform_0, window_bounds = array<i64: 1, 128, 128>}, {transform_indices = @transform_1, window_bounds = array<i64: 1, 128, 128>}, {transform_indices = @transform_2, window_bounds = array<i64: 1, 128, 128>}, {transform_indices = @transform_3, window_bounds = array<i64: 1, 128, 128>}]} {
    %c0 = arith.constant 0 : index
    %c0_0 = arith.constant 0 : index
    %c0_1 = arith.constant 0 : index
    %0 = vector.load %arg2[%c0, %c0_0, %c0_1] : memref<1x128x128xbf16, #tpu.memory_space<vmem>>, vector<1x128x128xbf16>
    %1 = vector.shape_cast %0 : vector<1x128x128xbf16> to vector<128x128xbf16>
    %c0_2 = arith.constant 0 : index
    %c0_3 = arith.constant 0 : index
    %c0_4 = arith.constant 0 : index
    %2 = vector.load %arg3[%c0_2, %c0_3, %c0_4] : memref<1x128x128xbf16, #tpu.memory_space<vmem>>, vector<1x128x128xbf16>
    %3 = vector.shape_cast %2 : vector<1x128x128xbf16> to vector<128x128xbf16>
    %c0_5 = arith.constant 0 : index
    %c0_6 = arith.constant 0 : index
    %c0_7 = arith.constant 0 : index
    %4 = vector.load %arg4[%c0_5, %c0_6, %c0_7] : memref<1x128x128xbf16, #tpu.memory_space<vmem>>, vector<1x128x128xbf16>
    %5 = vector.shape_cast %4 : vector<1x128x128xbf16> to vector<128x128xbf16>
    %cst = arith.constant dense<0.000000e+00> : vector<128x128xf32>
    %6 = tpu.matmul %1, %3, %cst {dimension_numbers = #tpu.dot_dimension_numbers<[1], [1], [0], [0], [0, 0, 1, 0], [], []>} : vector<128x128xbf16>, vector<128x128xbf16>, vector<128x128xf32> -> vector<128x128xf32>
    %cst_8 = arith.constant dense<0xFF800000> : vector<128xf32>
    %7 = vector.multi_reduction <maximumf>, %6, %cst_8 [1] : vector<128x128xf32> to vector<128xf32>
    %8 = vector.shape_cast %7 : vector<128xf32> to vector<128x1xf32>
    %9 = vector.broadcast %8 : vector<128x1xf32> to vector<128x128xf32>
    %10 = arith.subf %6, %9 : vector<128x128xf32>
    %11 = math.exp %10 : vector<128x128xf32>
    %cst_9 = arith.constant dense<0.000000e+00> : vector<128xf32>
    %12 = vector.multi_reduction <add>, %11, %cst_9 [1] : vector<128x128xf32> to vector<128xf32>
    %13 = vector.shape_cast %12 : vector<128xf32> to vector<128x1xf32>
    %14 = arith.truncf %11 : vector<128x128xf32> to vector<128x128xbf16>
    %cst_10 = arith.constant dense<0.000000e+00> : vector<128x128xf32>
    %15 = tpu.matmul %14, %5, %cst_10 {dimension_numbers = #tpu.dot_dimension_numbers<[1], [0], [0], [1], [0, 0, 1, 1], [], []>} : vector<128x128xbf16>, vector<128x128xbf16>, vector<128x128xf32> -> vector<128x128xf32>
    %16 = tpu.reciprocal %13 {approx = true} : vector<128x1xf32> -> vector<128x1xf32>
    %17 = vector.broadcast %16 : vector<128x1xf32> to vector<128x128xf32>
    %18 = arith.mulf %15, %17 : vector<128x128xf32>
    %19 = arith.truncf %18 : vector<128x128xf32> to vector<128x128xbf16>
    %c0_11 = arith.constant 0 : index
    %c0_12 = arith.constant 0 : index
    %c0_13 = arith.constant 0 : index
    %20 = vector.load %arg5[%c0_11, %c0_12, %c0_13] : memref<1x128x128xbf16, #tpu.memory_space<vmem>>, vector<1x128x128xbf16>
    %21 = vector.shape_cast %20 : vector<1x128x128xbf16> to vector<128x128xbf16>
    %22 = vector.shape_cast %19 : vector<128x128xbf16> to vector<1x128x128xbf16>
    tpu.vector_store %arg5[%c0_11, %c0_12, %c0_13], %22 {strides = array<i32>} : memref<1x128x128xbf16, #tpu.memory_space<vmem>>, vector<1x128x128xbf16>,
    return
  }
  func.func @transform_0(%arg0: i32, %arg1: i32) -> (i32, i32, i32) {
    %c0_i32 = arith.constant 0 : i32
    %c0_i32_0 = arith.constant 0 : i32
    return %arg0, %c0_i32, %arg1 : i32, i32, i32
  }
  func.func @transform_1(%arg0: i32, %arg1: i32) -> (i32, i32, i32) {
    %c2_i32 = arith.constant 2 : i32
    %0 = arith.addi %c2_i32, %arg1 : i32
    %c0_i32 = arith.constant 0 : i32
    %c0_i32_0 = arith.constant 0 : i32
    return %arg0, %c0_i32, %0 : i32, i32, i32
  }
  func.func @transform_2(%arg0: i32, %arg1: i32) -> (i32, i32, i32) {
    %c4_i32 = arith.constant 4 : i32
    %0 = arith.addi %c4_i32, %arg1 : i32
    %c0_i32 = arith.constant 0 : i32
    %c0_i32_0 = arith.constant 0 : i32
    return %arg0, %c0_i32, %0 : i32, i32, i32
  }
  func.func @transform_3(%arg0: i32, %arg1: i32) -> (i32, i32, i32) {
    %c0_i32 = arith.constant 0 : i32
    %c0_i32_0 = arith.constant 0 : i32
    return %arg0, %c0_i32, %arg1 : i32, i32, i32
  }
}

module attributes {stable_mosaic.version = 11 : i64} {
  func.func @_matmul_bias_kernel(%arg0: i32, %arg1: i32, %arg2: i32, %arg3: memref<256x256xbf16, #tpu.memory_space<vmem>>, %arg4: memref<256x256xbf16, #tpu.memory_space<vmem>>, %arg5: memref<1x256xf32, #tpu.memory_space<vmem>>, %arg6: memref<256x256xf32, #tpu.memory_space<vmem>>, %arg7: memref<256x256xf32, #tpu.memory_space<vmem>>) attributes {dimension_semantics = [#tpu.dimension_semantics<parallel>, #tpu.dimension_semantics<parallel>, #tpu.dimension_semantics<arbitrary>], iteration_bounds = array<i64: 1, 1, 1>, scalar_prefetch = 0 : i64, scratch_operands = 1 : i64, tpu.core_type = #tpu.core_type<tc>, window_params = [{transform_indices = @transform_0, window_bounds = array<i64: 256, 256>}, {transform_indices = @transform_1, window_bounds = array<i64: 256, 256>}, {transform_indices = @transform_2, window_bounds = array<i64: 1, 256>}, {transform_indices = @transform_3, window_bounds = array<i64: 256, 256>}]} {
    %c0_i32 = arith.constant 0 : i32
    %0 = arith.cmpi eq, %arg2, %c0_i32 : i32
    %1 = arith.extui %0 : i1 to i32
    %c0_i32_0 = arith.constant 0 : i32
    %2 = arith.cmpi ne, %1, %c0_i32_0 : i32
    scf.if %2 {
      %cst_10 = arith.constant 0.000000e+00 : f32
      %12 = vector.broadcast %cst_10 : f32 to vector<256x256xf32>
      %c0_11 = arith.constant 0 : index
      %c0_12 = arith.constant 0 : index
      %13 = vector.load %arg7[%c0_11, %c0_12] : memref<256x256xf32, #tpu.memory_space<vmem>>, vector<256x256xf32>
      tpu.vector_store %arg7[%c0_11, %c0_12], %12 {strides = array<i32>} : memref<256x256xf32, #tpu.memory_space<vmem>>, vector<256x256xf32>,
    } else {
    }
    %c0 = arith.constant 0 : index
    %c0_1 = arith.constant 0 : index
    %3 = vector.load %arg7[%c0, %c0_1] : memref<256x256xf32, #tpu.memory_space<vmem>>, vector<256x256xf32>
    %c0_2 = arith.constant 0 : index
    %c0_3 = arith.constant 0 : index
    %4 = vector.load %arg3[%c0_2, %c0_3] : memref<256x256xbf16, #tpu.memory_space<vmem>>, vector<256x256xbf16>
    %c0_4 = arith.constant 0 : index
    %c0_5 = arith.constant 0 : index
    %5 = vector.load %arg4[%c0_4, %c0_5] : memref<256x256xbf16, #tpu.memory_space<vmem>>, vector<256x256xbf16>
    %cst = arith.constant dense<0.000000e+00> : vector<256x256xf32>
    %6 = tpu.matmul %4, %5, %cst {dimension_numbers = #tpu.dot_dimension_numbers<[1], [0], [0], [1], [0, 0, 1, 1], [], []>} : vector<256x256xbf16>, vector<256x256xbf16>, vector<256x256xf32> -> vector<256x256xf32>
    %7 = arith.addf %3, %6 : vector<256x256xf32>
    %c0_6 = arith.constant 0 : index
    %c0_7 = arith.constant 0 : index
    %8 = vector.load %arg7[%c0_6, %c0_7] : memref<256x256xf32, #tpu.memory_space<vmem>>, vector<256x256xf32>
    tpu.vector_store %arg7[%c0_6, %c0_7], %7 {strides = array<i32>} : memref<256x256xf32, #tpu.memory_space<vmem>>, vector<256x256xf32>,
    %c0_i32_8 = arith.constant 0 : i32
    %9 = arith.cmpi eq, %arg2, %c0_i32_8 : i32
    %10 = arith.extui %9 : i1 to i32
    %c0_i32_9 = arith.constant 0 : i32
    %11 = arith.cmpi ne, %10, %c0_i32_9 : i32
    scf.if %11 {
      %c0_10 = arith.constant 0 : index
      %c0_11 = arith.constant 0 : index
      %12 = vector.load %arg7[%c0_10, %c0_11] : memref<256x256xf32, #tpu.memory_space<vmem>>, vector<256x256xf32>
      %c0_12 = arith.constant 0 : index
      %c0_13 = arith.constant 0 : index
      %13 = vector.load %arg5[%c0_12, %c0_13] : memref<1x256xf32, #tpu.memory_space<vmem>>, vector<1x256xf32>
      %14 = vector.broadcast %13 : vector<1x256xf32> to vector<256x256xf32>
      %15 = arith.addf %12, %14 : vector<256x256xf32>
      %c0_14 = arith.constant 0 : index
      %c0_15 = arith.constant 0 : index
      %16 = vector.load %arg6[%c0_14, %c0_15] : memref<256x256xf32, #tpu.memory_space<vmem>>, vector<256x256xf32>
      tpu.vector_store %arg6[%c0_14, %c0_15], %15 {strides = array<i32>} : memref<256x256xf32, #tpu.memory_space<vmem>>, vector<256x256xf32>,
    } else {
    }
    return
  }
  func.func @transform_0(%arg0: i32, %arg1: i32, %arg2: i32) -> (i32, i32) {
    %c0_i32 = arith.constant 0 : i32
    return %arg0, %arg2 : i32, i32
  }
  func.func @transform_1(%arg0: i32, %arg1: i32, %arg2: i32) -> (i32, i32) {
    %c0_i32 = arith.constant 0 : i32
    return %arg2, %arg1 : i32, i32
  }
  func.func @transform_2(%arg0: i32, %arg1: i32, %arg2: i32) -> (i32, i32) {
    %c0_i32 = arith.constant 0 : i32
    %c0_i32_0 = arith.constant 0 : i32
    return %c0_i32, %arg1 : i32, i32
  }
  func.func @transform_3(%arg0: i32, %arg1: i32, %arg2: i32) -> (i32, i32) {
    %c0_i32 = arith.constant 0 : i32
    return %arg0, %arg1 : i32, i32
  }
}

</mosaic_0001>

<llo_original>
// kernel: attention_forward.4
$region0: #{attention_forward.4}
  #allocation0 [shape = 'u32[]', space=smem, size = 0x4, offset = 0x4, fixed_abs, tag = 'smem constant byte address 0x4 - core index']
  #allocation1 [shape = 'u32[144,128]{1,0:T(1,128)}', space=vmem, size = 0x12000, scoped, tag = 'internal scratch']
  %s0 = inlined_call_operand.vmem [shape: bf16[2,128,768], index: 0, kind: input, shape index: {}, may-alias: {0,1,2}]
  %s1 = inlined_call_operand.vmem [shape: bf16[2,128,768], index: 1, kind: input, shape index: {}, may-alias: {0,1,2}]
  %s2 = inlined_call_operand.vmem [shape: bf16[2,128,768], index: 2, kind: input, shape index: {}, may-alias: {0,1,2}]
  %s3 = inlined_call_operand.vmem [shape: bf16[2,128,256], index: 3, kind: output, shape index: {}]
  %s4 = sld [smem:[#allocation0]]
  $region205: #{attention_forward.4} parent=0
    _
  %s6 = ssub.s32 1, %s4
  %s7 = scalar_select 0, %s6, %s4
  $region1: #{attention_forward.4} parent=0
    #allocation2 [shape = 'u8[65536]{0}', space=vmem, size = 0x10000, scoped, tag = 'input window, operand 0']
    #allocation3 [shape = 'u8[65536]{0}', space=vmem, size = 0x10000, scoped, tag = 'input window, operand 1']
    #allocation4 [shape = 'u8[65536]{0}', space=vmem, size = 0x10000, scoped, tag = 'input window, operand 2']
    #allocation5 [shape = 'u8[65536]{0}', space=vmem, size = 0x10000, scoped, tag = 'output window, operand 0']
    loop: start=0, step=1, limit=6
    $region2: #{attention_forward.4} parent=1 // loop_pre_header
      _
    $region3: #{attention_forward.4} parent=1 // loop_header
      %s9 = sphi 0, %s13
      %p10 = scmp.ge.s32.totalorder %s9, 6
      %s16 = sphi 0, %s28
      %s17 = sphi 0, %s24
      %s18 = sphi 0, %s16
      %s19 = sphi 0, %s17
      %s20 = sphi 0, %s18
      %s21 = sphi 0, %s19
      %s33 = sphi 0, %s35
      %s36 = sphi 0, %s33
      %s37 = sphi 0, %s36
      %s53 = sphi 0, %s37
      %s63 = sphi 0, %s65
      %s66 = sphi 0, %s63
      %s67 = sphi 0, %s66
      %s83 = sphi 0, %s67
      %s93 = sphi 0, %s95
      %s96 = sphi 0, %s93
      %s97 = sphi 0, %s96
      %s113 = sphi 0, %s97
      %s121 = sphi 0, %s123
      %s124 = sphi 0, %s121
      %s125 = sphi 0, %s124
      %s141 = sphi 0, %s125
    $region4: #{attention_forward.4} parent=1 // loop_header_branch
      %12 = sbr.rel (%p10) target = $region8
    $region5: #{attention_forward.4} parent=1 // loop_body
      %s14 = ssub.s32 %s9, 1
      %s15 = ssub.s32 %s9, 2
      %s22 = sadd.s32 1, %s17
      %p23 = scmp.ge.s32.totalorder %s22, 2
      %s24 = scalar_select %p23, 0, %s22
      %s25 = sadd.s32 1, %s16
      %s26 = scalar_select %p23, %s25, %s16
      %p27 = scmp.ge.s32.totalorder %s26, 2
      %s28 = scalar_select %p27, 0, %s26
      %s29 = ssub.s32 %s16, %s28
      %s30 = ssub.s32 %s17, %s24
      %s31 = sor.u32 %s29, %s30
      %p32 = scmp.eq.s32.totalorder %s31, 0
      %s34 = sadd.s32 %s33, 1
      %s35 = scalar_select %p32, %s33, %s34
      %p38 = pneg %p32
      %p39 = scmp.eq.s32.totalorder %s9, 3
      %p40 = por %p38, %p39
      %p41 = scmp.ne.s32.totalorder %s33, %s36
      %p42 = scmp.eq.s32.totalorder %s9, 0
      %p43 = por %p41, %p42
      %p44 = scmp.ne.s32.totalorder %s33, %s36
      %p45 = scmp.eq.s32.totalorder %s14, 3
      %p46 = por %p44, %p45
      %p47 = scmp.ne.s32.totalorder %s36, %s37
      %p48 = scmp.eq.s32.totalorder %s14, 0
      %p49 = por %p47, %p48
      %p50 = scmp.ne.s32.totalorder %s36, %s37
      %p51 = scmp.eq.s32.totalorder %s15, 3
      %p52 = por %p50, %p51
      %p54 = scmp.ne.s32.totalorder %s37, %s53
      %p55 = scmp.eq.s32.totalorder %s15, 0
      %p56 = por %p54, %p55
      %s57 = sadd.s32 %s17, 2
      %s58 = sadd.s32 %s24, 2
      %s59 = ssub.s32 %s16, %s28
      %s60 = ssub.s32 %s57, %s58
      %s61 = sor.u32 %s59, %s60
      %p62 = scmp.eq.s32.totalorder %s61, 0
      %s64 = sadd.s32 %s63, 1
      %s65 = scalar_select %p62, %s63, %s64
      %p68 = pneg %p62
      %p69 = scmp.eq.s32.totalorder %s9, 3
      %p70 = por %p68, %p69
      %p71 = scmp.ne.s32.totalorder %s63, %s66
      %p72 = scmp.eq.s32.totalorder %s9, 0
      %p73 = por %p71, %p72
      %p74 = scmp.ne.s32.totalorder %s63, %s66
      %p75 = scmp.eq.s32.totalorder %s14, 3
      %p76 = por %p74, %p75
      %p77 = scmp.ne.s32.totalorder %s66, %s67
      %p78 = scmp.eq.s32.totalorder %s14, 0
      %p79 = por %p77, %p78
      %p80 = scmp.ne.s32.totalorder %s66, %s67
      %p81 = scmp.eq.s32.totalorder %s15, 3
      %p82 = por %p80, %p81
      %p84 = scmp.ne.s32.totalorder %s67, %s83
      %p85 = scmp.eq.s32.totalorder %s15, 0
      %p86 = por %p84, %p85
      %s87 = sadd.s32 %s17, 4
      %s88 = sadd.s32 %s24, 4
      %s89 = ssub.s32 %s16, %s28
      %s90 = ssub.s32 %s87, %s88
      %s91 = sor.u32 %s89, %s90
      %p92 = scmp.eq.s32.totalorder %s91, 0
      %s94 = sadd.s32 %s93, 1
      %s95 = scalar_select %p92, %s93, %s94
      %p98 = pneg %p92
      %p99 = scmp.eq.s32.totalorder %s9, 3
      %p100 = por %p98, %p99
      %p101 = scmp.ne.s32.totalorder %s93, %s96
      %p102 = scmp.eq.s32.totalorder %s9, 0
      %p103 = por %p101, %p102
      %p104 = scmp.ne.s32.totalorder %s93, %s96
      %p105 = scmp.eq.s32.totalorder %s14, 3
      %p106 = por %p104, %p105
      %p107 = scmp.ne.s32.totalorder %s96, %s97
      %p108 = scmp.eq.s32.totalorder %s14, 0
      %p109 = por %p107, %p108
      %p110 = scmp.ne.s32.totalorder %s96, %s97
      %p111 = scmp.eq.s32.totalorder %s15, 3
      %p112 = por %p110, %p111
      %p114 = scmp.ne.s32.totalorder %s97, %s113
      %p115 = scmp.eq.s32.totalorder %s15, 0
      %p116 = por %p114, %p115
      %s117 = ssub.s32 %s16, %s28
      %s118 = ssub.s32 %s17, %s24
      %s119 = sor.u32 %s117, %s118
      %p120 = scmp.eq.s32.totalorder %s119, 0
      %s122 = sadd.s32 %s121, 1
      %s123 = scalar_select %p120, %s121, %s122
      %p126 = pneg %p120
      %p127 = scmp.eq.s32.totalorder %s9, 3
      %p128 = por %p126, %p127
      %p129 = scmp.ne.s32.totalorder %s121, %s124
      %p130 = scmp.eq.s32.totalorder %s9, 0
      %p131 = por %p129, %p130
      %p132 = scmp.ne.s32.totalorder %s121, %s124
      %p133 = scmp.eq.s32.totalorder %s14, 3
      %p134 = por %p132, %p133
      %p135 = scmp.ne.s32.totalorder %s124, %s125
      %p136 = scmp.eq.s32.totalorder %s14, 0
      %p137 = por %p135, %p136
      %p138 = scmp.ne.s32.totalorder %s124, %s125
      %p139 = scmp.eq.s32.totalorder %s15, 3
      %p140 = por %p138, %p139
      %p142 = scmp.ne.s32.totalorder %s125, %s141
      %p143 = scmp.eq.s32.totalorder %s15, 0
      %p144 = por %p142, %p143
      %p145 = scmp.le.s32.totalorder 1, %s9
      %p146 = scmp.lt.s32.totalorder %s9, 5
      %p147 = pnand %p145, %p146
      %p148 = pneg %p147
      // Predicated region
      $region9: #{attention_forward.4} parent=5 // pred_check
        _
      $region10: #{attention_forward.4} parent=5 // pred_check_branch
        %150 = sbr.rel (%p147) target = $region12
      $region11: #{attention_forward.4} parent=5 // pred_region
        %s151 = ssub.s32 %s9, 1
      $region12: #{attention_forward.4} parent=5 // pred_fallthru
        _
      %p152 = scmp.lt.s32.totalorder %s9, 4
      // Predicated region
      $region13: #{attention_forward.4} parent=5 // pred_check
        %p153 = pneg %p152
      $region14: #{attention_forward.4} parent=5 // pred_check_branch
        %155 = sbr.rel (%p153) target = $region16
      $region15: #{attention_forward.4} parent=5 // pred_region
        // Predicated region
        $region17: #{attention_forward.4} parent=15 // pred_check
          %p156 = pneg %p43
        $region18: #{attention_forward.4} parent=15 // pred_check_branch
          %158 = sbr.rel (%p156) target = $region20
        $region19: #{attention_forward.4} parent=15 // pred_region
          %s159 = sand.u32 %s33, 1
          %s160 = sand.u32 %s33, 1
          %s161 = smul.addr %s160, 64
          %s162 = scalar_lea.vmem [#allocation2], %s161
          %s163 = smul.addr %s16, 96
          %s164 = sadd.s32 %s17, %s163
          %s165 = smul.addr %s164, 4
          %s166 = scalar_lea.vmem %s0, %s165
          // Predicated region
          $region21: #{attention_forward.4} parent=19 // pred_check
            _
          $region22: #{attention_forward.4} parent=19 // pred_check_branch
            %168 = sbr.rel (0) target = $region24
          $region23: #{attention_forward.4} parent=19 // pred_region
            // Predicated region
            $region25: #{attention_forward.4} parent=23 // pred_check
              _
            $region26: #{attention_forward.4} parent=23 // pred_check_branch
              %170 = sbr.rel target = $region28
            $region27: #{attention_forward.4} parent=23 // pred_region
              // Predicated region
              $region40: #{attention_forward.4} parent=27 // pred_check
                _
              $region41: #{attention_forward.4} parent=27 // pred_check_branch
                %215 = sbr.rel (0) target = $region43
              $region42: #{attention_forward.4} parent=27 // pred_region
                loop: start=0, step=1, limit=1
                $region44: #{attention_forward.4} parent=42 // loop_pre_header
                  _
                $region45: #{attention_forward.4} parent=42 // loop_header
                  %s217 = sphi 0, %s221
                  %p218 = scmp.ge.s32.totalorder %s217, 1
                  %s222 = sphi %s166, %s166
                  %s223 = sphi %s162, %s162
                $region46: #{attention_forward.4} parent=42 // loop_header_branch
                  %220 = sbr.rel (%p218) target = $region50
                $region47: #{attention_forward.4} parent=42 // loop_body
                  _
                $region48: #{attention_forward.4} parent=42 // loop_footer
                  %s221 = sadd.s32 1, %s217
                $region49: #{attention_forward.4} parent=42 // loop_footer_branch
                  %216 = sbr.rel target = $region45
                $region50: #{attention_forward.4} parent=42 // loop_exit
                  _
                loop: start=0, step=1, limit=1
                $region51: #{attention_forward.4} parent=42 // loop_pre_header
                  _
                $region52: #{attention_forward.4} parent=42 // loop_header
                  %s226 = sphi 0, %s230
                  %p227 = scmp.ge.s32.totalorder %s226, 1
                  %s231 = sphi %s166, %s166
                  %s232 = sphi %s162, %s162
                $region53: #{attention_forward.4} parent=42 // loop_header_branch
                  %229 = sbr.rel (%p227) target = $region57
                $region54: #{attention_forward.4} parent=42 // loop_body
                  %v233 = vld [vmem:[%s231] sm:$0xf]
                  %234 = vst [vmem:[%s232] sm:$0xf] %v233
                  %v235 = vld [vmem:[%s231 + $0x18] sm:$0xf]
                  %236 = vst [vmem:[%s232 + $0x4] sm:$0xf] %v235
                  %v237 = vld [vmem:[%s231 + $0x30] sm:$0xf]
                  %238 = vst [vmem:[%s232 + $0x8] sm:$0xf] %v237
                  %v239 = vld [vmem:[%s231 + $0x48] sm:$0xf]
                  %240 = vst [vmem:[%s232 + $0xc] sm:$0xf] %v239
                  %v241 = vld [vmem:[%s231 + $0x60] sm:$0xf]
                  %242 = vst [vmem:[%s232 + $0x10] sm:$0xf] %v241
                  %v243 = vld [vmem:[%s231 + $0x78] sm:$0xf]
                  %244 = vst [vmem:[%s232 + $0x14] sm:$0xf] %v243
                  %v245 = vld [vmem:[%s231 + $0x90] sm:$0xf]
                  %246 = vst [vmem:[%s232 + $0x18] sm:$0xf] %v245
                  %v247 = vld [vmem:[%s231 + $0xa8] sm:$0xf]
                  %248 = vst [vmem:[%s232 + $0x1c] sm:$0xf] %v247
                  %v249 = vld [vmem:[%s231 + $0xc0] sm:$0xf]
                  %250 = vst [vmem:[%s232 + $0x20] sm:$0xf] %v249
                  %v251 = vld [vmem:[%s231 + $0xd8] sm:$0xf]
                  %252 = vst [vmem:[%s232 + $0x24] sm:$0xf] %v251
                  %v253 = vld [vmem:[%s231 + $0xf0] sm:$0xf]
                  %254 = vst [vmem:[%s232 + $0x28] sm:$0xf] %v253
                  %v255 = vld [vmem:[%s231 + $0x108] sm:$0xf]
                  %256 = vst [vmem:[%s232 + $0x2c] sm:$0xf] %v255
                  %v257 = vld [vmem:[%s231 + $0x120] sm:$0xf]
                  %258 = vst [vmem:[%s232 + $0x30] sm:$0xf] %v257
                  %v259 = vld [vmem:[%s231 + $0x138] sm:$0xf]
                  %260 = vst [vmem:[%s232 + $0x34] sm:$0xf] %v259
                  %v261 = vld [vmem:[%s231 + $0x150] sm:$0xf]
                  %262 = vst [vmem:[%s232 + $0x38] sm:$0xf] %v261
                  %v263 = vld [vmem:[%s231 + $0x168] sm:$0xf]
                  %264 = vst [vmem:[%s232 + $0x3c] sm:$0xf] %v263
                $region55: #{attention_forward.4} parent=42 // loop_footer
                  %s230 = sadd.s32 1, %s226
                $region56: #{attention_forward.4} parent=42 // loop_footer_branch
                  %225 = sbr.rel target = $region52
                $region57: #{attention_forward.4} parent=42 // loop_exit
                  _
              $region43: #{attention_forward.4} parent=27 // pred_fallthru
                _
            $region28: #{attention_forward.4} parent=23 // pred_fallthru
              _
            // Predicated region
            $region29: #{attention_forward.4} parent=23 // pred_check
              _
            $region30: #{attention_forward.4} parent=23 // pred_check_branch
              %172 = sbr.rel (0) target = $region32
            $region31: #{attention_forward.4} parent=23 // pred_region
              loop: start=0, step=1, limit=1
              $region33: #{attention_forward.4} parent=31 // loop_pre_header
                _
              $region34: #{attention_forward.4} parent=31 // loop_header
                %s175 = sphi 0, %s179
                %p176 = scmp.ge.s32.totalorder %s175, 1
                %s180 = sphi %s166, %s166
                %s181 = sphi %s162, %s162
              $region35: #{attention_forward.4} parent=31 // loop_header_branch
                %178 = sbr.rel (%p176) target = $region39
              $region36: #{attention_forward.4} parent=31 // loop_body
                %v182 = vld [vmem:[%s180] sm:$0xf]
                %183 = vst [vmem:[%s181] sm:$0xf] %v182
                %v184 = vld [vmem:[%s180 + $0x18] sm:$0xf]
                %185 = vst [vmem:[%s181 + $0x4] sm:$0xf] %v184
                %v186 = vld [vmem:[%s180 + $0x30] sm:$0xf]
                %187 = vst [vmem:[%s181 + $0x8] sm:$0xf] %v186
                %v188 = vld [vmem:[%s180 + $0x48] sm:$0xf]
                %189 = vst [vmem:[%s181 + $0xc] sm:$0xf] %v188
                %v190 = vld [vmem:[%s180 + $0x60] sm:$0xf]
                %191 = vst [vmem:[%s181 + $0x10] sm:$0xf] %v190
                %v192 = vld [vmem:[%s180 + $0x78] sm:$0xf]
                %193 = vst [vmem:[%s181 + $0x14] sm:$0xf] %v192
                %v194 = vld [vmem:[%s180 + $0x90] sm:$0xf]
                %195 = vst [vmem:[%s181 + $0x18] sm:$0xf] %v194
                %v196 = vld [vmem:[%s180 + $0xa8] sm:$0xf]
                %197 = vst [vmem:[%s181 + $0x1c] sm:$0xf] %v196
                %v198 = vld [vmem:[%s180 + $0xc0] sm:$0xf]
                %199 = vst [vmem:[%s181 + $0x20] sm:$0xf] %v198
                %v200 = vld [vmem:[%s180 + $0xd8] sm:$0xf]
                %201 = vst [vmem:[%s181 + $0x24] sm:$0xf] %v200
                %v202 = vld [vmem:[%s180 + $0xf0] sm:$0xf]
                %203 = vst [vmem:[%s181 + $0x28] sm:$0xf] %v202
                %v204 = vld [vmem:[%s180 + $0x108] sm:$0xf]
                %205 = vst [vmem:[%s181 + $0x2c] sm:$0xf] %v204
                %v206 = vld [vmem:[%s180 + $0x120] sm:$0xf]
                %207 = vst [vmem:[%s181 + $0x30] sm:$0xf] %v206
                %v208 = vld [vmem:[%s180 + $0x138] sm:$0xf]
                %209 = vst [vmem:[%s181 + $0x34] sm:$0xf] %v208
                %v210 = vld [vmem:[%s180 + $0x150] sm:$0xf]
                %211 = vst [vmem:[%s181 + $0x38] sm:$0xf] %v210
                %v212 = vld [vmem:[%s180 + $0x168] sm:$0xf]
                %213 = vst [vmem:[%s181 + $0x3c] sm:$0xf] %v212
              $region37: #{attention_forward.4} parent=31 // loop_footer
                %s179 = sadd.s32 1, %s175
              $region38: #{attention_forward.4} parent=31 // loop_footer_branch
                %174 = sbr.rel target = $region34
              $region39: #{attention_forward.4} parent=31 // loop_exit
                _
            $region32: #{attention_forward.4} parent=23 // pred_fallthru
              _
          $region24: #{attention_forward.4} parent=19 // pred_fallthru
            _
          %265 = vnop
        $region20: #{attention_forward.4} parent=15 // pred_fallthru
          _
        // Predicated region
        $region58: #{attention_forward.4} parent=15 // pred_check
          %p266 = pneg %p73
        $region59: #{attention_forward.4} parent=15 // pred_check_branch
          %268 = sbr.rel (%p266) target = $region61
        $region60: #{attention_forward.4} parent=15 // pred_region
          %s269 = sand.u32 %s63, 1
          %s270 = sand.u32 %s63, 1
          %s271 = smul.addr %s270, 64
          %s272 = scalar_lea.vmem [#allocation3], %s271
          %s273 = sadd.s32 %s17, 2
          %s274 = smul.addr %s16, 96
          %s275 = sadd.s32 %s273, %s274
          %s276 = smul.addr %s275, 4
          %s277 = scalar_lea.vmem %s1, %s276
          // Predicated region
          $region62: #{attention_forward.4} parent=60 // pred_check
            _
          $region63: #{attention_forward.4} parent=60 // pred_check_branch
            %279 = sbr.rel (0) target = $region65
          $region64: #{attention_forward.4} parent=60 // pred_region
            // Predicated region
            $region66: #{attention_forward.4} parent=64 // pred_check
              _
            $region67: #{attention_forward.4} parent=64 // pred_check_branch
              %281 = sbr.rel target = $region69
            $region68: #{attention_forward.4} parent=64 // pred_region
              // Predicated region
              $region81: #{attention_forward.4} parent=68 // pred_check
                _
              $region82: #{attention_forward.4} parent=68 // pred_check_branch
                %326 = sbr.rel (0) target = $region84
              $region83: #{attention_forward.4} parent=68 // pred_region
                loop: start=0, step=1, limit=1
                $region85: #{attention_forward.4} parent=83 // loop_pre_header
                  _
                $region86: #{attention_forward.4} parent=83 // loop_header
                  %s328 = sphi 0, %s332
                  %p329 = scmp.ge.s32.totalorder %s328, 1
                  %s333 = sphi %s277, %s277
                  %s334 = sphi %s272, %s272
                $region87: #{attention_forward.4} parent=83 // loop_header_branch
                  %331 = sbr.rel (%p329) target = $region91
                $region88: #{attention_forward.4} parent=83 // loop_body
                  _
                $region89: #{attention_forward.4} parent=83 // loop_footer
                  %s332 = sadd.s32 1, %s328
                $region90: #{attention_forward.4} parent=83 // loop_footer_branch
                  %327 = sbr.rel target = $region86
                $region91: #{attention_forward.4} parent=83 // loop_exit
                  _
                loop: start=0, step=1, limit=1
                $region92: #{attention_forward.4} parent=83 // loop_pre_header
                  _
                $region93: #{attention_forward.4} parent=83 // loop_header
                  %s337 = sphi 0, %s341
                  %p338 = scmp.ge.s32.totalorder %s337, 1
                  %s342 = sphi %s277, %s277
                  %s343 = sphi %s272, %s272
                $region94: #{attention_forward.4} parent=83 // loop_header_branch
                  %340 = sbr.rel (%p338) target = $region98
                $region95: #{attention_forward.4} parent=83 // loop_body
                  %v344 = vld [vmem:[%s342] sm:$0xf]
                  %345 = vst [vmem:[%s343] sm:$0xf] %v344
                  %v346 = vld [vmem:[%s342 + $0x18] sm:$0xf]
                  %347 = vst [vmem:[%s343 + $0x4] sm:$0xf] %v346
                  %v348 = vld [vmem:[%s342 + $0x30] sm:$0xf]
                  %349 = vst [vmem:[%s343 + $0x8] sm:$0xf] %v348
                  %v350 = vld [vmem:[%s342 + $0x48] sm:$0xf]
                  %351 = vst [vmem:[%s343 + $0xc] sm:$0xf] %v350
                  %v352 = vld [vmem:[%s342 + $0x60] sm:$0xf]
                  %353 = vst [vmem:[%s343 + $0x10] sm:$0xf] %v352
                  %v354 = vld [vmem:[%s342 + $0x78] sm:$0xf]
                  %355 = vst [vmem:[%s343 + $0x14] sm:$0xf] %v354
                  %v356 = vld [vmem:[%s342 + $0x90] sm:$0xf]
                  %357 = vst [vmem:[%s343 + $0x18] sm:$0xf] %v356
                  %v358 = vld [vmem:[%s342 + $0xa8] sm:$0xf]
                  %359 = vst [vmem:[%s343 + $0x1c] sm:$0xf] %v358
                  %v360 = vld [vmem:[%s342 + $0xc0] sm:$0xf]
                  %361 = vst [vmem:[%s343 + $0x20] sm:$0xf] %v360
                  %v362 = vld [vmem:[%s342 + $0xd8] sm:$0xf]
                  %363 = vst [vmem:[%s343 + $0x24] sm:$0xf] %v362
                  %v364 = vld [vmem:[%s342 + $0xf0] sm:$0xf]
                  %365 = vst [vmem:[%s343 + $0x28] sm:$0xf] %v364
                  %v366 = vld [vmem:[%s342 + $0x108] sm:$0xf]
                  %367 = vst [vmem:[%s343 + $0x2c] sm:$0xf] %v366
                  %v368 = vld [vmem:[%s342 + $0x120] sm:$0xf]
                  %369 = vst [vmem:[%s343 + $0x30] sm:$0xf] %v368
                  %v370 = vld [vmem:[%s342 + $0x138] sm:$0xf]
                  %371 = vst [vmem:[%s343 + $0x34] sm:$0xf] %v370
                  %v372 = vld [vmem:[%s342 + $0x150] sm:$0xf]
                  %373 = vst [vmem:[%s343 + $0x38] sm:$0xf] %v372
                  %v374 = vld [vmem:[%s342 + $0x168] sm:$0xf]
                  %375 = vst [vmem:[%s343 + $0x3c] sm:$0xf] %v374
                $region96: #{attention_forward.4} parent=83 // loop_footer
                  %s341 = sadd.s32 1, %s337
                $region97: #{attention_forward.4} parent=83 // loop_footer_branch
                  %336 = sbr.rel target = $region93
                $region98: #{attention_forward.4} parent=83 // loop_exit
                  _
              $region84: #{attention_forward.4} parent=68 // pred_fallthru
                _
            $region69: #{attention_forward.4} parent=64 // pred_fallthru
              _
            // Predicated region
            $region70: #{attention_forward.4} parent=64 // pred_check
              _
            $region71: #{attention_forward.4} parent=64 // pred_check_branch
              %283 = sbr.rel (0) target = $region73
            $region72: #{attention_forward.4} parent=64 // pred_region
              loop: start=0, step=1, limit=1
              $region74: #{attention_forward.4} parent=72 // loop_pre_header
                _
              $region75: #{attention_forward.4} parent=72 // loop_header
                %s286 = sphi 0, %s290
                %p287 = scmp.ge.s32.totalorder %s286, 1
                %s291 = sphi %s277, %s277
                %s292 = sphi %s272, %s272
              $region76: #{attention_forward.4} parent=72 // loop_header_branch
                %289 = sbr.rel (%p287) target = $region80
              $region77: #{attention_forward.4} parent=72 // loop_body
                %v293 = vld [vmem:[%s291] sm:$0xf]
                %294 = vst [vmem:[%s292] sm:$0xf] %v293
                %v295 = vld [vmem:[%s291 + $0x18] sm:$0xf]
                %296 = vst [vmem:[%s292 + $0x4] sm:$0xf] %v295
                %v297 = vld [vmem:[%s291 + $0x30] sm:$0xf]
                %298 = vst [vmem:[%s292 + $0x8] sm:$0xf] %v297
                %v299 = vld [vmem:[%s291 + $0x48] sm:$0xf]
                %300 = vst [vmem:[%s292 + $0xc] sm:$0xf] %v299
                %v301 = vld [vmem:[%s291 + $0x60] sm:$0xf]
                %302 = vst [vmem:[%s292 + $0x10] sm:$0xf] %v301
                %v303 = vld [vmem:[%s291 + $0x78] sm:$0xf]
                %304 = vst [vmem:[%s292 + $0x14] sm:$0xf] %v303
                %v305 = vld [vmem:[%s291 + $0x90] sm:$0xf]
                %306 = vst [vmem:[%s292 + $0x18] sm:$0xf] %v305
                %v307 = vld [vmem:[%s291 + $0xa8] sm:$0xf]
                %308 = vst [vmem:[%s292 + $0x1c] sm:$0xf] %v307
                %v309 = vld [vmem:[%s291 + $0xc0] sm:$0xf]
                %310 = vst [vmem:[%s292 + $0x20] sm:$0xf] %v309
                %v311 = vld [vmem:[%s291 + $0xd8] sm:$0xf]
                %312 = vst [vmem:[%s292 + $0x24] sm:$0xf] %v311
                %v313 = vld [vmem:[%s291 + $0xf0] sm:$0xf]
                %314 = vst [vmem:[%s292 + $0x28] sm:$0xf] %v313
                %v315 = vld [vmem:[%s291 + $0x108] sm:$0xf]
                %316 = vst [vmem:[%s292 + $0x2c] sm:$0xf] %v315
                %v317 = vld [vmem:[%s291 + $0x120] sm:$0xf]
                %318 = vst [vmem:[%s292 + $0x30] sm:$0xf] %v317
                %v319 = vld [vmem:[%s291 + $0x138] sm:$0xf]
                %320 = vst [vmem:[%s292 + $0x34] sm:$0xf] %v319
                %v321 = vld [vmem:[%s291 + $0x150] sm:$0xf]
                %322 = vst [vmem:[%s292 + $0x38] sm:$0xf] %v321
                %v323 = vld [vmem:[%s291 + $0x168] sm:$0xf]
                %324 = vst [vmem:[%s292 + $0x3c] sm:$0xf] %v323
              $region78: #{attention_forward.4} parent=72 // loop_footer
                %s290 = sadd.s32 1, %s286
              $region79: #{attention_forward.4} parent=72 // loop_footer_branch
                %285 = sbr.rel target = $region75
              $region80: #{attention_forward.4} parent=72 // loop_exit
                _
            $region73: #{attention_forward.4} parent=64 // pred_fallthru
              _
          $region65: #{attention_forward.4} parent=60 // pred_fallthru
            _
          %376 = vnop
        $region61: #{attention_forward.4} parent=15 // pred_fallthru
          _
        // Predicated region
        $region99: #{attention_forward.4} parent=15 // pred_check
          %p377 = pneg %p103
        $region100: #{attention_forward.4} parent=15 // pred_check_branch
          %379 = sbr.rel (%p377) target = $region102
        $region101: #{attention_forward.4} parent=15 // pred_region
          %s380 = sand.u32 %s93, 1
          %s381 = sand.u32 %s93, 1
          %s382 = smul.addr %s381, 64
          %s383 = scalar_lea.vmem [#allocation4], %s382
          %s384 = sadd.s32 %s17, 4
          %s385 = smul.addr %s16, 96
          %s386 = sadd.s32 %s384, %s385
          %s387 = smul.addr %s386, 4
          %s388 = scalar_lea.vmem %s2, %s387
          // Predicated region
          $region103: #{attention_forward.4} parent=101 // pred_check
            _
          $region104: #{attention_forward.4} parent=101 // pred_check_branch
            %390 = sbr.rel (0) target = $region106
          $region105: #{attention_forward.4} parent=101 // pred_region
            // Predicated region
            $region107: #{attention_forward.4} parent=105 // pred_check
              _
            $region108: #{attention_forward.4} parent=105 // pred_check_branch
              %392 = sbr.rel target = $region110
            $region109: #{attention_forward.4} parent=105 // pred_region
              // Predicated region
              $region122: #{attention_forward.4} parent=109 // pred_check
                _
              $region123: #{attention_forward.4} parent=109 // pred_check_branch
                %437 = sbr.rel (0) target = $region125
              $region124: #{attention_forward.4} parent=109 // pred_region
                loop: start=0, step=1, limit=1
                $region126: #{attention_forward.4} parent=124 // loop_pre_header
                  _
                $region127: #{attention_forward.4} parent=124 // loop_header
                  %s439 = sphi 0, %s443
                  %p440 = scmp.ge.s32.totalorder %s439, 1
                  %s444 = sphi %s388, %s388
                  %s445 = sphi %s383, %s383
                $region128: #{attention_forward.4} parent=124 // loop_header_branch
                  %442 = sbr.rel (%p440) target = $region132
                $region129: #{attention_forward.4} parent=124 // loop_body
                  _
                $region130: #{attention_forward.4} parent=124 // loop_footer
                  %s443 = sadd.s32 1, %s439
                $region131: #{attention_forward.4} parent=124 // loop_footer_branch
                  %438 = sbr.rel target = $region127
                $region132: #{attention_forward.4} parent=124 // loop_exit
                  _
                loop: start=0, step=1, limit=1
                $region133: #{attention_forward.4} parent=124 // loop_pre_header
                  _
                $region134: #{attention_forward.4} parent=124 // loop_header
                  %s448 = sphi 0, %s452
                  %p449 = scmp.ge.s32.totalorder %s448, 1
                  %s453 = sphi %s388, %s388
                  %s454 = sphi %s383, %s383
                $region135: #{attention_forward.4} parent=124 // loop_header_branch
                  %451 = sbr.rel (%p449) target = $region139
                $region136: #{attention_forward.4} parent=124 // loop_body
                  %v455 = vld [vmem:[%s453] sm:$0xf]
                  %456 = vst [vmem:[%s454] sm:$0xf] %v455
                  %v457 = vld [vmem:[%s453 + $0x18] sm:$0xf]
                  %458 = vst [vmem:[%s454 + $0x4] sm:$0xf] %v457
                  %v459 = vld [vmem:[%s453 + $0x30] sm:$0xf]
                  %460 = vst [vmem:[%s454 + $0x8] sm:$0xf] %v459
                  %v461 = vld [vmem:[%s453 + $0x48] sm:$0xf]
                  %462 = vst [vmem:[%s454 + $0xc] sm:$0xf] %v461
                  %v463 = vld [vmem:[%s453 + $0x60] sm:$0xf]
                  %464 = vst [vmem:[%s454 + $0x10] sm:$0xf] %v463
                  %v465 = vld [vmem:[%s453 + $0x78] sm:$0xf]
                  %466 = vst [vmem:[%s454 + $0x14] sm:$0xf] %v465
                  %v467 = vld [vmem:[%s453 + $0x90] sm:$0xf]
                  %468 = vst [vmem:[%s454 + $0x18] sm:$0xf] %v467
                  %v469 = vld [vmem:[%s453 + $0xa8] sm:$0xf]
                  %470 = vst [vmem:[%s454 + $0x1c] sm:$0xf] %v469
                  %v471 = vld [vmem:[%s453 + $0xc0] sm:$0xf]
                  %472 = vst [vmem:[%s454 + $0x20] sm:$0xf] %v471
                  %v473 = vld [vmem:[%s453 + $0xd8] sm:$0xf]
                  %474 = vst [vmem:[%s454 + $0x24] sm:$0xf] %v473
                  %v475 = vld [vmem:[%s453 + $0xf0] sm:$0xf]
                  %476 = vst [vmem:[%s454 + $0x28] sm:$0xf] %v475
                  %v477 = vld [vmem:[%s453 + $0x108] sm:$0xf]
                  %478 = vst [vmem:[%s454 + $0x2c] sm:$0xf] %v477
                  %v479 = vld [vmem:[%s453 + $0x120] sm:$0xf]
                  %480 = vst [vmem:[%s454 + $0x30] sm:$0xf] %v479
                  %v481 = vld [vmem:[%s453 + $0x138] sm:$0xf]
                  %482 = vst [vmem:[%s454 + $0x34] sm:$0xf] %v481
                  %v483 = vld [vmem:[%s453 + $0x150] sm:$0xf]
                  %484 = vst [vmem:[%s454 + $0x38] sm:$0xf] %v483
                  %v485 = vld [vmem:[%s453 + $0x168] sm:$0xf]
                  %486 = vst [vmem:[%s454 + $0x3c] sm:$0xf] %v485
                $region137: #{attention_forward.4} parent=124 // loop_footer
                  %s452 = sadd.s32 1, %s448
                $region138: #{attention_forward.4} parent=124 // loop_footer_branch
                  %447 = sbr.rel target = $region134
                $region139: #{attention_forward.4} parent=124 // loop_exit
                  _
              $region125: #{attention_forward.4} parent=109 // pred_fallthru
                _
            $region110: #{attention_forward.4} parent=105 // pred_fallthru
              _
            // Predicated region
            $region111: #{attention_forward.4} parent=105 // pred_check
              _
            $region112: #{attention_forward.4} parent=105 // pred_check_branch
              %394 = sbr.rel (0) target = $region114
            $region113: #{attention_forward.4} parent=105 // pred_region
              loop: start=0, step=1, limit=1
              $region115: #{attention_forward.4} parent=113 // loop_pre_header
                _
              $region116: #{attention_forward.4} parent=113 // loop_header
                %s397 = sphi 0, %s401
                %p398 = scmp.ge.s32.totalorder %s397, 1
                %s402 = sphi %s388, %s388
                %s403 = sphi %s383, %s383
              $region117: #{attention_forward.4} parent=113 // loop_header_branch
                %400 = sbr.rel (%p398) target = $region121
              $region118: #{attention_forward.4} parent=113 // loop_body
                %v404 = vld [vmem:[%s402] sm:$0xf]
                %405 = vst [vmem:[%s403] sm:$0xf] %v404
                %v406 = vld [vmem:[%s402 + $0x18] sm:$0xf]
                %407 = vst [vmem:[%s403 + $0x4] sm:$0xf] %v406
                %v408 = vld [vmem:[%s402 + $0x30] sm:$0xf]
                %409 = vst [vmem:[%s403 + $0x8] sm:$0xf] %v408
                %v410 = vld [vmem:[%s402 + $0x48] sm:$0xf]
                %411 = vst [vmem:[%s403 + $0xc] sm:$0xf] %v410
                %v412 = vld [vmem:[%s402 + $0x60] sm:$0xf]
                %413 = vst [vmem:[%s403 + $0x10] sm:$0xf] %v412
                %v414 = vld [vmem:[%s402 + $0x78] sm:$0xf]
                %415 = vst [vmem:[%s403 + $0x14] sm:$0xf] %v414
                %v416 = vld [vmem:[%s402 + $0x90] sm:$0xf]
                %417 = vst [vmem:[%s403 + $0x18] sm:$0xf] %v416
                %v418 = vld [vmem:[%s402 + $0xa8] sm:$0xf]
                %419 = vst [vmem:[%s403 + $0x1c] sm:$0xf] %v418
                %v420 = vld [vmem:[%s402 + $0xc0] sm:$0xf]
                %421 = vst [vmem:[%s403 + $0x20] sm:$0xf] %v420
                %v422 = vld [vmem:[%s402 + $0xd8] sm:$0xf]
                %423 = vst [vmem:[%s403 + $0x24] sm:$0xf] %v422
                %v424 = vld [vmem:[%s402 + $0xf0] sm:$0xf]
                %425 = vst [vmem:[%s403 + $0x28] sm:$0xf] %v424
                %v426 = vld [vmem:[%s402 + $0x108] sm:$0xf]
                %427 = vst [vmem:[%s403 + $0x2c] sm:$0xf] %v426
                %v428 = vld [vmem:[%s402 + $0x120] sm:$0xf]
                %429 = vst [vmem:[%s403 + $0x30] sm:$0xf] %v428
                %v430 = vld [vmem:[%s402 + $0x138] sm:$0xf]
                %431 = vst [vmem:[%s403 + $0x34] sm:$0xf] %v430
                %v432 = vld [vmem:[%s402 + $0x150] sm:$0xf]
                %433 = vst [vmem:[%s403 + $0x38] sm:$0xf] %v432
                %v434 = vld [vmem:[%s402 + $0x168] sm:$0xf]
                %435 = vst [vmem:[%s403 + $0x3c] sm:$0xf] %v434
              $region119: #{attention_forward.4} parent=113 // loop_footer
                %s401 = sadd.s32 1, %s397
              $region120: #{attention_forward.4} parent=113 // loop_footer_branch
                %396 = sbr.rel target = $region116
              $region121: #{attention_forward.4} parent=113 // loop_exit
                _
            $region114: #{attention_forward.4} parent=105 // pred_fallthru
              _
          $region106: #{attention_forward.4} parent=101 // pred_fallthru
            _
          %487 = vnop
        $region102: #{attention_forward.4} parent=15 // pred_fallthru
          _
      $region16: #{attention_forward.4} parent=5 // pred_fallthru
        _
      %p488 = scmp.le.s32.totalorder 1, %s9
      %p489 = scmp.lt.s32.totalorder %s9, 5
      %p490 = pnand %p488, %p489
      %p491 = pneg %p490
      // Predicated region
      $region140: #{attention_forward.4} parent=5 // pred_check
        _
      $region141: #{attention_forward.4} parent=5 // pred_check_branch
        %493 = sbr.rel (%p490) target = $region143
      $region142: #{attention_forward.4} parent=5 // pred_region
        %s494 = ssub.s32 %s9, 1
        %s495 = sand.u32 %s36, 1
        %s496 = sand.u32 %s36, 1
        %s497 = smul.addr %s496, 64
        %s498 = scalar_lea.vmem [#allocation2], %s497
        // Predicated region
        $region144: #{attention_forward.4} parent=142 // pred_check
          %p499 = pneg %p49
        $region145: #{attention_forward.4} parent=142 // pred_check_branch
          %501 = sbr.rel (%p499) target = $region147
        $region146: #{attention_forward.4} parent=142 // pred_region
          _
        $region147: #{attention_forward.4} parent=142 // pred_fallthru
          _
        %s502 = sand.u32 %s66, 1
        %s503 = sand.u32 %s66, 1
        %s504 = smul.addr %s503, 64
        %s505 = scalar_lea.vmem [#allocation3], %s504
        // Predicated region
        $region148: #{attention_forward.4} parent=142 // pred_check
          %p506 = pneg %p79
        $region149: #{attention_forward.4} parent=142 // pred_check_branch
          %508 = sbr.rel (%p506) target = $region151
        $region150: #{attention_forward.4} parent=142 // pred_region
          _
        $region151: #{attention_forward.4} parent=142 // pred_fallthru
          _
        %s509 = sand.u32 %s96, 1
        %s510 = sand.u32 %s96, 1
        %s511 = smul.addr %s510, 64
        %s512 = scalar_lea.vmem [#allocation4], %s511
        // Predicated region
        $region152: #{attention_forward.4} parent=142 // pred_check
          %p513 = pneg %p109
        $region153: #{attention_forward.4} parent=142 // pred_check_branch
          %515 = sbr.rel (%p513) target = $region155
        $region154: #{attention_forward.4} parent=142 // pred_region
          _
        $region155: #{attention_forward.4} parent=142 // pred_fallthru
          _
        %s516 = sand.u32 %s36, 1
        %s517 = sand.u32 %s36, 1
        %s518 = smul.addr %s517, 64
        %s519 = scalar_lea.vmem [#allocation2], %s518
        %p520 = pneg %p49
        %p521 = pneg %p46
        %s522 = sand.u32 %s66, 1
        %s523 = sand.u32 %s66, 1
        %s524 = smul.addr %s523, 64
        %s525 = scalar_lea.vmem [#allocation3], %s524
        %p526 = pneg %p79
        %p527 = pneg %p76
        %s528 = sand.u32 %s96, 1
        %s529 = sand.u32 %s96, 1
        %s530 = smul.addr %s529, 64
        %s531 = scalar_lea.vmem [#allocation4], %s530
        %p532 = pneg %p109
        %p533 = pneg %p106
        %p534 = pneg %p137
        %p535 = pneg %p134
        %s536 = sand.u32 %s124, 1
        %s537 = sand.u32 %s124, 1
        %s538 = smul.addr %s537, 64
        %s539 = scalar_lea.vmem [#allocation5], %s538
        %s540 = sadd.s32 %s19, 2
        %s541 = sadd.s32 %s19, 4
        %v543 = vld [vmem:[%s498] sm:$0xf]
        %v544 = vld [vmem:[%s498 + $0x4] sm:$0xf]
        %v545 = vld [vmem:[%s498 + $0x8] sm:$0xf]
        %v546 = vld [vmem:[%s498 + $0xc] sm:$0xf]
        %v547 = vld [vmem:[%s498 + $0x10] sm:$0xf]
        %v548 = vld [vmem:[%s498 + $0x14] sm:$0xf]
        %v549 = vld [vmem:[%s498 + $0x18] sm:$0xf]
        %v550 = vld [vmem:[%s498 + $0x1c] sm:$0xf]
        %v551 = vld [vmem:[%s498 + $0x20] sm:$0xf]
        %v552 = vld [vmem:[%s498 + $0x24] sm:$0xf]
        %v553 = vld [vmem:[%s498 + $0x28] sm:$0xf]
        %v554 = vld [vmem:[%s498 + $0x2c] sm:$0xf]
        %v555 = vld [vmem:[%s498 + $0x30] sm:$0xf]
        %v556 = vld [vmem:[%s498 + $0x34] sm:$0xf]
        %v557 = vld [vmem:[%s498 + $0x38] sm:$0xf]
        %v558 = vld [vmem:[%s498 + $0x3c] sm:$0xf]
        %v559 = vld [vmem:[%s505] sm:$0xf]
        %v560 = vld [vmem:[%s505 + $0x4] sm:$0xf]
        %v561 = vld [vmem:[%s505 + $0x8] sm:$0xf]
        %v562 = vld [vmem:[%s505 + $0xc] sm:$0xf]
        %v563 = vld [vmem:[%s505 + $0x10] sm:$0xf]
        %v564 = vld [vmem:[%s505 + $0x14] sm:$0xf]
        %v565 = vld [vmem:[%s505 + $0x18] sm:$0xf]
        %v566 = vld [vmem:[%s505 + $0x1c] sm:$0xf]
        %v567 = vld [vmem:[%s505 + $0x20] sm:$0xf]
        %v568 = vld [vmem:[%s505 + $0x24] sm:$0xf]
        %v569 = vld [vmem:[%s505 + $0x28] sm:$0xf]
        %v570 = vld [vmem:[%s505 + $0x2c] sm:$0xf]
        %v571 = vld [vmem:[%s505 + $0x30] sm:$0xf]
        %v572 = vld [vmem:[%s505 + $0x34] sm:$0xf]
        %v573 = vld [vmem:[%s505 + $0x38] sm:$0xf]
        %v574 = vld [vmem:[%s505 + $0x3c] sm:$0xf]
        %v575 = vld [vmem:[%s512] sm:$0xf]
        %v576 = vld [vmem:[%s512 + $0x4] sm:$0xf]
        %v577 = vld [vmem:[%s512 + $0x8] sm:$0xf]
        %v578 = vld [vmem:[%s512 + $0xc] sm:$0xf]
        %v579 = vld [vmem:[%s512 + $0x10] sm:$0xf]
        %v580 = vld [vmem:[%s512 + $0x14] sm:$0xf]
        %v581 = vld [vmem:[%s512 + $0x18] sm:$0xf]
        %v582 = vld [vmem:[%s512 + $0x1c] sm:$0xf]
        %v583 = vld [vmem:[%s512 + $0x20] sm:$0xf]
        %v584 = vld [vmem:[%s512 + $0x24] sm:$0xf]
        %v585 = vld [vmem:[%s512 + $0x28] sm:$0xf]
        %v586 = vld [vmem:[%s512 + $0x2c] sm:$0xf]
        %v587 = vld [vmem:[%s512 + $0x30] sm:$0xf]
        %v588 = vld [vmem:[%s512 + $0x34] sm:$0xf]
        %v589 = vld [vmem:[%s512 + $0x38] sm:$0xf]
        %v590 = vld [vmem:[%s512 + $0x3c] sm:$0xf]
        %v607 = vunpack.c.l.b16 %v543
        %v608 = vunpack.c.l.b16 %v544
        %v609 = vunpack.c.l.b16 %v545
        %v610 = vunpack.c.l.b16 %v546
        %v611 = vunpack.c.l.b16 %v547
        %v612 = vunpack.c.l.b16 %v548
        %v613 = vunpack.c.l.b16 %v549
        %v614 = vunpack.c.l.b16 %v550
        %v615 = vunpack.c.l.b16 %v551
        %v616 = vunpack.c.l.b16 %v552
        %v617 = vunpack.c.l.b16 %v553
        %v618 = vunpack.c.l.b16 %v554
        %v619 = vunpack.c.l.b16 %v555
        %v620 = vunpack.c.l.b16 %v556
        %v621 = vunpack.c.l.b16 %v557
        %v622 = vunpack.c.l.b16 %v558
        %v623 = vpack.c.b16 %v608, %v607
        %v624 = vpack.c.b16 %v610, %v609
        %v625 = vpack.c.b16 %v612, %v611
        %v626 = vpack.c.b16 %v614, %v613
        %v627 = vpack.c.b16 %v616, %v615
        %v628 = vpack.c.b16 %v618, %v617
        %v629 = vpack.c.b16 %v620, %v619
        %v630 = vpack.c.b16 %v622, %v621
        %v655 = vunpack.c.l.b16 %v559
        %v656 = vunpack.c.l.b16 %v560
        %v657 = vunpack.c.l.b16 %v561
        %v658 = vunpack.c.l.b16 %v562
        %v659 = vunpack.c.l.b16 %v563
        %v660 = vunpack.c.l.b16 %v564
        %v661 = vunpack.c.l.b16 %v565
        %v662 = vunpack.c.l.b16 %v566
        %v663 = vunpack.c.l.b16 %v567
        %v664 = vunpack.c.l.b16 %v568
        %v665 = vunpack.c.l.b16 %v569
        %v666 = vunpack.c.l.b16 %v570
        %v667 = vunpack.c.l.b16 %v571
        %v668 = vunpack.c.l.b16 %v572
        %v669 = vunpack.c.l.b16 %v573
        %v670 = vunpack.c.l.b16 %v574
        %v671 = vpack.c.b16 %v656, %v655
        %v672 = vpack.c.b16 %v658, %v657
        %v673 = vpack.c.b16 %v660, %v659
        %v674 = vpack.c.b16 %v662, %v661
        %v675 = vpack.c.b16 %v664, %v663
        %v676 = vpack.c.b16 %v666, %v665
        %v677 = vpack.c.b16 %v668, %v667
        %v678 = vpack.c.b16 %v670, %v669
        %687 = vmatprep.subr.bf16.mxu0 0
        %688 = vmatpush1.bf16.xpose.msra.mxu0 %v671
        %689 = vmatprep.subr.bf16.mxu0 0
        %690 = vmatpush1.bf16.xpose.msra.mxu0 %v672
        %691 = vmatprep.subr.bf16.mxu0 0
        %692 = vmatpush1.bf16.xpose.msra.mxu0 %v673
        %693 = vmatprep.subr.bf16.mxu0 0
        %694 = vmatpush1.bf16.xpose.msra.mxu0 %v674
        %695 = vmatprep.subr.bf16.mxu0 0
        %696 = vmatpush1.bf16.xpose.msra.mxu0 %v675
        %697 = vmatprep.subr.bf16.mxu0 0
        %698 = vmatpush1.bf16.xpose.msra.mxu0 %v676
        %699 = vmatprep.subr.bf16.mxu0 0
        %700 = vmatpush1.bf16.xpose.msra.mxu0 %v677
        %701 = vmatprep.subr.bf16.mxu0 0
        %702 = vmatpush1.bf16.xpose.msra.mxu0 %v678
        %703 = vmatprep.subr.bf16.mxu0 0
        %704 = vmatpush1.bf16.xpose.msra.mxu0 0
        %705 = vmatprep.subr.bf16.mxu0 0
        %706 = vmatpush1.bf16.xpose.msra.mxu0 0
        %707 = vmatprep.subr.bf16.mxu0 0
        %708 = vmatpush1.bf16.xpose.msra.mxu0 0
        %709 = vmatprep.subr.bf16.mxu0 0
        %710 = vmatpush1.bf16.xpose.msra.mxu0 0
        %711 = vmatprep.subr.bf16.mxu0 0
        %712 = vmatpush1.bf16.xpose.msra.mxu0 0
        %713 = vmatprep.subr.bf16.mxu0 0
        %714 = vmatpush1.bf16.xpose.msra.mxu0 0
        %715 = vmatprep.subr.bf16.mxu0 0
        %716 = vmatpush1.bf16.xpose.msra.mxu0 0
        %717 = vmatprep.subr.bf16.mxu0 0
        %718 = vmatpush1.bf16.xpose.msra.mxu0 0
        %719 = vmatprep.mubr.bf16.mxu0 0
        %720 = vmatmul.mubr.bf16.gmra.mrb[0].mxu0 %v623
        %v721 = vpop.f32.mrb[0].mxu0
        %v722 = vadd.f32 0.0, %v721
        %v723 = vpop.f32.mrb[0].mxu0
        %v724 = vpop.f32.mrb[0].mxu0
        %v725 = vadd.f32 0.0, %v724
        %v726 = vpop.f32.mrb[0].mxu0
        %727 = vmatprep.mubr.bf16.mxu0 0
        %728 = vmatmul.mubr.bf16.gmra.mrb[0].mxu0 %v624
        %v729 = vpop.f32.mrb[0].mxu0
        %v730 = vadd.f32 0.0, %v729
        %v731 = vpop.f32.mrb[0].mxu0
        %v732 = vpop.f32.mrb[0].mxu0
        %v733 = vadd.f32 0.0, %v732
        %v734 = vpop.f32.mrb[0].mxu0
        %735 = vmatprep.mubr.bf16.mxu0 0
        %736 = vmatmul.mubr.bf16.gmra.mrb[0].mxu0 %v625
        %v737 = vpop.f32.mrb[0].mxu0
        %v738 = vadd.f32 0.0, %v737
        %v739 = vpop.f32.mrb[0].mxu0
        %v740 = vpop.f32.mrb[0].mxu0
        %v741 = vadd.f32 0.0, %v740
        %v742 = vpop.f32.mrb[0].mxu0
        %743 = vmatprep.mubr.bf16.mxu0 0
        %744 = vmatmul.mubr.bf16.gmra.mrb[0].mxu0 %v626
        %v745 = vpop.f32.mrb[0].mxu0
        %v746 = vadd.f32 0.0, %v745
        %v747 = vpop.f32.mrb[0].mxu0
        %v748 = vpop.f32.mrb[0].mxu0
        %v749 = vadd.f32 0.0, %v748
        %v750 = vpop.f32.mrb[0].mxu0
        %751 = vmatprep.mubr.bf16.mxu0 0
        %752 = vmatmul.mubr.bf16.gmra.mrb[0].mxu0 %v627
        %v753 = vpop.f32.mrb[0].mxu0
        %v754 = vadd.f32 0.0, %v753
        %v755 = vpop.f32.mrb[0].mxu0
        %v756 = vpop.f32.mrb[0].mxu0
        %v757 = vadd.f32 0.0, %v756
        %v758 = vpop.f32.mrb[0].mxu0
        %759 = vmatprep.mubr.bf16.mxu0 0
        %760 = vmatmul.mubr.bf16.gmra.mrb[0].mxu0 %v628
        %v761 = vpop.f32.mrb[0].mxu0
        %v762 = vadd.f32 0.0, %v761
        %v763 = vpop.f32.mrb[0].mxu0
        %v764 = vpop.f32.mrb[0].mxu0
        %v765 = vadd.f32 0.0, %v764
        %v766 = vpop.f32.mrb[0].mxu0
        %767 = vmatprep.mubr.bf16.mxu0 0
        %768 = vmatmul.mubr.bf16.gmra.mrb[0].mxu0 %v629
        %v769 = vpop.f32.mrb[0].mxu0
        %v770 = vadd.f32 0.0, %v769
        %v771 = vpop.f32.mrb[0].mxu0
        %v772 = vpop.f32.mrb[0].mxu0
        %v773 = vadd.f32 0.0, %v772
        %v774 = vpop.f32.mrb[0].mxu0
        %775 = vmatprep.mubr.bf16.mxu0 0
        %776 = vmatmul.mubr.bf16.gmra.mrb[0].mxu0 %v630
        %v777 = vpop.f32.mrb[0].mxu0
        %v778 = vadd.f32 0.0, %v777
        %v779 = vpop.f32.mrb[0].mxu0
        %v780 = vpop.f32.mrb[0].mxu0
        %v781 = vadd.f32 0.0, %v780
        %v782 = vpop.f32.mrb[0].mxu0
        %783 = vdwg.mxu0
        %784 = vmax.xlane.f32.xlu0 %v722
        %v785 = vpop.xlane.xlu0 %784
        %786 = vmax.xlane.f32.xlu0 %v725
        %v787 = vpop.xlane.xlu0 %786
        %788 = vmax.xlane.f32.xlu0 %v730
        %v789 = vpop.xlane.xlu0 %788
        %790 = vmax.xlane.f32.xlu0 %v733
        %v791 = vpop.xlane.xlu0 %790
        %792 = vmax.xlane.f32.xlu0 %v738
        %v793 = vpop.xlane.xlu0 %792
        %794 = vmax.xlane.f32.xlu0 %v741
        %v795 = vpop.xlane.xlu0 %794
        %796 = vmax.xlane.f32.xlu0 %v746
        %v797 = vpop.xlane.xlu0 %796
        %798 = vmax.xlane.f32.xlu0 %v749
        %v799 = vpop.xlane.xlu0 %798
        %800 = vmax.xlane.f32.xlu0 %v754
        %v801 = vpop.xlane.xlu0 %800
        %802 = vmax.xlane.f32.xlu0 %v757
        %v803 = vpop.xlane.xlu0 %802
        %804 = vmax.xlane.f32.xlu0 %v762
        %v805 = vpop.xlane.xlu0 %804
        %806 = vmax.xlane.f32.xlu0 %v765
        %v807 = vpop.xlane.xlu0 %806
        %808 = vmax.xlane.f32.xlu0 %v770
        %v809 = vpop.xlane.xlu0 %808
        %810 = vmax.xlane.f32.xlu0 %v773
        %v811 = vpop.xlane.xlu0 %810
        %812 = vmax.xlane.f32.xlu0 %v778
        %v813 = vpop.xlane.xlu0 %812
        %814 = vmax.xlane.f32.xlu0 %v781
        %v815 = vpop.xlane.xlu0 %814
        %v816 = vsub.f32 %v722, %v785
        %v817 = vsub.f32 %v725, %v787
        %v818 = vsub.f32 %v730, %v789
        %v819 = vsub.f32 %v733, %v791
        %v820 = vsub.f32 %v738, %v793
        %v821 = vsub.f32 %v741, %v795
        %v822 = vsub.f32 %v746, %v797
        %v823 = vsub.f32 %v749, %v799
        %v824 = vsub.f32 %v754, %v801
        %v825 = vsub.f32 %v757, %v803
        %v826 = vsub.f32 %v762, %v805
        %v827 = vsub.f32 %v765, %v807
        %v828 = vsub.f32 %v770, %v809
        %v829 = vsub.f32 %v773, %v811
        %v830 = vsub.f32 %v778, %v813
        %v831 = vsub.f32 %v781, %v815
        %v832 = vmul.f32 %v816, 1.442695
        %v833 = vpow.pop %v832
        %v834 = vmul.f32 %v817, 1.442695
        %v835 = vpow.pop %v834
        %v836 = vmul.f32 %v818, 1.442695
        %v837 = vpow.pop %v836
        %v838 = vmul.f32 %v819, 1.442695
        %v839 = vpow.pop %v838
        %v840 = vmul.f32 %v820, 1.442695
        %v841 = vpow.pop %v840
        %v842 = vmul.f32 %v821, 1.442695
        %v843 = vpow.pop %v842
        %v844 = vmul.f32 %v822, 1.442695
        %v845 = vpow.pop %v844
        %v846 = vmul.f32 %v823, 1.442695
        %v847 = vpow.pop %v846
        %v848 = vmul.f32 %v824, 1.442695
        %v849 = vpow.pop %v848
        %v850 = vmul.f32 %v825, 1.442695
        %v851 = vpow.pop %v850
        %v852 = vmul.f32 %v826, 1.442695
        %v853 = vpow.pop %v852
        %v854 = vmul.f32 %v827, 1.442695
        %v855 = vpow.pop %v854
        %v856 = vmul.f32 %v828, 1.442695
        %v857 = vpow.pop %v856
        %v858 = vmul.f32 %v829, 1.442695
        %v859 = vpow.pop %v858
        %v860 = vmul.f32 %v830, 1.442695
        %v861 = vpow.pop %v860
        %v862 = vmul.f32 %v831, 1.442695
        %v863 = vpow.pop %v862
        %864 = vadd.xlane.f32.xlu0 %v833
        %v865 = vpop.xlane.xlu0 %864
        %866 = vadd.xlane.f32.xlu0 %v835
        %v867 = vpop.xlane.xlu0 %866
        %868 = vadd.xlane.f32.xlu0 %v837
        %v869 = vpop.xlane.xlu0 %868
        %870 = vadd.xlane.f32.xlu0 %v839
        %v871 = vpop.xlane.xlu0 %870
        %872 = vadd.xlane.f32.xlu0 %v841
        %v873 = vpop.xlane.xlu0 %872
        %874 = vadd.xlane.f32.xlu0 %v843
        %v875 = vpop.xlane.xlu0 %874
        %876 = vadd.xlane.f32.xlu0 %v845
        %v877 = vpop.xlane.xlu0 %876
        %878 = vadd.xlane.f32.xlu0 %v847
        %v879 = vpop.xlane.xlu0 %878
        %880 = vadd.xlane.f32.xlu0 %v849
        %v881 = vpop.xlane.xlu0 %880
        %882 = vadd.xlane.f32.xlu0 %v851
        %v883 = vpop.xlane.xlu0 %882
        %884 = vadd.xlane.f32.xlu0 %v853
        %v885 = vpop.xlane.xlu0 %884
        %886 = vadd.xlane.f32.xlu0 %v855
        %v887 = vpop.xlane.xlu0 %886
        %888 = vadd.xlane.f32.xlu0 %v857
        %v889 = vpop.xlane.xlu0 %888
        %890 = vadd.xlane.f32.xlu0 %v859
        %v891 = vpop.xlane.xlu0 %890
        %892 = vadd.xlane.f32.xlu0 %v861
        %v893 = vpop.xlane.xlu0 %892
        %894 = vadd.xlane.f32.xlu0 %v863
        %v895 = vpop.xlane.xlu0 %894
        %v896 = vpack.c.bf16 %v835, %v833
        %v897 = vpack.c.bf16 %v839, %v837
        %v898 = vpack.c.bf16 %v843, %v841
        %v899 = vpack.c.bf16 %v847, %v845
        %v900 = vpack.c.bf16 %v851, %v849
        %v901 = vpack.c.bf16 %v855, %v853
        %v902 = vpack.c.bf16 %v859, %v857
        %v903 = vpack.c.bf16 %v863, %v861
        %v920 = vunpack.c.l.b16 %v575
        %v921 = vunpack.c.l.b16 %v576
        %v922 = vunpack.c.l.b16 %v577
        %v923 = vunpack.c.l.b16 %v578
        %v924 = vunpack.c.l.b16 %v579
        %v925 = vunpack.c.l.b16 %v580
        %v926 = vunpack.c.l.b16 %v581
        %v927 = vunpack.c.l.b16 %v582
        %v928 = vunpack.c.l.b16 %v583
        %v929 = vunpack.c.l.b16 %v584
        %v930 = vunpack.c.l.b16 %v585
        %v931 = vunpack.c.l.b16 %v586
        %v932 = vunpack.c.l.b16 %v587
        %v933 = vunpack.c.l.b16 %v588
        %v934 = vunpack.c.l.b16 %v589
        %v935 = vunpack.c.l.b16 %v590
        %v936 = vpack.c.b16 %v921, %v920
        %v937 = vpack.c.b16 %v923, %v922
        %v938 = vpack.c.b16 %v925, %v924
        %v939 = vpack.c.b16 %v927, %v926
        %v940 = vpack.c.b16 %v929, %v928
        %v941 = vpack.c.b16 %v931, %v930
        %v942 = vpack.c.b16 %v933, %v932
        %v943 = vpack.c.b16 %v935, %v934
        %952 = vmatprep.subr.bf16.mxu0 0
        %953 = vmatpush1.bf16.msra.mxu0 %v936
        %954 = vmatprep.subr.bf16.mxu0 0
        %955 = vmatpush1.bf16.msra.mxu0 %v937
        %956 = vmatprep.subr.bf16.mxu0 0
        %957 = vmatpush1.bf16.msra.mxu0 %v938
        %958 = vmatprep.subr.bf16.mxu0 0
        %959 = vmatpush1.bf16.msra.mxu0 %v939
        %960 = vmatprep.subr.bf16.mxu0 0
        %961 = vmatpush1.bf16.msra.mxu0 %v940
        %962 = vmatprep.subr.bf16.mxu0 0
        %963 = vmatpush1.bf16.msra.mxu0 %v941
        %964 = vmatprep.subr.bf16.mxu0 0
        %965 = vmatpush1.bf16.msra.mxu0 %v942
        %966 = vmatprep.subr.bf16.mxu0 0
        %967 = vmatpush1.bf16.msra.mxu0 %v943
        %968 = vmatprep.subr.bf16.mxu0 0
        %969 = vmatpush1.bf16.msra.mxu0 0
        %970 = vmatprep.subr.bf16.mxu0 0
        %971 = vmatpush1.bf16.msra.mxu0 0
        %972 = vmatprep.subr.bf16.mxu0 0
        %973 = vmatpush1.bf16.msra.mxu0 0
        %974 = vmatprep.subr.bf16.mxu0 0
        %975 = vmatpush1.bf16.msra.mxu0 0
        %976 = vmatprep.subr.bf16.mxu0 0
        %977 = vmatpush1.bf16.msra.mxu0 0
        %978 = vmatprep.subr.bf16.mxu0 0
        %979 = vmatpush1.bf16.msra.mxu0 0
        %980 = vmatprep.subr.bf16.mxu0 0
        %981 = vmatpush1.bf16.msra.mxu0 0
        %982 = vmatprep.subr.bf16.mxu0 0
        %983 = vmatpush1.bf16.msra.mxu0 0
        %984 = vmatprep.mubr.bf16.mxu0 0
        %985 = vmatmul.mubr.bf16.gmra.mrb[0].mxu0 %v896
        %v986 = vpop.f32.mrb[0].mxu0
        %v987 = vadd.f32 0.0, %v986
        %v988 = vpop.f32.mrb[0].mxu0
        %v989 = vpop.f32.mrb[0].mxu0
        %v990 = vadd.f32 0.0, %v989
        %v991 = vpop.f32.mrb[0].mxu0
        %992 = vmatprep.mubr.bf16.mxu0 0
        %993 = vmatmul.mubr.bf16.gmra.mrb[0].mxu0 %v897
        %v994 = vpop.f32.mrb[0].mxu0
        %v995 = vadd.f32 0.0, %v994
        %v996 = vpop.f32.mrb[0].mxu0
        %v997 = vpop.f32.mrb[0].mxu0
        %v998 = vadd.f32 0.0, %v997
        %v999 = vpop.f32.mrb[0].mxu0
        %1000 = vmatprep.mubr.bf16.mxu0 0
        %1001 = vmatmul.mubr.bf16.gmra.mrb[0].mxu0 %v898
        %v1002 = vpop.f32.mrb[0].mxu0
        %v1003 = vadd.f32 0.0, %v1002
        %v1004 = vpop.f32.mrb[0].mxu0
        %v1005 = vpop.f32.mrb[0].mxu0
        %v1006 = vadd.f32 0.0, %v1005
        %v1007 = vpop.f32.mrb[0].mxu0
        %1008 = vmatprep.mubr.bf16.mxu0 0
        %1009 = vmatmul.mubr.bf16.gmra.mrb[0].mxu0 %v899
        %v1010 = vpop.f32.mrb[0].mxu0
        %v1011 = vadd.f32 0.0, %v1010
        %v1012 = vpop.f32.mrb[0].mxu0
        %v1013 = vpop.f32.mrb[0].mxu0
        %v1014 = vadd.f32 0.0, %v1013
        %v1015 = vpop.f32.mrb[0].mxu0
        %1016 = vmatprep.mubr.bf16.mxu0 0
        %1017 = vmatmul.mubr.bf16.gmra.mrb[0].mxu0 %v900
        %v1018 = vpop.f32.mrb[0].mxu0
        %v1019 = vadd.f32 0.0, %v1018
        %v1020 = vpop.f32.mrb[0].mxu0
        %v1021 = vpop.f32.mrb[0].mxu0
        %v1022 = vadd.f32 0.0, %v1021
        %v1023 = vpop.f32.mrb[0].mxu0
        %1024 = vmatprep.mubr.bf16.mxu0 0
        %1025 = vmatmul.mubr.bf16.gmra.mrb[0].mxu0 %v901
        %v1026 = vpop.f32.mrb[0].mxu0
        %v1027 = vadd.f32 0.0, %v1026
        %v1028 = vpop.f32.mrb[0].mxu0
        %v1029 = vpop.f32.mrb[0].mxu0
        %v1030 = vadd.f32 0.0, %v1029
        %v1031 = vpop.f32.mrb[0].mxu0
        %1032 = vmatprep.mubr.bf16.mxu0 0
        %1033 = vmatmul.mubr.bf16.gmra.mrb[0].mxu0 %v902
        %v1034 = vpop.f32.mrb[0].mxu0
        %v1035 = vadd.f32 0.0, %v1034
        %v1036 = vpop.f32.mrb[0].mxu0
        %v1037 = vpop.f32.mrb[0].mxu0
        %v1038 = vadd.f32 0.0, %v1037
        %v1039 = vpop.f32.mrb[0].mxu0
        %1040 = vmatprep.mubr.bf16.mxu0 0
        %1041 = vmatmul.mubr.bf16.gmra.mrb[0].mxu0 %v903
        %v1042 = vpop.f32.mrb[0].mxu0
        %v1043 = vadd.f32 0.0, %v1042
        %v1044 = vpop.f32.mrb[0].mxu0
        %v1045 = vpop.f32.mrb[0].mxu0
        %v1046 = vadd.f32 0.0, %v1045
        %v1047 = vpop.f32.mrb[0].mxu0
        %1048 = vdwg.mxu0
        %v1049 = vrcp.pop %v865
        %v1050 = vrcp.pop %v867
        %v1051 = vrcp.pop %v869
        %v1052 = vrcp.pop %v871
        %v1053 = vrcp.pop %v873
        %v1054 = vrcp.pop %v875
        %v1055 = vrcp.pop %v877
        %v1056 = vrcp.pop %v879
        %v1057 = vrcp.pop %v881
        %v1058 = vrcp.pop %v883
        %v1059 = vrcp.pop %v885
        %v1060 = vrcp.pop %v887
        %v1061 = vrcp.pop %v889
        %v1062 = vrcp.pop %v891
        %v1063 = vrcp.pop %v893
        %v1064 = vrcp.pop %v895
        %v1065 = vmul.f32 %v987, %v1049
        %v1066 = vmul.f32 %v990, %v1050
        %v1067 = vmul.f32 %v995, %v1051
        %v1068 = vmul.f32 %v998, %v1052
        %v1069 = vmul.f32 %v1003, %v1053
        %v1070 = vmul.f32 %v1006, %v1054
        %v1071 = vmul.f32 %v1011, %v1055
        %v1072 = vmul.f32 %v1014, %v1056
        %v1073 = vmul.f32 %v1019, %v1057
        %v1074 = vmul.f32 %v1022, %v1058
        %v1075 = vmul.f32 %v1027, %v1059
        %v1076 = vmul.f32 %v1030, %v1060
        %v1077 = vmul.f32 %v1035, %v1061
        %v1078 = vmul.f32 %v1038, %v1062
        %v1079 = vmul.f32 %v1043, %v1063
        %v1080 = vmul.f32 %v1046, %v1064
        %v1081 = vpack.c.bf16 %v1066, %v1065
        %v1082 = vpack.c.bf16 %v1068, %v1067
        %v1083 = vpack.c.bf16 %v1070, %v1069
        %v1084 = vpack.c.bf16 %v1072, %v1071
        %v1085 = vpack.c.bf16 %v1074, %v1073
        %v1086 = vpack.c.bf16 %v1076, %v1075
        %v1087 = vpack.c.bf16 %v1078, %v1077
        %v1088 = vpack.c.bf16 %v1080, %v1079
        %v1097 = vunpack.c.l.b16 %v1081
        %v1098 = vunpack.c.h.b16 %v1081
        %v1099 = vunpack.c.l.b16 %v1082
        %v1100 = vunpack.c.h.b16 %v1082
        %v1101 = vunpack.c.l.b16 %v1083
        %v1102 = vunpack.c.h.b16 %v1083
        %v1103 = vunpack.c.l.b16 %v1084
        %v1104 = vunpack.c.h.b16 %v1084
        %v1105 = vunpack.c.l.b16 %v1085
        %v1106 = vunpack.c.h.b16 %v1085
        %v1107 = vunpack.c.l.b16 %v1086
        %v1108 = vunpack.c.h.b16 %v1086
        %v1109 = vunpack.c.l.b16 %v1087
        %v1110 = vunpack.c.h.b16 %v1087
        %v1111 = vunpack.c.l.b16 %v1088
        %v1112 = vunpack.c.h.b16 %v1088
        %v1113 = vpack.c.b16 %v1097, %v1097
        %v1114 = vpack.c.b16 %v1098, %v1098
        %v1115 = vpack.c.b16 %v1099, %v1099
        %v1116 = vpack.c.b16 %v1100, %v1100
        %v1117 = vpack.c.b16 %v1101, %v1101
        %v1118 = vpack.c.b16 %v1102, %v1102
        %v1119 = vpack.c.b16 %v1103, %v1103
        %v1120 = vpack.c.b16 %v1104, %v1104
        %v1121 = vpack.c.b16 %v1105, %v1105
        %v1122 = vpack.c.b16 %v1106, %v1106
        %v1123 = vpack.c.b16 %v1107, %v1107
        %v1124 = vpack.c.b16 %v1108, %v1108
        %v1125 = vpack.c.b16 %v1109, %v1109
        %v1126 = vpack.c.b16 %v1110, %v1110
        %v1127 = vpack.c.b16 %v1111, %v1111
        %v1128 = vpack.c.b16 %v1112, %v1112
        %1145 = vst [vmem:[%s539] sm:$0xf] %v1113
        %1146 = vst [vmem:[%s539 + $0x4] sm:$0xf] %v1114
        %1147 = vst [vmem:[%s539 + $0x8] sm:$0xf] %v1115
        %1148 = vst [vmem:[%s539 + $0xc] sm:$0xf] %v1116
        %1149 = vst [vmem:[%s539 + $0x10] sm:$0xf] %v1117
        %1150 = vst [vmem:[%s539 + $0x14] sm:$0xf] %v1118
        %1151 = vst [vmem:[%s539 + $0x18] sm:$0xf] %v1119
        %1152 = vst [vmem:[%s539 + $0x1c] sm:$0xf] %v1120
        %1153 = vst [vmem:[%s539 + $0x20] sm:$0xf] %v1121
        %1154 = vst [vmem:[%s539 + $0x24] sm:$0xf] %v1122
        %1155 = vst [vmem:[%s539 + $0x28] sm:$0xf] %v1123
        %1156 = vst [vmem:[%s539 + $0x2c] sm:$0xf] %v1124
        %1157 = vst [vmem:[%s539 + $0x30] sm:$0xf] %v1125
        %1158 = vst [vmem:[%s539 + $0x34] sm:$0xf] %v1126
        %1159 = vst [vmem:[%s539 + $0x38] sm:$0xf] %v1127
        %1160 = vst [vmem:[%s539 + $0x3c] sm:$0xf] %v1128
        %s1161 = sand.u32 %s124, 1
        %s1162 = sand.u32 %s124, 1
        %s1163 = smul.addr %s1162, 64
        %s1164 = scalar_lea.vmem [#allocation5], %s1163
        // Predicated region
        $region156: #{attention_forward.4} parent=142 // pred_check
          %p1165 = pneg %p134
        $region157: #{attention_forward.4} parent=142 // pred_check_branch
          %1167 = sbr.rel (%p1165) target = $region159
        $region158: #{attention_forward.4} parent=142 // pred_region
          %s1168 = smul.addr %s18, 32
          %s1169 = sadd.s32 %s19, %s1168
          %s1170 = smul.addr %s1169, 4
          %s1171 = scalar_lea.vmem %s3, %s1170
          // Predicated region
          $region160: #{attention_forward.4} parent=158 // pred_check
            _
          $region161: #{attention_forward.4} parent=158 // pred_check_branch
            %1173 = sbr.rel (0) target = $region163
          $region162: #{attention_forward.4} parent=158 // pred_region
            // Predicated region
            $region164: #{attention_forward.4} parent=162 // pred_check
              _
            $region165: #{attention_forward.4} parent=162 // pred_check_branch
              %1175 = sbr.rel target = $region167
            $region166: #{attention_forward.4} parent=162 // pred_region
              // Predicated region
              $region179: #{attention_forward.4} parent=166 // pred_check
                _
              $region180: #{attention_forward.4} parent=166 // pred_check_branch
                %1220 = sbr.rel (0) target = $region182
              $region181: #{attention_forward.4} parent=166 // pred_region
                loop: start=0, step=1, limit=1
                $region183: #{attention_forward.4} parent=181 // loop_pre_header
                  _
                $region184: #{attention_forward.4} parent=181 // loop_header
                  %s1222 = sphi 0, %s1226
                  %p1223 = scmp.ge.s32.totalorder %s1222, 1
                  %s1227 = sphi %s1164, %s1164
                  %s1228 = sphi %s1171, %s1171
                $region185: #{attention_forward.4} parent=181 // loop_header_branch
                  %1225 = sbr.rel (%p1223) target = $region189
                $region186: #{attention_forward.4} parent=181 // loop_body
                  _
                $region187: #{attention_forward.4} parent=181 // loop_footer
                  %s1226 = sadd.s32 1, %s1222
                $region188: #{attention_forward.4} parent=181 // loop_footer_branch
                  %1221 = sbr.rel target = $region184
                $region189: #{attention_forward.4} parent=181 // loop_exit
                  _
                loop: start=0, step=1, limit=1
                $region190: #{attention_forward.4} parent=181 // loop_pre_header
                  _
                $region191: #{attention_forward.4} parent=181 // loop_header
                  %s1231 = sphi 0, %s1235
                  %p1232 = scmp.ge.s32.totalorder %s1231, 1
                  %s1236 = sphi %s1164, %s1164
                  %s1237 = sphi %s1171, %s1171
                $region192: #{attention_forward.4} parent=181 // loop_header_branch
                  %1234 = sbr.rel (%p1232) target = $region196
                $region193: #{attention_forward.4} parent=181 // loop_body
                  %v1238 = vld [vmem:[%s1236] sm:$0xf]
                  %1239 = vst [vmem:[%s1237] sm:$0xf] %v1238
                  %v1240 = vld [vmem:[%s1236 + $0x4] sm:$0xf]
                  %1241 = vst [vmem:[%s1237 + $0x8] sm:$0xf] %v1240
                  %v1242 = vld [vmem:[%s1236 + $0x8] sm:$0xf]
                  %1243 = vst [vmem:[%s1237 + $0x10] sm:$0xf] %v1242
                  %v1244 = vld [vmem:[%s1236 + $0xc] sm:$0xf]
                  %1245 = vst [vmem:[%s1237 + $0x18] sm:$0xf] %v1244
                  %v1246 = vld [vmem:[%s1236 + $0x10] sm:$0xf]
                  %1247 = vst [vmem:[%s1237 + $0x20] sm:$0xf] %v1246
                  %v1248 = vld [vmem:[%s1236 + $0x14] sm:$0xf]
                  %1249 = vst [vmem:[%s1237 + $0x28] sm:$0xf] %v1248
                  %v1250 = vld [vmem:[%s1236 + $0x18] sm:$0xf]
                  %1251 = vst [vmem:[%s1237 + $0x30] sm:$0xf] %v1250
                  %v1252 = vld [vmem:[%s1236 + $0x1c] sm:$0xf]
                  %1253 = vst [vmem:[%s1237 + $0x38] sm:$0xf] %v1252
                  %v1254 = vld [vmem:[%s1236 + $0x20] sm:$0xf]
                  %1255 = vst [vmem:[%s1237 + $0x40] sm:$0xf] %v1254
                  %v1256 = vld [vmem:[%s1236 + $0x24] sm:$0xf]
                  %1257 = vst [vmem:[%s1237 + $0x48] sm:$0xf] %v1256
                  %v1258 = vld [vmem:[%s1236 + $0x28] sm:$0xf]
                  %1259 = vst [vmem:[%s1237 + $0x50] sm:$0xf] %v1258
                  %v1260 = vld [vmem:[%s1236 + $0x2c] sm:$0xf]
                  %1261 = vst [vmem:[%s1237 + $0x58] sm:$0xf] %v1260
                  %v1262 = vld [vmem:[%s1236 + $0x30] sm:$0xf]
                  %1263 = vst [vmem:[%s1237 + $0x60] sm:$0xf] %v1262
                  %v1264 = vld [vmem:[%s1236 + $0x34] sm:$0xf]
                  %1265 = vst [vmem:[%s1237 + $0x68] sm:$0xf] %v1264
                  %v1266 = vld [vmem:[%s1236 + $0x38] sm:$0xf]
                  %1267 = vst [vmem:[%s1237 + $0x70] sm:$0xf] %v1266
                  %v1268 = vld [vmem:[%s1236 + $0x3c] sm:$0xf]
                  %1269 = vst [vmem:[%s1237 + $0x78] sm:$0xf] %v1268
                $region194: #{attention_forward.4} parent=181 // loop_footer
                  %s1235 = sadd.s32 1, %s1231
                $region195: #{attention_forward.4} parent=181 // loop_footer_branch
                  %1230 = sbr.rel target = $region191
                $region196: #{attention_forward.4} parent=181 // loop_exit
                  _
              $region182: #{attention_forward.4} parent=166 // pred_fallthru
                _
            $region167: #{attention_forward.4} parent=162 // pred_fallthru
              _
            // Predicated region
            $region168: #{attention_forward.4} parent=162 // pred_check
              _
            $region169: #{attention_forward.4} parent=162 // pred_check_branch
              %1177 = sbr.rel (0) target = $region171
            $region170: #{attention_forward.4} parent=162 // pred_region
              loop: start=0, step=1, limit=1
              $region172: #{attention_forward.4} parent=170 // loop_pre_header
                _
              $region173: #{attention_forward.4} parent=170 // loop_header
                %s1180 = sphi 0, %s1184
                %p1181 = scmp.ge.s32.totalorder %s1180, 1
                %s1185 = sphi %s1164, %s1164
                %s1186 = sphi %s1171, %s1171
              $region174: #{attention_forward.4} parent=170 // loop_header_branch
                %1183 = sbr.rel (%p1181) target = $region178
              $region175: #{attention_forward.4} parent=170 // loop_body
                %v1187 = vld [vmem:[%s1185] sm:$0xf]
                %1188 = vst [vmem:[%s1186] sm:$0xf] %v1187
                %v1189 = vld [vmem:[%s1185 + $0x4] sm:$0xf]
                %1190 = vst [vmem:[%s1186 + $0x8] sm:$0xf] %v1189
                %v1191 = vld [vmem:[%s1185 + $0x8] sm:$0xf]
                %1192 = vst [vmem:[%s1186 + $0x10] sm:$0xf] %v1191
                %v1193 = vld [vmem:[%s1185 + $0xc] sm:$0xf]
                %1194 = vst [vmem:[%s1186 + $0x18] sm:$0xf] %v1193
                %v1195 = vld [vmem:[%s1185 + $0x10] sm:$0xf]
                %1196 = vst [vmem:[%s1186 + $0x20] sm:$0xf] %v1195
                %v1197 = vld [vmem:[%s1185 + $0x14] sm:$0xf]
                %1198 = vst [vmem:[%s1186 + $0x28] sm:$0xf] %v1197
                %v1199 = vld [vmem:[%s1185 + $0x18] sm:$0xf]
                %1200 = vst [vmem:[%s1186 + $0x30] sm:$0xf] %v1199
                %v1201 = vld [vmem:[%s1185 + $0x1c] sm:$0xf]
                %1202 = vst [vmem:[%s1186 + $0x38] sm:$0xf] %v1201
                %v1203 = vld [vmem:[%s1185 + $0x20] sm:$0xf]
                %1204 = vst [vmem:[%s1186 + $0x40] sm:$0xf] %v1203
                %v1205 = vld [vmem:[%s1185 + $0x24] sm:$0xf]
                %1206 = vst [vmem:[%s1186 + $0x48] sm:$0xf] %v1205
                %v1207 = vld [vmem:[%s1185 + $0x28] sm:$0xf]
                %1208 = vst [vmem:[%s1186 + $0x50] sm:$0xf] %v1207
                %v1209 = vld [vmem:[%s1185 + $0x2c] sm:$0xf]
                %1210 = vst [vmem:[%s1186 + $0x58] sm:$0xf] %v1209
                %v1211 = vld [vmem:[%s1185 + $0x30] sm:$0xf]
                %1212 = vst [vmem:[%s1186 + $0x60] sm:$0xf] %v1211
                %v1213 = vld [vmem:[%s1185 + $0x34] sm:$0xf]
                %1214 = vst [vmem:[%s1186 + $0x68] sm:$0xf] %v1213
                %v1215 = vld [vmem:[%s1185 + $0x38] sm:$0xf]
                %1216 = vst [vmem:[%s1186 + $0x70] sm:$0xf] %v1215
                %v1217 = vld [vmem:[%s1185 + $0x3c] sm:$0xf]
                %1218 = vst [vmem:[%s1186 + $0x78] sm:$0xf] %v1217
              $region176: #{attention_forward.4} parent=170 // loop_footer
                %s1184 = sadd.s32 1, %s1180
              $region177: #{attention_forward.4} parent=170 // loop_footer_branch
                %1179 = sbr.rel target = $region173
              $region178: #{attention_forward.4} parent=170 // loop_exit
                _
            $region171: #{attention_forward.4} parent=162 // pred_fallthru
              _
          $region163: #{attention_forward.4} parent=158 // pred_fallthru
            _
          %1270 = vnop
        $region159: #{attention_forward.4} parent=142 // pred_fallthru
          _
      $region143: #{attention_forward.4} parent=5 // pred_fallthru
        _
      %p1271 = scmp.le.s32.totalorder 2, %s9
      // Predicated region
      $region197: #{attention_forward.4} parent=5 // pred_check
        %p1272 = pneg %p1271
      $region198: #{attention_forward.4} parent=5 // pred_check_branch
        %1274 = sbr.rel (%p1272) target = $region200
      $region199: #{attention_forward.4} parent=5 // pred_region
        %s1275 = ssub.s32 %s9, 2
        // Predicated region
        $region201: #{attention_forward.4} parent=199 // pred_check
          %p1276 = pneg %p140
        $region202: #{attention_forward.4} parent=199 // pred_check_branch
          %1278 = sbr.rel (%p1276) target = $region204
        $region203: #{attention_forward.4} parent=199 // pred_region
          %s1279 = sand.u32 %s125, 1
          %s1280 = sand.u32 %s125, 1
          %s1281 = smul.addr %s1280, 64
          %s1282 = scalar_lea.vmem [#allocation5], %s1281
        $region204: #{attention_forward.4} parent=199 // pred_fallthru
          _
      $region200: #{attention_forward.4} parent=5 // pred_fallthru
        _
    $region6: #{attention_forward.4} parent=1 // loop_footer
      %s13 = sadd.s32 1, %s9
    $region7: #{attention_forward.4} parent=1 // loop_footer_branch
      %8 = sbr.rel target = $region3
    $region8: #{attention_forward.4} parent=1 // loop_exit
      _

// kernel: attention_forward.3
$region0: #{attention_forward.3}
  #allocation0 [shape = 'u32[]', space=smem, size = 0x4, offset = 0x4, fixed_abs, tag = 'smem constant byte address 0x4 - core index']
  #allocation1 [shape = 'u32[144,128]{1,0:T(1,128)}', space=vmem, size = 0x12000, scoped, tag = 'internal scratch']
  #allocation2 [shape = 'f32[256,256]{1,0:T(8,128)}', space=vmem, size = 0x40000, scoped, tag = 'scratch operand']
  %s0 = inlined_call_operand.hbm [shape: f32[256,256], index: 0, kind: input, shape index: {}]
  %s1 = inlined_call_operand.hbm [shape: bf16[256,768], index: 1, kind: input, shape index: {}]
  %s2 = inlined_call_operand.vmem [shape: bf16[256,768], index: 2, kind: output, shape index: {}]
  %s3 = sld [smem:[#allocation0]]
  $region91: #{attention_forward.3} parent=0
    _
  %s5 = ssub.s32 1, %s3
  %s6 = scalar_select 0, %s5, %s3
  $region1: #{attention_forward.3} parent=0
    #allocation3 [shape = 'u8[262144]{0}', space=vmem, size = 0x40000, scoped, tag = 'input window, operand 0, single buffered']
    #allocation4 [shape = 's32[2]{0}', space=sflag, size = 0x8, scoped, tag = 'scoped memory for attention_forward.3']
    #allocation5 [shape = 'u8[262144]{0}', space=vmem, size = 0x40000, scoped, tag = 'input window, operand 1']
    #allocation6 [shape = 's32[2]{0}', space=sflag, size = 0x8, scoped, tag = 'scoped memory for attention_forward.3']
    #allocation7 [shape = 'u8[262144]{0}', space=vmem, size = 0x40000, scoped, tag = 'output window, operand 0']
    %7 = vsyncpa [#allocation4], 0
    %8 = vsyncpa [#allocation6], 0
    %s9 = scalar_lea.sflag [#allocation6], 1
    %10 = vsyncpa %s9, 0
    loop: start=0, step=1, limit=5
    $region2: #{attention_forward.3} parent=1 // loop_pre_header
      _
    $region3: #{attention_forward.3} parent=1 // loop_header
      %s12 = sphi 0, %s16
      %p13 = scmp.ge.s32.totalorder %s12, 5
      %s19 = sphi 0, %s38
      %s20 = sphi 0, %s34
      %s21 = sphi 0, %s30
      %s22 = sphi 0, %s19
      %s23 = sphi 0, %s20
      %s24 = sphi 0, %s21
      %s25 = sphi 0, %s22
      %s26 = sphi 0, %s23
      %s27 = sphi 0, %s24
      %s43 = sphi 0, %s45
      %s46 = sphi 0, %s43
      %s47 = sphi 0, %s46
      %s63 = sphi 0, %s47
      %s71 = sphi 0, %s73
      %s74 = sphi 0, %s71
      %s75 = sphi 0, %s74
      %s91 = sphi 0, %s75
      %s99 = sphi 0, %s101
      %s102 = sphi 0, %s99
      %s103 = sphi 0, %s102
      %s119 = sphi 0, %s103
    $region4: #{attention_forward.3} parent=1 // loop_header_branch
      %15 = sbr.rel (%p13) target = $region8
    $region5: #{attention_forward.3} parent=1 // loop_body
      %s17 = ssub.s32 %s12, 1
      %s18 = ssub.s32 %s12, 2
      %s28 = sadd.s32 1, %s21
      %p29 = scmp.ge.s32.totalorder %s28, 1
      %s30 = scalar_select %p29, 0, %s28
      %s31 = sadd.s32 1, %s20
      %s32 = scalar_select %p29, %s31, %s20
      %p33 = scmp.ge.s32.totalorder %s32, 3
      %s34 = scalar_select %p33, 0, %s32
      %s35 = sadd.s32 1, %s19
      %s36 = scalar_select %p33, %s35, %s19
      %p37 = scmp.ge.s32.totalorder %s36, 1
      %s38 = scalar_select %p37, 0, %s36
      %s39 = ssub.s32 %s19, %s38
      %s40 = ssub.s32 %s21, %s30
      %s41 = sor.u32 %s39, %s40
      %p42 = scmp.eq.s32.totalorder %s41, 0
      %s44 = sadd.s32 %s43, 1
      %s45 = scalar_select %p42, %s43, %s44
      %p48 = pneg %p42
      %p49 = scmp.eq.s32.totalorder %s12, 2
      %p50 = por %p48, %p49
      %p51 = scmp.ne.s32.totalorder %s43, %s46
      %p52 = scmp.eq.s32.totalorder %s12, 0
      %p53 = por %p51, %p52
      %p54 = scmp.ne.s32.totalorder %s43, %s46
      %p55 = scmp.eq.s32.totalorder %s17, 2
      %p56 = por %p54, %p55
      %p57 = scmp.ne.s32.totalorder %s46, %s47
      %p58 = scmp.eq.s32.totalorder %s17, 0
      %p59 = por %p57, %p58
      %p60 = scmp.ne.s32.totalorder %s46, %s47
      %p61 = scmp.eq.s32.totalorder %s18, 2
      %p62 = por %p60, %p61
      %p64 = scmp.ne.s32.totalorder %s47, %s63
      %p65 = scmp.eq.s32.totalorder %s18, 0
      %p66 = por %p64, %p65
      %s67 = ssub.s32 %s21, %s30
      %s68 = ssub.s32 %s20, %s34
      %s69 = sor.u32 %s67, %s68
      %p70 = scmp.eq.s32.totalorder %s69, 0
      %s72 = sadd.s32 %s71, 1
      %s73 = scalar_select %p70, %s71, %s72
      %p76 = pneg %p70
      %p77 = scmp.eq.s32.totalorder %s12, 2
      %p78 = por %p76, %p77
      %p79 = scmp.ne.s32.totalorder %s71, %s74
      %p80 = scmp.eq.s32.totalorder %s12, 0
      %p81 = por %p79, %p80
      %p82 = scmp.ne.s32.totalorder %s71, %s74
      %p83 = scmp.eq.s32.totalorder %s17, 2
      %p84 = por %p82, %p83
      %p85 = scmp.ne.s32.totalorder %s74, %s75
      %p86 = scmp.eq.s32.totalorder %s17, 0
      %p87 = por %p85, %p86
      %p88 = scmp.ne.s32.totalorder %s74, %s75
      %p89 = scmp.eq.s32.totalorder %s18, 2
      %p90 = por %p88, %p89
      %p92 = scmp.ne.s32.totalorder %s75, %s91
      %p93 = scmp.eq.s32.totalorder %s18, 0
      %p94 = por %p92, %p93
      %s95 = ssub.s32 %s19, %s38
      %s96 = ssub.s32 %s20, %s34
      %s97 = sor.u32 %s95, %s96
      %p98 = scmp.eq.s32.totalorder %s97, 0
      %s100 = sadd.s32 %s99, 1
      %s101 = scalar_select %p98, %s99, %s100
      %p104 = pneg %p98
      %p105 = scmp.eq.s32.totalorder %s12, 2
      %p106 = por %p104, %p105
      %p107 = scmp.ne.s32.totalorder %s99, %s102
      %p108 = scmp.eq.s32.totalorder %s12, 0
      %p109 = por %p107, %p108
      %p110 = scmp.ne.s32.totalorder %s99, %s102
      %p111 = scmp.eq.s32.totalorder %s17, 2
      %p112 = por %p110, %p111
      %p113 = scmp.ne.s32.totalorder %s102, %s103
      %p114 = scmp.eq.s32.totalorder %s17, 0
      %p115 = por %p113, %p114
      %p116 = scmp.ne.s32.totalorder %s102, %s103
      %p117 = scmp.eq.s32.totalorder %s18, 2
      %p118 = por %p116, %p117
      %p120 = scmp.ne.s32.totalorder %s103, %s119
      %p121 = scmp.eq.s32.totalorder %s18, 0
      %p122 = por %p120, %p121
      %p123 = scmp.le.s32.totalorder 1, %s12
      %p124 = scmp.lt.s32.totalorder %s12, 4
      %p125 = pnand %p123, %p124
      %p126 = pneg %p125
      // Predicated region
      $region9: #{attention_forward.3} parent=5 // pred_check
        _
      $region10: #{attention_forward.3} parent=5 // pred_check_branch
        %128 = sbr.rel (%p125) target = $region12
      $region11: #{attention_forward.3} parent=5 // pred_region
        %s129 = ssub.s32 %s12, 1
        // Predicated region
        $region13: #{attention_forward.3} parent=11 // pred_check
          %p130 = pneg %p59
        $region14: #{attention_forward.3} parent=11 // pred_check_branch
          %132 = sbr.rel (%p130) target = $region16
        $region15: #{attention_forward.3} parent=11 // pred_region
          %s133 = smul.u32 32, %s22
          %s134 = smul.u32 2, %s24
          %s136 = ssub.s32 8192, 8192
          %137 = vsyncadd [#allocation4], %s136
          %s138 = smul.addr %s133, 2
          %s139 = sadd.s32 %s134, %s138
          %s140 = smul.addr %s139, 128
          %s141 = scalar_lea.hbm %s0, %s140
          %s142 = sshll.u32 [#allocation3], 4
          %s143 = int_to_ptr.vmem [resolvable:$true] %s142
          %148 = dma.hbm_to_vmem [thread:$0]  %s141, 8192, %s143, [#allocation4], 256, 256, 16
        $region16: #{attention_forward.3} parent=11 // pred_fallthru
          _
      $region12: #{attention_forward.3} parent=5 // pred_fallthru
        _
      %p149 = scmp.lt.s32.totalorder %s12, 3
      // Predicated region
      $region17: #{attention_forward.3} parent=5 // pred_check
        %p150 = pneg %p149
      $region18: #{attention_forward.3} parent=5 // pred_check_branch
        %152 = sbr.rel (%p150) target = $region20
      $region19: #{attention_forward.3} parent=5 // pred_region
        // Predicated region
        $region21: #{attention_forward.3} parent=19 // pred_check
          %p153 = pneg %p81
        $region22: #{attention_forward.3} parent=19 // pred_check_branch
          %155 = sbr.rel (%p153) target = $region24
        $region23: #{attention_forward.3} parent=19 // pred_region
          %s156 = sand.u32 %s71, 1
          %s157 = scalar_lea.sflag [#allocation6], %s156
          %s158 = sand.u32 %s71, 1
          %s159 = smul.addr %s158, 256
          %s160 = scalar_lea.vmem [#allocation5], %s159
          %s161 = smul.u32 32, %s21
          %s162 = smul.u32 2, %s20
          %s164 = ssub.s32 4096, 4096
          %165 = vsyncadd %s157, %s164
          %s166 = smul.addr %s161, 6
          %s167 = sadd.s32 %s162, %s166
          %s168 = smul.addr %s167, 64
          %s169 = scalar_lea.hbm %s1, %s168
          %s170 = sshll.u32 %s160, 4
          %s171 = int_to_ptr.vmem [resolvable:$true] %s170
          %176 = dma.hbm_to_vmem [thread:$0]  %s169, 4096, %s171, %s157, 384, 128, 8
        $region24: #{attention_forward.3} parent=19 // pred_fallthru
          _
      $region20: #{attention_forward.3} parent=5 // pred_fallthru
        _
      %p177 = scmp.le.s32.totalorder 1, %s12
      %p178 = scmp.lt.s32.totalorder %s12, 4
      %p179 = pnand %p177, %p178
      %p180 = pneg %p179
      // Predicated region
      $region25: #{attention_forward.3} parent=5 // pred_check
        _
      $region26: #{attention_forward.3} parent=5 // pred_check_branch
        %182 = sbr.rel (%p179) target = $region28
      $region27: #{attention_forward.3} parent=5 // pred_region
        %s183 = ssub.s32 %s12, 1
        // Predicated region
        $region29: #{attention_forward.3} parent=27 // pred_check
          %p184 = pneg %p59
        $region30: #{attention_forward.3} parent=27 // pred_check_branch
          %186 = sbr.rel (%p184) target = $region32
        $region31: #{attention_forward.3} parent=27 // pred_region
          %187 = dma.done [#allocation4], 8192
        $region32: #{attention_forward.3} parent=27 // pred_fallthru
          _
        %s188 = sand.u32 %s74, 1
        %s189 = scalar_lea.sflag [#allocation6], %s188
        %s190 = sand.u32 %s74, 1
        %s191 = smul.addr %s190, 256
        %s192 = scalar_lea.vmem [#allocation5], %s191
        // Predicated region
        $region33: #{attention_forward.3} parent=27 // pred_check
          %p193 = pneg %p87
        $region34: #{attention_forward.3} parent=27 // pred_check_branch
          %195 = sbr.rel (%p193) target = $region36
        $region35: #{attention_forward.3} parent=27 // pred_region
          %196 = dma.done %s189, 4096
        $region36: #{attention_forward.3} parent=27 // pred_fallthru
          _
        %p197 = pneg %p59
        %p198 = pneg %p56
        %s199 = sand.u32 %s74, 1
        %s200 = scalar_lea.sflag [#allocation6], %s199
        %s201 = sand.u32 %s74, 1
        %s202 = smul.addr %s201, 256
        %s203 = scalar_lea.vmem [#allocation5], %s202
        %p204 = pneg %p87
        %p205 = pneg %p84
        %p206 = pneg %p115
        %p207 = pneg %p112
        %s208 = sand.u32 %s102, 1
        %s209 = sand.u32 %s102, 1
        %s210 = smul.addr %s209, 256
        %s211 = scalar_lea.vmem [#allocation7], %s210
        %s212 = smul.u32 32, %s22
        %s213 = smul.u32 2, %s24
        %s214 = smul.u32 32, %s24
        %s215 = smul.u32 2, %s23
        %s216 = smul.u32 32, %s22
        %s217 = smul.u32 2, %s23
        %p218 = scmp.eq.s32.totalorder %s24, 0
        // Predicated region
        $region37: #{attention_forward.3} parent=27 // pred_check
          %p219 = pneg %p218
        $region38: #{attention_forward.3} parent=27 // pred_check_branch
          %221 = sbr.rel (%p219) target = $region40
        $region39: #{attention_forward.3} parent=27 // pred_region
          %222 = vst [vmem:[#allocation2] sm:$0xff] 0.0
          %223 = vst [vmem:[#allocation2 + $0x8] sm:$0xff] 0.0
          %224 = vst [vmem:[#allocation2 + $0x10] sm:$0xff] 0.0
          %225 = vst [vmem:[#allocation2 + $0x18] sm:$0xff] 0.0
          %226 = vst [vmem:[#allocation2 + $0x20] sm:$0xff] 0.0
          %227 = vst [vmem:[#allocation2 + $0x28] sm:$0xff] 0.0
          %228 = vst [vmem:[#allocation2 + $0x30] sm:$0xff] 0.0
          %229 = vst [vmem:[#allocation2 + $0x38] sm:$0xff] 0.0
          %230 = vst [vmem:[#allocation2 + $0x40] sm:$0xff] 0.0
          %231 = vst [vmem:[#allocation2 + $0x48] sm:$0xff] 0.0
          %232 = vst [vmem:[#allocation2 + $0x50] sm:$0xff] 0.0
          %233 = vst [vmem:[#allocation2 + $0x58] sm:$0xff] 0.0
          %234 = vst [vmem:[#allocation2 + $0x60] sm:$0xff] 0.0
          %235 = vst [vmem:[#allocation2 + $0x68] sm:$0xff] 0.0
          %236 = vst [vmem:[#allocation2 + $0x70] sm:$0xff] 0.0
          %237 = vst [vmem:[#allocation2 + $0x78] sm:$0xff] 0.0
          %238 = vst [vmem:[#allocation2 + $0x80] sm:$0xff] 0.0
          %239 = vst [vmem:[#allocation2 + $0x88] sm:$0xff] 0.0
          %240 = vst [vmem:[#allocation2 + $0x90] sm:$0xff] 0.0
          %241 = vst [vmem:[#allocation2 + $0x98] sm:$0xff] 0.0
          %242 = vst [vmem:[#allocation2 + $0xa0] sm:$0xff] 0.0
          %243 = vst [vmem:[#allocation2 + $0xa8] sm:$0xff] 0.0
          %244 = vst [vmem:[#allocation2 + $0xb0] sm:$0xff] 0.0
          %245 = vst [vmem:[#allocation2 + $0xb8] sm:$0xff] 0.0
          %246 = vst [vmem:[#allocation2 + $0xc0] sm:$0xff] 0.0
          %247 = vst [vmem:[#allocation2 + $0xc8] sm:$0xff] 0.0
          %248 = vst [vmem:[#allocation2 + $0xd0] sm:$0xff] 0.0
          %249 = vst [vmem:[#allocation2 + $0xd8] sm:$0xff] 0.0
          %250 = vst [vmem:[#allocation2 + $0xe0] sm:$0xff] 0.0
          %251 = vst [vmem:[#allocation2 + $0xe8] sm:$0xff] 0.0
          %252 = vst [vmem:[#allocation2 + $0xf0] sm:$0xff] 0.0
          %253 = vst [vmem:[#allocation2 + $0xf8] sm:$0xff] 0.0
          %254 = vst [vmem:[#allocation2 + $0x100] sm:$0xff] 0.0
          %255 = vst [vmem:[#allocation2 + $0x108] sm:$0xff] 0.0
          %256 = vst [vmem:[#allocation2 + $0x110] sm:$0xff] 0.0
          %257 = vst [vmem:[#allocation2 + $0x118] sm:$0xff] 0.0
          %258 = vst [vmem:[#allocation2 + $0x120] sm:$0xff] 0.0
          %259 = vst [vmem:[#allocation2 + $0x128] sm:$0xff] 0.0
          %260 = vst [vmem:[#allocation2 + $0x130] sm:$0xff] 0.0
          %261 = vst [vmem:[#allocation2 + $0x138] sm:$0xff] 0.0
          %262 = vst [vmem:[#allocation2 + $0x140] sm:$0xff] 0.0
          %263 = vst [vmem:[#allocation2 + $0x148] sm:$0xff] 0.0
          %264 = vst [vmem:[#allocation2 + $0x150] sm:$0xff] 0.0
          %265 = vst [vmem:[#allocation2 + $0x158] sm:$0xff] 0.0
          %266 = vst [vmem:[#allocation2 + $0x160] sm:$0xff] 0.0
          %267 = vst [vmem:[#allocation2 + $0x168] sm:$0xff] 0.0
          %268 = vst [vmem:[#allocation2 + $0x170] sm:$0xff] 0.0
          %269 = vst [vmem:[#allocation2 + $0x178] sm:$0xff] 0.0
          %270 = vst [vmem:[#allocation2 + $0x180] sm:$0xff] 0.0
          %271 = vst [vmem:[#allocation2 + $0x188] sm:$0xff] 0.0
          %272 = vst [vmem:[#allocation2 + $0x190] sm:$0xff] 0.0
          %273 = vst [vmem:[#allocation2 + $0x198] sm:$0xff] 0.0
          %274 = vst [vmem:[#allocation2 + $0x1a0] sm:$0xff] 0.0
          %275 = vst [vmem:[#allocation2 + $0x1a8] sm:$0xff] 0.0
          %276 = vst [vmem:[#allocation2 + $0x1b0] sm:$0xff] 0.0
          %277 = vst [vmem:[#allocation2 + $0x1b8] sm:$0xff] 0.0
          %278 = vst [vmem:[#allocation2 + $0x1c0] sm:$0xff] 0.0
          %279 = vst [vmem:[#allocation2 + $0x1c8] sm:$0xff] 0.0
          %280 = vst [vmem:[#allocation2 + $0x1d0] sm:$0xff] 0.0
          %281 = vst [vmem:[#allocation2 + $0x1d8] sm:$0xff] 0.0
          %282 = vst [vmem:[#allocation2 + $0x1e0] sm:$0xff] 0.0
          %283 = vst [vmem:[#allocation2 + $0x1e8] sm:$0xff] 0.0
          %284 = vst [vmem:[#allocation2 + $0x1f0] sm:$0xff] 0.0
          %285 = vst [vmem:[#allocation2 + $0x1f8] sm:$0xff] 0.0
        $region40: #{attention_forward.3} parent=27 // pred_fallthru
          _
        %v286 = vld [vmem:[#allocation2] sm:$0xff]
        %v287 = vld [vmem:[#allocation2 + $0x8] sm:$0xff]
        %v288 = vld [vmem:[#allocation2 + $0x10] sm:$0xff]
        %v289 = vld [vmem:[#allocation2 + $0x18] sm:$0xff]
        %v290 = vld [vmem:[#allocation2 + $0x20] sm:$0xff]
        %v291 = vld [vmem:[#allocation2 + $0x28] sm:$0xff]
        %v292 = vld [vmem:[#allocation2 + $0x30] sm:$0xff]
        %v293 = vld [vmem:[#allocation2 + $0x38] sm:$0xff]
        %v294 = vld [vmem:[#allocation2 + $0x40] sm:$0xff]
        %v295 = vld [vmem:[#allocation2 + $0x48] sm:$0xff]
        %v296 = vld [vmem:[#allocation2 + $0x50] sm:$0xff]
        %v297 = vld [vmem:[#allocation2 + $0x58] sm:$0xff]
        %v298 = vld [vmem:[#allocation2 + $0x60] sm:$0xff]
        %v299 = vld [vmem:[#allocation2 + $0x68] sm:$0xff]
        %v300 = vld [vmem:[#allocation2 + $0x70] sm:$0xff]
        %v301 = vld [vmem:[#allocation2 + $0x78] sm:$0xff]
        %v302 = vld [vmem:[#allocation2 + $0x80] sm:$0xff]
        %v303 = vld [vmem:[#allocation2 + $0x88] sm:$0xff]
        %v304 = vld [vmem:[#allocation2 + $0x90] sm:$0xff]
        %v305 = vld [vmem:[#allocation2 + $0x98] sm:$0xff]
        %v306 = vld [vmem:[#allocation2 + $0xa0] sm:$0xff]
        %v307 = vld [vmem:[#allocation2 + $0xa8] sm:$0xff]
        %v308 = vld [vmem:[#allocation2 + $0xb0] sm:$0xff]
        %v309 = vld [vmem:[#allocation2 + $0xb8] sm:$0xff]
        %v310 = vld [vmem:[#allocation2 + $0xc0] sm:$0xff]
        %v311 = vld [vmem:[#allocation2 + $0xc8] sm:$0xff]
        %v312 = vld [vmem:[#allocation2 + $0xd0] sm:$0xff]
        %v313 = vld [vmem:[#allocation2 + $0xd8] sm:$0xff]
        %v314 = vld [vmem:[#allocation2 + $0xe0] sm:$0xff]
        %v315 = vld [vmem:[#allocation2 + $0xe8] sm:$0xff]
        %v316 = vld [vmem:[#allocation2 + $0xf0] sm:$0xff]
        %v317 = vld [vmem:[#allocation2 + $0xf8] sm:$0xff]
        %v318 = vld [vmem:[#allocation2 + $0x100] sm:$0xff]
        %v319 = vld [vmem:[#allocation2 + $0x108] sm:$0xff]
        %v320 = vld [vmem:[#allocation2 + $0x110] sm:$0xff]
        %v321 = vld [vmem:[#allocation2 + $0x118] sm:$0xff]
        %v322 = vld [vmem:[#allocation2 + $0x120] sm:$0xff]
        %v323 = vld [vmem:[#allocation2 + $0x128] sm:$0xff]
        %v324 = vld [vmem:[#allocation2 + $0x130] sm:$0xff]
        %v325 = vld [vmem:[#allocation2 + $0x138] sm:$0xff]
        %v326 = vld [vmem:[#allocation2 + $0x140] sm:$0xff]
        %v327 = vld [vmem:[#allocation2 + $0x148] sm:$0xff]
        %v328 = vld [vmem:[#allocation2 + $0x150] sm:$0xff]
        %v329 = vld [vmem:[#allocation2 + $0x158] sm:$0xff]
        %v330 = vld [vmem:[#allocation2 + $0x160] sm:$0xff]
        %v331 = vld [vmem:[#allocation2 + $0x168] sm:$0xff]
        %v332 = vld [vmem:[#allocation2 + $0x170] sm:$0xff]
        %v333 = vld [vmem:[#allocation2 + $0x178] sm:$0xff]
        %v334 = vld [vmem:[#allocation2 + $0x180] sm:$0xff]
        %v335 = vld [vmem:[#allocation2 + $0x188] sm:$0xff]
        %v336 = vld [vmem:[#allocation2 + $0x190] sm:$0xff]
        %v337 = vld [vmem:[#allocation2 + $0x198] sm:$0xff]
        %v338 = vld [vmem:[#allocation2 + $0x1a0] sm:$0xff]
        %v339 = vld [vmem:[#allocation2 + $0x1a8] sm:$0xff]
        %v340 = vld [vmem:[#allocation2 + $0x1b0] sm:$0xff]
        %v341 = vld [vmem:[#allocation2 + $0x1b8] sm:$0xff]
        %v342 = vld [vmem:[#allocation2 + $0x1c0] sm:$0xff]
        %v343 = vld [vmem:[#allocation2 + $0x1c8] sm:$0xff]
        %v344 = vld [vmem:[#allocation2 + $0x1d0] sm:$0xff]
        %v345 = vld [vmem:[#allocation2 + $0x1d8] sm:$0xff]
        %v346 = vld [vmem:[#allocation2 + $0x1e0] sm:$0xff]
        %v347 = vld [vmem:[#allocation2 + $0x1e8] sm:$0xff]
        %v348 = vld [vmem:[#allocation2 + $0x1f0] sm:$0xff]
        %v349 = vld [vmem:[#allocation2 + $0x1f8] sm:$0xff]
        %v350 = vld [vmem:[#allocation3] sm:$0xff]
        %v351 = vld [vmem:[#allocation3 + $0x8] sm:$0xff]
        %v352 = vld [vmem:[#allocation3 + $0x10] sm:$0xff]
        %v353 = vld [vmem:[#allocation3 + $0x18] sm:$0xff]
        %v354 = vld [vmem:[#allocation3 + $0x20] sm:$0xff]
        %v355 = vld [vmem:[#allocation3 + $0x28] sm:$0xff]
        %v356 = vld [vmem:[#allocation3 + $0x30] sm:$0xff]
        %v357 = vld [vmem:[#allocation3 + $0x38] sm:$0xff]
        %v358 = vld [vmem:[#allocation3 + $0x40] sm:$0xff]
        %v359 = vld [vmem:[#allocation3 + $0x48] sm:$0xff]
        %v360 = vld [vmem:[#allocation3 + $0x50] sm:$0xff]
        %v361 = vld [vmem:[#allocation3 + $0x58] sm:$0xff]
        %v362 = vld [vmem:[#allocation3 + $0x60] sm:$0xff]
        %v363 = vld [vmem:[#allocation3 + $0x68] sm:$0xff]
        %v364 = vld [vmem:[#allocation3 + $0x70] sm:$0xff]
        %v365 = vld [vmem:[#allocation3 + $0x78] sm:$0xff]
        %v366 = vld [vmem:[#allocation3 + $0x80] sm:$0xff]
        %v367 = vld [vmem:[#allocation3 + $0x88] sm:$0xff]
        %v368 = vld [vmem:[#allocation3 + $0x90] sm:$0xff]
        %v369 = vld [vmem:[#allocation3 + $0x98] sm:$0xff]
        %v370 = vld [vmem:[#allocation3 + $0xa0] sm:$0xff]
        %v371 = vld [vmem:[#allocation3 + $0xa8] sm:$0xff]
        %v372 = vld [vmem:[#allocation3 + $0xb0] sm:$0xff]
        %v373 = vld [vmem:[#allocation3 + $0xb8] sm:$0xff]
        %v374 = vld [vmem:[#allocation3 + $0xc0] sm:$0xff]
        %v375 = vld [vmem:[#allocation3 + $0xc8] sm:$0xff]
        %v376 = vld [vmem:[#allocation3 + $0xd0] sm:$0xff]
        %v377 = vld [vmem:[#allocation3 + $0xd8] sm:$0xff]
        %v378 = vld [vmem:[#allocation3 + $0xe0] sm:$0xff]
        %v379 = vld [vmem:[#allocation3 + $0xe8] sm:$0xff]
        %v380 = vld [vmem:[#allocation3 + $0xf0] sm:$0xff]
        %v381 = vld [vmem:[#allocation3 + $0xf8] sm:$0xff]
        %v382 = vld [vmem:[#allocation3 + $0x100] sm:$0xff]
        %v383 = vld [vmem:[#allocation3 + $0x108] sm:$0xff]
        %v384 = vld [vmem:[#allocation3 + $0x110] sm:$0xff]
        %v385 = vld [vmem:[#allocation3 + $0x118] sm:$0xff]
        %v386 = vld [vmem:[#allocation3 + $0x120] sm:$0xff]
        %v387 = vld [vmem:[#allocation3 + $0x128] sm:$0xff]
        %v388 = vld [vmem:[#allocation3 + $0x130] sm:$0xff]
        %v389 = vld [vmem:[#allocation3 + $0x138] sm:$0xff]
        %v390 = vld [vmem:[#allocation3 + $0x140] sm:$0xff]
        %v391 = vld [vmem:[#allocation3 + $0x148] sm:$0xff]
        %v392 = vld [vmem:[#allocation3 + $0x150] sm:$0xff]
        %v393 = vld [vmem:[#allocation3 + $0x158] sm:$0xff]
        %v394 = vld [vmem:[#allocation3 + $0x160] sm:$0xff]
        %v395 = vld [vmem:[#allocation3 + $0x168] sm:$0xff]
        %v396 = vld [vmem:[#allocation3 + $0x170] sm:$0xff]
        %v397 = vld [vmem:[#allocation3 + $0x178] sm:$0xff]
        %v398 = vld [vmem:[#allocation3 + $0x180] sm:$0xff]
        %v399 = vld [vmem:[#allocation3 + $0x188] sm:$0xff]
        %v400 = vld [vmem:[#allocation3 + $0x190] sm:$0xff]
        %v401 = vld [vmem:[#allocation3 + $0x198] sm:$0xff]
        %v402 = vld [vmem:[#allocation3 + $0x1a0] sm:$0xff]
        %v403 = vld [vmem:[#allocation3 + $0x1a8] sm:$0xff]
        %v404 = vld [vmem:[#allocation3 + $0x1b0] sm:$0xff]
        %v405 = vld [vmem:[#allocation3 + $0x1b8] sm:$0xff]
        %v406 = vld [vmem:[#allocation3 + $0x1c0] sm:$0xff]
        %v407 = vld [vmem:[#allocation3 + $0x1c8] sm:$0xff]
        %v408 = vld [vmem:[#allocation3 + $0x1d0] sm:$0xff]
        %v409 = vld [vmem:[#allocation3 + $0x1d8] sm:$0xff]
        %v410 = vld [vmem:[#allocation3 + $0x1e0] sm:$0xff]
        %v411 = vld [vmem:[#allocation3 + $0x1e8] sm:$0xff]
        %v412 = vld [vmem:[#allocation3 + $0x1f0] sm:$0xff]
        %v413 = vld [vmem:[#allocation3 + $0x1f8] sm:$0xff]
        %v414 = vpack.c.bf16 %v352, %v350
        %v415 = vpack.c.bf16 %v353, %v351
        %v416 = vpack.c.bf16 %v356, %v354
        %v417 = vpack.c.bf16 %v357, %v355
        %v418 = vpack.c.bf16 %v360, %v358
        %v419 = vpack.c.bf16 %v361, %v359
        %v420 = vpack.c.bf16 %v364, %v362
        %v421 = vpack.c.bf16 %v365, %v363
        %v422 = vpack.c.bf16 %v368, %v366
        %v423 = vpack.c.bf16 %v369, %v367
        %v424 = vpack.c.bf16 %v372, %v370
        %v425 = vpack.c.bf16 %v373, %v371
        %v426 = vpack.c.bf16 %v376, %v374
        %v427 = vpack.c.bf16 %v377, %v375
        %v428 = vpack.c.bf16 %v380, %v378
        %v429 = vpack.c.bf16 %v381, %v379
        %v430 = vpack.c.bf16 %v384, %v382
        %v431 = vpack.c.bf16 %v385, %v383
        %v432 = vpack.c.bf16 %v388, %v386
        %v433 = vpack.c.bf16 %v389, %v387
        %v434 = vpack.c.bf16 %v392, %v390
        %v435 = vpack.c.bf16 %v393, %v391
        %v436 = vpack.c.bf16 %v396, %v394
        %v437 = vpack.c.bf16 %v397, %v395
        %v438 = vpack.c.bf16 %v400, %v398
        %v439 = vpack.c.bf16 %v401, %v399
        %v440 = vpack.c.bf16 %v404, %v402
        %v441 = vpack.c.bf16 %v405, %v403
        %v442 = vpack.c.bf16 %v408, %v406
        %v443 = vpack.c.bf16 %v409, %v407
        %v444 = vpack.c.bf16 %v412, %v410
        %v445 = vpack.c.bf16 %v413, %v411
        %v446 = vld [vmem:[%s192] sm:$0xff]
        %v447 = vld [vmem:[%s192 + $0x8] sm:$0xff]
        %v448 = vld [vmem:[%s192 + $0x10] sm:$0xff]
        %v449 = vld [vmem:[%s192 + $0x18] sm:$0xff]
        %v450 = vld [vmem:[%s192 + $0x20] sm:$0xff]
        %v451 = vld [vmem:[%s192 + $0x28] sm:$0xff]
        %v452 = vld [vmem:[%s192 + $0x30] sm:$0xff]
        %v453 = vld [vmem:[%s192 + $0x38] sm:$0xff]
        %v454 = vld [vmem:[%s192 + $0x40] sm:$0xff]
        %v455 = vld [vmem:[%s192 + $0x48] sm:$0xff]
        %v456 = vld [vmem:[%s192 + $0x50] sm:$0xff]
        %v457 = vld [vmem:[%s192 + $0x58] sm:$0xff]
        %v458 = vld [vmem:[%s192 + $0x60] sm:$0xff]
        %v459 = vld [vmem:[%s192 + $0x68] sm:$0xff]
        %v460 = vld [vmem:[%s192 + $0x70] sm:$0xff]
        %v461 = vld [vmem:[%s192 + $0x78] sm:$0xff]
        %v462 = vld [vmem:[%s192 + $0x80] sm:$0xff]
        %v463 = vld [vmem:[%s192 + $0x88] sm:$0xff]
        %v464 = vld [vmem:[%s192 + $0x90] sm:$0xff]
        %v465 = vld [vmem:[%s192 + $0x98] sm:$0xff]
        %v466 = vld [vmem:[%s192 + $0xa0] sm:$0xff]
        %v467 = vld [vmem:[%s192 + $0xa8] sm:$0xff]
        %v468 = vld [vmem:[%s192 + $0xb0] sm:$0xff]
        %v469 = vld [vmem:[%s192 + $0xb8] sm:$0xff]
        %v470 = vld [vmem:[%s192 + $0xc0] sm:$0xff]
        %v471 = vld [vmem:[%s192 + $0xc8] sm:$0xff]
        %v472 = vld [vmem:[%s192 + $0xd0] sm:$0xff]
        %v473 = vld [vmem:[%s192 + $0xd8] sm:$0xff]
        %v474 = vld [vmem:[%s192 + $0xe0] sm:$0xff]
        %v475 = vld [vmem:[%s192 + $0xe8] sm:$0xff]
        %v476 = vld [vmem:[%s192 + $0xf0] sm:$0xff]
        %v477 = vld [vmem:[%s192 + $0xf8] sm:$0xff]
        %v510 = vunpack.c.l.b16 %v446
        %v511 = vunpack.c.h.b16 %v446
        %v512 = vunpack.c.l.b16 %v447
        %v513 = vunpack.c.h.b16 %v447
        %v514 = vunpack.c.l.b16 %v448
        %v515 = vunpack.c.h.b16 %v448
        %v516 = vunpack.c.l.b16 %v449
        %v517 = vunpack.c.h.b16 %v449
        %v518 = vunpack.c.l.b16 %v450
        %v519 = vunpack.c.h.b16 %v450
        %v520 = vunpack.c.l.b16 %v451
        %v521 = vunpack.c.h.b16 %v451
        %v522 = vunpack.c.l.b16 %v452
        %v523 = vunpack.c.h.b16 %v452
        %v524 = vunpack.c.l.b16 %v453
        %v525 = vunpack.c.h.b16 %v453
        %v526 = vunpack.c.l.b16 %v454
        %v527 = vunpack.c.h.b16 %v454
        %v528 = vunpack.c.l.b16 %v455
        %v529 = vunpack.c.h.b16 %v455
        %v530 = vunpack.c.l.b16 %v456
        %v531 = vunpack.c.h.b16 %v456
        %v532 = vunpack.c.l.b16 %v457
        %v533 = vunpack.c.h.b16 %v457
        %v534 = vunpack.c.l.b16 %v458
        %v535 = vunpack.c.h.b16 %v458
        %v536 = vunpack.c.l.b16 %v459
        %v537 = vunpack.c.h.b16 %v459
        %v538 = vunpack.c.l.b16 %v460
        %v539 = vunpack.c.h.b16 %v460
        %v540 = vunpack.c.l.b16 %v461
        %v541 = vunpack.c.h.b16 %v461
        %v542 = vunpack.c.l.b16 %v462
        %v543 = vunpack.c.h.b16 %v462
        %v544 = vunpack.c.l.b16 %v463
        %v545 = vunpack.c.h.b16 %v463
        %v546 = vunpack.c.l.b16 %v464
        %v547 = vunpack.c.h.b16 %v464
        %v548 = vunpack.c.l.b16 %v465
        %v549 = vunpack.c.h.b16 %v465
        %v550 = vunpack.c.l.b16 %v466
        %v551 = vunpack.c.h.b16 %v466
        %v552 = vunpack.c.l.b16 %v467
        %v553 = vunpack.c.h.b16 %v467
        %v554 = vunpack.c.l.b16 %v468
        %v555 = vunpack.c.h.b16 %v468
        %v556 = vunpack.c.l.b16 %v469
        %v557 = vunpack.c.h.b16 %v469
        %v558 = vunpack.c.l.b16 %v470
        %v559 = vunpack.c.h.b16 %v470
        %v560 = vunpack.c.l.b16 %v471
        %v561 = vunpack.c.h.b16 %v471
        %v562 = vunpack.c.l.b16 %v472
        %v563 = vunpack.c.h.b16 %v472
        %v564 = vunpack.c.l.b16 %v473
        %v565 = vunpack.c.h.b16 %v473
        %v566 = vunpack.c.l.b16 %v474
        %v567 = vunpack.c.h.b16 %v474
        %v568 = vunpack.c.l.b16 %v475
        %v569 = vunpack.c.h.b16 %v475
        %v570 = vunpack.c.l.b16 %v476
        %v571 = vunpack.c.h.b16 %v476
        %v572 = vunpack.c.l.b16 %v477
        %v573 = vunpack.c.h.b16 %v477
        %v574 = vpack.c.b16 %v512, %v510
        %v575 = vpack.c.b16 %v513, %v511
        %v576 = vpack.c.b16 %v516, %v514
        %v577 = vpack.c.b16 %v517, %v515
        %v578 = vpack.c.b16 %v520, %v518
        %v579 = vpack.c.b16 %v521, %v519
        %v580 = vpack.c.b16 %v524, %v522
        %v581 = vpack.c.b16 %v525, %v523
        %v582 = vpack.c.b16 %v528, %v526
        %v583 = vpack.c.b16 %v529, %v527
        %v584 = vpack.c.b16 %v532, %v530
        %v585 = vpack.c.b16 %v533, %v531
        %v586 = vpack.c.b16 %v536, %v534
        %v587 = vpack.c.b16 %v537, %v535
        %v588 = vpack.c.b16 %v540, %v538
        %v589 = vpack.c.b16 %v541, %v539
        %v590 = vpack.c.b16 %v544, %v542
        %v591 = vpack.c.b16 %v545, %v543
        %v592 = vpack.c.b16 %v548, %v546
        %v593 = vpack.c.b16 %v549, %v547
        %v594 = vpack.c.b16 %v552, %v550
        %v595 = vpack.c.b16 %v553, %v551
        %v596 = vpack.c.b16 %v556, %v554
        %v597 = vpack.c.b16 %v557, %v555
        %v598 = vpack.c.b16 %v560, %v558
        %v599 = vpack.c.b16 %v561, %v559
        %v600 = vpack.c.b16 %v564, %v562
        %v601 = vpack.c.b16 %v565, %v563
        %v602 = vpack.c.b16 %v568, %v566
        %v603 = vpack.c.b16 %v569, %v567
        %v604 = vpack.c.b16 %v572, %v570
        %v605 = vpack.c.b16 %v573, %v571
        %638 = vmatprep.subr.bf16.mxu0 %v575
        %639 = vmatpush1.bf16.msra.mxu0 %v574
        %640 = vmatprep.subr.bf16.mxu0 %v577
        %641 = vmatpush1.bf16.msra.mxu0 %v576
        %642 = vmatprep.subr.bf16.mxu0 %v579
        %643 = vmatpush1.bf16.msra.mxu0 %v578
        %644 = vmatprep.subr.bf16.mxu0 %v581
        %645 = vmatpush1.bf16.msra.mxu0 %v580
        %646 = vmatprep.subr.bf16.mxu0 %v583
        %647 = vmatpush1.bf16.msra.mxu0 %v582
        %648 = vmatprep.subr.bf16.mxu0 %v585
        %649 = vmatpush1.bf16.msra.mxu0 %v584
        %650 = vmatprep.subr.bf16.mxu0 %v587
        %651 = vmatpush1.bf16.msra.mxu0 %v586
        %652 = vmatprep.subr.bf16.mxu0 %v589
        %653 = vmatpush1.bf16.msra.mxu0 %v588
        %654 = vmatprep.subr.bf16.mxu0 %v591
        %655 = vmatpush1.bf16.msra.mxu0 %v590
        %656 = vmatprep.subr.bf16.mxu0 %v593
        %657 = vmatpush1.bf16.msra.mxu0 %v592
        %658 = vmatprep.subr.bf16.mxu0 %v595
        %659 = vmatpush1.bf16.msra.mxu0 %v594
        %660 = vmatprep.subr.bf16.mxu0 %v597
        %661 = vmatpush1.bf16.msra.mxu0 %v596
        %662 = vmatprep.subr.bf16.mxu0 %v599
        %663 = vmatpush1.bf16.msra.mxu0 %v598
        %664 = vmatprep.subr.bf16.mxu0 %v601
        %665 = vmatpush1.bf16.msra.mxu0 %v600
        %666 = vmatprep.subr.bf16.mxu0 %v603
        %667 = vmatpush1.bf16.msra.mxu0 %v602
        %668 = vmatprep.subr.bf16.mxu0 %v605
        %669 = vmatpush1.bf16.msra.mxu0 %v604
        %670 = vmatprep.mubr.bf16.mxu0 %v415
        %671 = vmatmul.mubr.bf16.gmra.mrb[0].mxu0 %v414
        %v672 = vpop.f32.mrb[0].mxu0
        %v673 = vadd.f32 0.0, %v672
        %v674 = vpop.f32.mrb[0].mxu0
        %v675 = vadd.f32 0.0, %v674
        %v676 = vpop.f32.mrb[0].mxu0
        %v677 = vadd.f32 0.0, %v676
        %v678 = vpop.f32.mrb[0].mxu0
        %v679 = vadd.f32 0.0, %v678
        %680 = vmatprep.mubr.bf16.mxu0 %v417
        %681 = vmatmul.mubr.bf16.gmra.mrb[0].mxu0 %v416
        %v682 = vpop.f32.mrb[0].mxu0
        %v683 = vadd.f32 0.0, %v682
        %v684 = vpop.f32.mrb[0].mxu0
        %v685 = vadd.f32 0.0, %v684
        %v686 = vpop.f32.mrb[0].mxu0
        %v687 = vadd.f32 0.0, %v686
        %v688 = vpop.f32.mrb[0].mxu0
        %v689 = vadd.f32 0.0, %v688
        %690 = vmatprep.mubr.bf16.mxu0 %v419
        %691 = vmatmul.mubr.bf16.gmra.mrb[0].mxu0 %v418
        %v692 = vpop.f32.mrb[0].mxu0
        %v693 = vadd.f32 0.0, %v692
        %v694 = vpop.f32.mrb[0].mxu0
        %v695 = vadd.f32 0.0, %v694
        %v696 = vpop.f32.mrb[0].mxu0
        %v697 = vadd.f32 0.0, %v696
        %v698 = vpop.f32.mrb[0].mxu0
        %v699 = vadd.f32 0.0, %v698
        %700 = vmatprep.mubr.bf16.mxu0 %v421
        %701 = vmatmul.mubr.bf16.gmra.mrb[0].mxu0 %v420
        %v702 = vpop.f32.mrb[0].mxu0
        %v703 = vadd.f32 0.0, %v702
        %v704 = vpop.f32.mrb[0].mxu0
        %v705 = vadd.f32 0.0, %v704
        %v706 = vpop.f32.mrb[0].mxu0
        %v707 = vadd.f32 0.0, %v706
        %v708 = vpop.f32.mrb[0].mxu0
        %v709 = vadd.f32 0.0, %v708
        %710 = vmatprep.mubr.bf16.mxu0 %v423
        %711 = vmatmul.mubr.bf16.gmra.mrb[0].mxu0 %v422
        %v712 = vpop.f32.mrb[0].mxu0
        %v713 = vadd.f32 0.0, %v712
        %v714 = vpop.f32.mrb[0].mxu0
        %v715 = vadd.f32 0.0, %v714
        %v716 = vpop.f32.mrb[0].mxu0
        %v717 = vadd.f32 0.0, %v716
        %v718 = vpop.f32.mrb[0].mxu0
        %v719 = vadd.f32 0.0, %v718
        %720 = vmatprep.mubr.bf16.mxu0 %v425
        %721 = vmatmul.mubr.bf16.gmra.mrb[0].mxu0 %v424
        %v722 = vpop.f32.mrb[0].mxu0
        %v723 = vadd.f32 0.0, %v722
        %v724 = vpop.f32.mrb[0].mxu0
        %v725 = vadd.f32 0.0, %v724
        %v726 = vpop.f32.mrb[0].mxu0
        %v727 = vadd.f32 0.0, %v726
        %v728 = vpop.f32.mrb[0].mxu0
        %v729 = vadd.f32 0.0, %v728
        %730 = vmatprep.mubr.bf16.mxu0 %v427
        %731 = vmatmul.mubr.bf16.gmra.mrb[0].mxu0 %v426
        %v732 = vpop.f32.mrb[0].mxu0
        %v733 = vadd.f32 0.0, %v732
        %v734 = vpop.f32.mrb[0].mxu0
        %v735 = vadd.f32 0.0, %v734
        %v736 = vpop.f32.mrb[0].mxu0
        %v737 = vadd.f32 0.0, %v736
        %v738 = vpop.f32.mrb[0].mxu0
        %v739 = vadd.f32 0.0, %v738
        %740 = vmatprep.mubr.bf16.mxu0 %v429
        %741 = vmatmul.mubr.bf16.gmra.mrb[0].mxu0 %v428
        %v742 = vpop.f32.mrb[0].mxu0
        %v743 = vadd.f32 0.0, %v742
        %v744 = vpop.f32.mrb[0].mxu0
        %v745 = vadd.f32 0.0, %v744
        %v746 = vpop.f32.mrb[0].mxu0
        %v747 = vadd.f32 0.0, %v746
        %v748 = vpop.f32.mrb[0].mxu0
        %v749 = vadd.f32 0.0, %v748
        %750 = vmatprep.mubr.bf16.mxu0 %v431
        %751 = vmatmul.mubr.bf16.gmra.mrb[0].mxu0 %v430
        %v752 = vpop.f32.mrb[0].mxu0
        %v753 = vadd.f32 0.0, %v752
        %v754 = vpop.f32.mrb[0].mxu0
        %v755 = vadd.f32 0.0, %v754
        %v756 = vpop.f32.mrb[0].mxu0
        %v757 = vadd.f32 0.0, %v756
        %v758 = vpop.f32.mrb[0].mxu0
        %v759 = vadd.f32 0.0, %v758
        %760 = vmatprep.mubr.bf16.mxu0 %v433
        %761 = vmatmul.mubr.bf16.gmra.mrb[0].mxu0 %v432
        %v762 = vpop.f32.mrb[0].mxu0
        %v763 = vadd.f32 0.0, %v762
        %v764 = vpop.f32.mrb[0].mxu0
        %v765 = vadd.f32 0.0, %v764
        %v766 = vpop.f32.mrb[0].mxu0
        %v767 = vadd.f32 0.0, %v766
        %v768 = vpop.f32.mrb[0].mxu0
        %v769 = vadd.f32 0.0, %v768
        %770 = vmatprep.mubr.bf16.mxu0 %v435
        %771 = vmatmul.mubr.bf16.gmra.mrb[0].mxu0 %v434
        %v772 = vpop.f32.mrb[0].mxu0
        %v773 = vadd.f32 0.0, %v772
        %v774 = vpop.f32.mrb[0].mxu0
        %v775 = vadd.f32 0.0, %v774
        %v776 = vpop.f32.mrb[0].mxu0
        %v777 = vadd.f32 0.0, %v776
        %v778 = vpop.f32.mrb[0].mxu0
        %v779 = vadd.f32 0.0, %v778
        %780 = vmatprep.mubr.bf16.mxu0 %v437
        %781 = vmatmul.mubr.bf16.gmra.mrb[0].mxu0 %v436
        %v782 = vpop.f32.mrb[0].mxu0
        %v783 = vadd.f32 0.0, %v782
        %v784 = vpop.f32.mrb[0].mxu0
        %v785 = vadd.f32 0.0, %v784
        %v786 = vpop.f32.mrb[0].mxu0
        %v787 = vadd.f32 0.0, %v786
        %v788 = vpop.f32.mrb[0].mxu0
        %v789 = vadd.f32 0.0, %v788
        %790 = vmatprep.mubr.bf16.mxu0 %v439
        %791 = vmatmul.mubr.bf16.gmra.mrb[0].mxu0 %v438
        %v792 = vpop.f32.mrb[0].mxu0
        %v793 = vadd.f32 0.0, %v792
        %v794 = vpop.f32.mrb[0].mxu0
        %v795 = vadd.f32 0.0, %v794
        %v796 = vpop.f32.mrb[0].mxu0
        %v797 = vadd.f32 0.0, %v796
        %v798 = vpop.f32.mrb[0].mxu0
        %v799 = vadd.f32 0.0, %v798
        %800 = vmatprep.mubr.bf16.mxu0 %v441
        %801 = vmatmul.mubr.bf16.gmra.mrb[0].mxu0 %v440
        %v802 = vpop.f32.mrb[0].mxu0
        %v803 = vadd.f32 0.0, %v802
        %v804 = vpop.f32.mrb[0].mxu0
        %v805 = vadd.f32 0.0, %v804
        %v806 = vpop.f32.mrb[0].mxu0
        %v807 = vadd.f32 0.0, %v806
        %v808 = vpop.f32.mrb[0].mxu0
        %v809 = vadd.f32 0.0, %v808
        %810 = vmatprep.mubr.bf16.mxu0 %v443
        %811 = vmatmul.mubr.bf16.gmra.mrb[0].mxu0 %v442
        %v812 = vpop.f32.mrb[0].mxu0
        %v813 = vadd.f32 0.0, %v812
        %v814 = vpop.f32.mrb[0].mxu0
        %v815 = vadd.f32 0.0, %v814
        %v816 = vpop.f32.mrb[0].mxu0
        %v817 = vadd.f32 0.0, %v816
        %v818 = vpop.f32.mrb[0].mxu0
        %v819 = vadd.f32 0.0, %v818
        %820 = vmatprep.mubr.bf16.mxu0 %v445
        %821 = vmatmul.mubr.bf16.gmra.mrb[0].mxu0 %v444
        %v822 = vpop.f32.mrb[0].mxu0
        %v823 = vadd.f32 0.0, %v822
        %v824 = vpop.f32.mrb[0].mxu0
        %v825 = vadd.f32 0.0, %v824
        %v826 = vpop.f32.mrb[0].mxu0
        %v827 = vadd.f32 0.0, %v826
        %v828 = vpop.f32.mrb[0].mxu0
        %v829 = vadd.f32 0.0, %v828
        %830 = vdwg.mxu0
        %v831 = vadd.f32 %v286, %v673
        %v832 = vadd.f32 %v287, %v675
        %v833 = vadd.f32 %v288, %v677
        %v834 = vadd.f32 %v289, %v679
        %v835 = vadd.f32 %v290, %v683
        %v836 = vadd.f32 %v291, %v685
        %v837 = vadd.f32 %v292, %v687
        %v838 = vadd.f32 %v293, %v689
        %v839 = vadd.f32 %v294, %v693
        %v840 = vadd.f32 %v295, %v695
        %v841 = vadd.f32 %v296, %v697
        %v842 = vadd.f32 %v297, %v699
        %v843 = vadd.f32 %v298, %v703
        %v844 = vadd.f32 %v299, %v705
        %v845 = vadd.f32 %v300, %v707
        %v846 = vadd.f32 %v301, %v709
        %v847 = vadd.f32 %v302, %v713
        %v848 = vadd.f32 %v303, %v715
        %v849 = vadd.f32 %v304, %v717
        %v850 = vadd.f32 %v305, %v719
        %v851 = vadd.f32 %v306, %v723
        %v852 = vadd.f32 %v307, %v725
        %v853 = vadd.f32 %v308, %v727
        %v854 = vadd.f32 %v309, %v729
        %v855 = vadd.f32 %v310, %v733
        %v856 = vadd.f32 %v311, %v735
        %v857 = vadd.f32 %v312, %v737
        %v858 = vadd.f32 %v313, %v739
        %v859 = vadd.f32 %v314, %v743
        %v860 = vadd.f32 %v315, %v745
        %v861 = vadd.f32 %v316, %v747
        %v862 = vadd.f32 %v317, %v749
        %v863 = vadd.f32 %v318, %v753
        %v864 = vadd.f32 %v319, %v755
        %v865 = vadd.f32 %v320, %v757
        %v866 = vadd.f32 %v321, %v759
        %v867 = vadd.f32 %v322, %v763
        %v868 = vadd.f32 %v323, %v765
        %v869 = vadd.f32 %v324, %v767
        %v870 = vadd.f32 %v325, %v769
        %v871 = vadd.f32 %v326, %v773
        %v872 = vadd.f32 %v327, %v775
        %v873 = vadd.f32 %v328, %v777
        %v874 = vadd.f32 %v329, %v779
        %v875 = vadd.f32 %v330, %v783
        %v876 = vadd.f32 %v331, %v785
        %v877 = vadd.f32 %v332, %v787
        %v878 = vadd.f32 %v333, %v789
        %v879 = vadd.f32 %v334, %v793
        %v880 = vadd.f32 %v335, %v795
        %v881 = vadd.f32 %v336, %v797
        %v882 = vadd.f32 %v337, %v799
        %v883 = vadd.f32 %v338, %v803
        %v884 = vadd.f32 %v339, %v805
        %v885 = vadd.f32 %v340, %v807
        %v886 = vadd.f32 %v341, %v809
        %v887 = vadd.f32 %v342, %v813
        %v888 = vadd.f32 %v343, %v815
        %v889 = vadd.f32 %v344, %v817
        %v890 = vadd.f32 %v345, %v819
        %v891 = vadd.f32 %v346, %v823
        %v892 = vadd.f32 %v347, %v825
        %v893 = vadd.f32 %v348, %v827
        %v894 = vadd.f32 %v349, %v829
        %895 = vst [vmem:[#allocation2] sm:$0xff] %v831
        %896 = vst [vmem:[#allocation2 + $0x8] sm:$0xff] %v832
        %897 = vst [vmem:[#allocation2 + $0x10] sm:$0xff] %v833
        %898 = vst [vmem:[#allocation2 + $0x18] sm:$0xff] %v834
        %899 = vst [vmem:[#allocation2 + $0x20] sm:$0xff] %v835
        %900 = vst [vmem:[#allocation2 + $0x28] sm:$0xff] %v836
        %901 = vst [vmem:[#allocation2 + $0x30] sm:$0xff] %v837
        %902 = vst [vmem:[#allocation2 + $0x38] sm:$0xff] %v838
        %903 = vst [vmem:[#allocation2 + $0x40] sm:$0xff] %v839
        %904 = vst [vmem:[#allocation2 + $0x48] sm:$0xff] %v840
        %905 = vst [vmem:[#allocation2 + $0x50] sm:$0xff] %v841
        %906 = vst [vmem:[#allocation2 + $0x58] sm:$0xff] %v842
        %907 = vst [vmem:[#allocation2 + $0x60] sm:$0xff] %v843
        %908 = vst [vmem:[#allocation2 + $0x68] sm:$0xff] %v844
        %909 = vst [vmem:[#allocation2 + $0x70] sm:$0xff] %v845
        %910 = vst [vmem:[#allocation2 + $0x78] sm:$0xff] %v846
        %911 = vst [vmem:[#allocation2 + $0x80] sm:$0xff] %v847
        %912 = vst [vmem:[#allocation2 + $0x88] sm:$0xff] %v848
        %913 = vst [vmem:[#allocation2 + $0x90] sm:$0xff] %v849
        %914 = vst [vmem:[#allocation2 + $0x98] sm:$0xff] %v850
        %915 = vst [vmem:[#allocation2 + $0xa0] sm:$0xff] %v851
        %916 = vst [vmem:[#allocation2 + $0xa8] sm:$0xff] %v852
        %917 = vst [vmem:[#allocation2 + $0xb0] sm:$0xff] %v853
        %918 = vst [vmem:[#allocation2 + $0xb8] sm:$0xff] %v854
        %919 = vst [vmem:[#allocation2 + $0xc0] sm:$0xff] %v855
        %920 = vst [vmem:[#allocation2 + $0xc8] sm:$0xff] %v856
        %921 = vst [vmem:[#allocation2 + $0xd0] sm:$0xff] %v857
        %922 = vst [vmem:[#allocation2 + $0xd8] sm:$0xff] %v858
        %923 = vst [vmem:[#allocation2 + $0xe0] sm:$0xff] %v859
        %924 = vst [vmem:[#allocation2 + $0xe8] sm:$0xff] %v860
        %925 = vst [vmem:[#allocation2 + $0xf0] sm:$0xff] %v861
        %926 = vst [vmem:[#allocation2 + $0xf8] sm:$0xff] %v862
        %927 = vst [vmem:[#allocation2 + $0x100] sm:$0xff] %v863
        %928 = vst [vmem:[#allocation2 + $0x108] sm:$0xff] %v864
        %929 = vst [vmem:[#allocation2 + $0x110] sm:$0xff] %v865
        %930 = vst [vmem:[#allocation2 + $0x118] sm:$0xff] %v866
        %931 = vst [vmem:[#allocation2 + $0x120] sm:$0xff] %v867
        %932 = vst [vmem:[#allocation2 + $0x128] sm:$0xff] %v868
        %933 = vst [vmem:[#allocation2 + $0x130] sm:$0xff] %v869
        %934 = vst [vmem:[#allocation2 + $0x138] sm:$0xff] %v870
        %935 = vst [vmem:[#allocation2 + $0x140] sm:$0xff] %v871
        %936 = vst [vmem:[#allocation2 + $0x148] sm:$0xff] %v872
        %937 = vst [vmem:[#allocation2 + $0x150] sm:$0xff] %v873
        %938 = vst [vmem:[#allocation2 + $0x158] sm:$0xff] %v874
        %939 = vst [vmem:[#allocation2 + $0x160] sm:$0xff] %v875
        %940 = vst [vmem:[#allocation2 + $0x168] sm:$0xff] %v876
        %941 = vst [vmem:[#allocation2 + $0x170] sm:$0xff] %v877
        %942 = vst [vmem:[#allocation2 + $0x178] sm:$0xff] %v878
        %943 = vst [vmem:[#allocation2 + $0x180] sm:$0xff] %v879
        %944 = vst [vmem:[#allocation2 + $0x188] sm:$0xff] %v880
        %945 = vst [vmem:[#allocation2 + $0x190] sm:$0xff] %v881
        %946 = vst [vmem:[#allocation2 + $0x198] sm:$0xff] %v882
        %947 = vst [vmem:[#allocation2 + $0x1a0] sm:$0xff] %v883
        %948 = vst [vmem:[#allocation2 + $0x1a8] sm:$0xff] %v884
        %949 = vst [vmem:[#allocation2 + $0x1b0] sm:$0xff] %v885
        %950 = vst [vmem:[#allocation2 + $0x1b8] sm:$0xff] %v886
        %951 = vst [vmem:[#allocation2 + $0x1c0] sm:$0xff] %v887
        %952 = vst [vmem:[#allocation2 + $0x1c8] sm:$0xff] %v888
        %953 = vst [vmem:[#allocation2 + $0x1d0] sm:$0xff] %v889
        %954 = vst [vmem:[#allocation2 + $0x1d8] sm:$0xff] %v890
        %955 = vst [vmem:[#allocation2 + $0x1e0] sm:$0xff] %v891
        %956 = vst [vmem:[#allocation2 + $0x1e8] sm:$0xff] %v892
        %957 = vst [vmem:[#allocation2 + $0x1f0] sm:$0xff] %v893
        %958 = vst [vmem:[#allocation2 + $0x1f8] sm:$0xff] %v894
        // Predicated region
        $region41: #{attention_forward.3} parent=27 // pred_check
          %p959 = pneg %p218
        $region42: #{attention_forward.3} parent=27 // pred_check_branch
          %961 = sbr.rel (%p959) target = $region44
        $region43: #{attention_forward.3} parent=27 // pred_region
          %v962 = vld [vmem:[#allocation2] sm:$0xff]
          %v963 = vld [vmem:[#allocation2 + $0x8] sm:$0xff]
          %v964 = vld [vmem:[#allocation2 + $0x10] sm:$0xff]
          %v965 = vld [vmem:[#allocation2 + $0x18] sm:$0xff]
          %v966 = vld [vmem:[#allocation2 + $0x20] sm:$0xff]
          %v967 = vld [vmem:[#allocation2 + $0x28] sm:$0xff]
          %v968 = vld [vmem:[#allocation2 + $0x30] sm:$0xff]
          %v969 = vld [vmem:[#allocation2 + $0x38] sm:$0xff]
          %v970 = vld [vmem:[#allocation2 + $0x40] sm:$0xff]
          %v971 = vld [vmem:[#allocation2 + $0x48] sm:$0xff]
          %v972 = vld [vmem:[#allocation2 + $0x50] sm:$0xff]
          %v973 = vld [vmem:[#allocation2 + $0x58] sm:$0xff]
          %v974 = vld [vmem:[#allocation2 + $0x60] sm:$0xff]
          %v975 = vld [vmem:[#allocation2 + $0x68] sm:$0xff]
          %v976 = vld [vmem:[#allocation2 + $0x70] sm:$0xff]
          %v977 = vld [vmem:[#allocation2 + $0x78] sm:$0xff]
          %v978 = vld [vmem:[#allocation2 + $0x80] sm:$0xff]
          %v979 = vld [vmem:[#allocation2 + $0x88] sm:$0xff]
          %v980 = vld [vmem:[#allocation2 + $0x90] sm:$0xff]
          %v981 = vld [vmem:[#allocation2 + $0x98] sm:$0xff]
          %v982 = vld [vmem:[#allocation2 + $0xa0] sm:$0xff]
          %v983 = vld [vmem:[#allocation2 + $0xa8] sm:$0xff]
          %v984 = vld [vmem:[#allocation2 + $0xb0] sm:$0xff]
          %v985 = vld [vmem:[#allocation2 + $0xb8] sm:$0xff]
          %v986 = vld [vmem:[#allocation2 + $0xc0] sm:$0xff]
          %v987 = vld [vmem:[#allocation2 + $0xc8] sm:$0xff]
          %v988 = vld [vmem:[#allocation2 + $0xd0] sm:$0xff]
          %v989 = vld [vmem:[#allocation2 + $0xd8] sm:$0xff]
          %v990 = vld [vmem:[#allocation2 + $0xe0] sm:$0xff]
          %v991 = vld [vmem:[#allocation2 + $0xe8] sm:$0xff]
          %v992 = vld [vmem:[#allocation2 + $0xf0] sm:$0xff]
          %v993 = vld [vmem:[#allocation2 + $0xf8] sm:$0xff]
          %v994 = vld [vmem:[#allocation2 + $0x100] sm:$0xff]
          %v995 = vld [vmem:[#allocation2 + $0x108] sm:$0xff]
          %v996 = vld [vmem:[#allocation2 + $0x110] sm:$0xff]
          %v997 = vld [vmem:[#allocation2 + $0x118] sm:$0xff]
          %v998 = vld [vmem:[#allocation2 + $0x120] sm:$0xff]
          %v999 = vld [vmem:[#allocation2 + $0x128] sm:$0xff]
          %v1000 = vld [vmem:[#allocation2 + $0x130] sm:$0xff]
          %v1001 = vld [vmem:[#allocation2 + $0x138] sm:$0xff]
          %v1002 = vld [vmem:[#allocation2 + $0x140] sm:$0xff]
          %v1003 = vld [vmem:[#allocation2 + $0x148] sm:$0xff]
          %v1004 = vld [vmem:[#allocation2 + $0x150] sm:$0xff]
          %v1005 = vld [vmem:[#allocation2 + $0x158] sm:$0xff]
          %v1006 = vld [vmem:[#allocation2 + $0x160] sm:$0xff]
          %v1007 = vld [vmem:[#allocation2 + $0x168] sm:$0xff]
          %v1008 = vld [vmem:[#allocation2 + $0x170] sm:$0xff]
          %v1009 = vld [vmem:[#allocation2 + $0x178] sm:$0xff]
          %v1010 = vld [vmem:[#allocation2 + $0x180] sm:$0xff]
          %v1011 = vld [vmem:[#allocation2 + $0x188] sm:$0xff]
          %v1012 = vld [vmem:[#allocation2 + $0x190] sm:$0xff]
          %v1013 = vld [vmem:[#allocation2 + $0x198] sm:$0xff]
          %v1014 = vld [vmem:[#allocation2 + $0x1a0] sm:$0xff]
          %v1015 = vld [vmem:[#allocation2 + $0x1a8] sm:$0xff]
          %v1016 = vld [vmem:[#allocation2 + $0x1b0] sm:$0xff]
          %v1017 = vld [vmem:[#allocation2 + $0x1b8] sm:$0xff]
          %v1018 = vld [vmem:[#allocation2 + $0x1c0] sm:$0xff]
          %v1019 = vld [vmem:[#allocation2 + $0x1c8] sm:$0xff]
          %v1020 = vld [vmem:[#allocation2 + $0x1d0] sm:$0xff]
          %v1021 = vld [vmem:[#allocation2 + $0x1d8] sm:$0xff]
          %v1022 = vld [vmem:[#allocation2 + $0x1e0] sm:$0xff]
          %v1023 = vld [vmem:[#allocation2 + $0x1e8] sm:$0xff]
          %v1024 = vld [vmem:[#allocation2 + $0x1f0] sm:$0xff]
          %v1025 = vld [vmem:[#allocation2 + $0x1f8] sm:$0xff]
          %v1026 = vpack.c.bf16 %v964, %v962
          %v1027 = vpack.c.bf16 %v965, %v963
          %v1028 = vpack.c.bf16 %v968, %v966
          %v1029 = vpack.c.bf16 %v969, %v967
          %v1030 = vpack.c.bf16 %v972, %v970
          %v1031 = vpack.c.bf16 %v973, %v971
          %v1032 = vpack.c.bf16 %v976, %v974
          %v1033 = vpack.c.bf16 %v977, %v975
          %v1034 = vpack.c.bf16 %v980, %v978
          %v1035 = vpack.c.bf16 %v981, %v979
          %v1036 = vpack.c.bf16 %v984, %v982
          %v1037 = vpack.c.bf16 %v985, %v983
          %v1038 = vpack.c.bf16 %v988, %v986
          %v1039 = vpack.c.bf16 %v989, %v987
          %v1040 = vpack.c.bf16 %v992, %v990
          %v1041 = vpack.c.bf16 %v993, %v991
          %v1042 = vpack.c.bf16 %v996, %v994
          %v1043 = vpack.c.bf16 %v997, %v995
          %v1044 = vpack.c.bf16 %v1000, %v998
          %v1045 = vpack.c.bf16 %v1001, %v999
          %v1046 = vpack.c.bf16 %v1004, %v1002
          %v1047 = vpack.c.bf16 %v1005, %v1003
          %v1048 = vpack.c.bf16 %v1008, %v1006
          %v1049 = vpack.c.bf16 %v1009, %v1007
          %v1050 = vpack.c.bf16 %v1012, %v1010
          %v1051 = vpack.c.bf16 %v1013, %v1011
          %v1052 = vpack.c.bf16 %v1016, %v1014
          %v1053 = vpack.c.bf16 %v1017, %v1015
          %v1054 = vpack.c.bf16 %v1020, %v1018
          %v1055 = vpack.c.bf16 %v1021, %v1019
          %v1056 = vpack.c.bf16 %v1024, %v1022
          %v1057 = vpack.c.bf16 %v1025, %v1023
          %v1090 = vunpack.c.l.b16 %v1026
          %v1091 = vunpack.c.l.b16 %v1027
          %v1092 = vunpack.c.h.b16 %v1026
          %v1093 = vunpack.c.h.b16 %v1027
          %v1094 = vunpack.c.l.b16 %v1028
          %v1095 = vunpack.c.l.b16 %v1029
          %v1096 = vunpack.c.h.b16 %v1028
          %v1097 = vunpack.c.h.b16 %v1029
          %v1098 = vunpack.c.l.b16 %v1030
          %v1099 = vunpack.c.l.b16 %v1031
          %v1100 = vunpack.c.h.b16 %v1030
          %v1101 = vunpack.c.h.b16 %v1031
          %v1102 = vunpack.c.l.b16 %v1032
          %v1103 = vunpack.c.l.b16 %v1033
          %v1104 = vunpack.c.h.b16 %v1032
          %v1105 = vunpack.c.h.b16 %v1033
          %v1106 = vunpack.c.l.b16 %v1034
          %v1107 = vunpack.c.l.b16 %v1035
          %v1108 = vunpack.c.h.b16 %v1034
          %v1109 = vunpack.c.h.b16 %v1035
          %v1110 = vunpack.c.l.b16 %v1036
          %v1111 = vunpack.c.l.b16 %v1037
          %v1112 = vunpack.c.h.b16 %v1036
          %v1113 = vunpack.c.h.b16 %v1037
          %v1114 = vunpack.c.l.b16 %v1038
          %v1115 = vunpack.c.l.b16 %v1039
          %v1116 = vunpack.c.h.b16 %v1038
          %v1117 = vunpack.c.h.b16 %v1039
          %v1118 = vunpack.c.l.b16 %v1040
          %v1119 = vunpack.c.l.b16 %v1041
          %v1120 = vunpack.c.h.b16 %v1040
          %v1121 = vunpack.c.h.b16 %v1041
          %v1122 = vunpack.c.l.b16 %v1042
          %v1123 = vunpack.c.l.b16 %v1043
          %v1124 = vunpack.c.h.b16 %v1042
          %v1125 = vunpack.c.h.b16 %v1043
          %v1126 = vunpack.c.l.b16 %v1044
          %v1127 = vunpack.c.l.b16 %v1045
          %v1128 = vunpack.c.h.b16 %v1044
          %v1129 = vunpack.c.h.b16 %v1045
          %v1130 = vunpack.c.l.b16 %v1046
          %v1131 = vunpack.c.l.b16 %v1047
          %v1132 = vunpack.c.h.b16 %v1046
          %v1133 = vunpack.c.h.b16 %v1047
          %v1134 = vunpack.c.l.b16 %v1048
          %v1135 = vunpack.c.l.b16 %v1049
          %v1136 = vunpack.c.h.b16 %v1048
          %v1137 = vunpack.c.h.b16 %v1049
          %v1138 = vunpack.c.l.b16 %v1050
          %v1139 = vunpack.c.l.b16 %v1051
          %v1140 = vunpack.c.h.b16 %v1050
          %v1141 = vunpack.c.h.b16 %v1051
          %v1142 = vunpack.c.l.b16 %v1052
          %v1143 = vunpack.c.l.b16 %v1053
          %v1144 = vunpack.c.h.b16 %v1052
          %v1145 = vunpack.c.h.b16 %v1053
          %v1146 = vunpack.c.l.b16 %v1054
          %v1147 = vunpack.c.l.b16 %v1055
          %v1148 = vunpack.c.h.b16 %v1054
          %v1149 = vunpack.c.h.b16 %v1055
          %v1150 = vunpack.c.l.b16 %v1056
          %v1151 = vunpack.c.l.b16 %v1057
          %v1152 = vunpack.c.h.b16 %v1056
          %v1153 = vunpack.c.h.b16 %v1057
          %v1154 = vpack.c.b16 %v1091, %v1090
          %v1155 = vpack.c.b16 %v1093, %v1092
          %v1156 = vpack.c.b16 %v1095, %v1094
          %v1157 = vpack.c.b16 %v1097, %v1096
          %v1158 = vpack.c.b16 %v1099, %v1098
          %v1159 = vpack.c.b16 %v1101, %v1100
          %v1160 = vpack.c.b16 %v1103, %v1102
          %v1161 = vpack.c.b16 %v1105, %v1104
          %v1162 = vpack.c.b16 %v1107, %v1106
          %v1163 = vpack.c.b16 %v1109, %v1108
          %v1164 = vpack.c.b16 %v1111, %v1110
          %v1165 = vpack.c.b16 %v1113, %v1112
          %v1166 = vpack.c.b16 %v1115, %v1114
          %v1167 = vpack.c.b16 %v1117, %v1116
          %v1168 = vpack.c.b16 %v1119, %v1118
          %v1169 = vpack.c.b16 %v1121, %v1120
          %v1170 = vpack.c.b16 %v1123, %v1122
          %v1171 = vpack.c.b16 %v1125, %v1124
          %v1172 = vpack.c.b16 %v1127, %v1126
          %v1173 = vpack.c.b16 %v1129, %v1128
          %v1174 = vpack.c.b16 %v1131, %v1130
          %v1175 = vpack.c.b16 %v1133, %v1132
          %v1176 = vpack.c.b16 %v1135, %v1134
          %v1177 = vpack.c.b16 %v1137, %v1136
          %v1178 = vpack.c.b16 %v1139, %v1138
          %v1179 = vpack.c.b16 %v1141, %v1140
          %v1180 = vpack.c.b16 %v1143, %v1142
          %v1181 = vpack.c.b16 %v1145, %v1144
          %v1182 = vpack.c.b16 %v1147, %v1146
          %v1183 = vpack.c.b16 %v1149, %v1148
          %v1184 = vpack.c.b16 %v1151, %v1150
          %v1185 = vpack.c.b16 %v1153, %v1152
          %1218 = vst [vmem:[%s211] sm:$0xff] %v1154
          %1219 = vst [vmem:[%s211 + $0x8] sm:$0xff] %v1155
          %1220 = vst [vmem:[%s211 + $0x10] sm:$0xff] %v1156
          %1221 = vst [vmem:[%s211 + $0x18] sm:$0xff] %v1157
          %1222 = vst [vmem:[%s211 + $0x20] sm:$0xff] %v1158
          %1223 = vst [vmem:[%s211 + $0x28] sm:$0xff] %v1159
          %1224 = vst [vmem:[%s211 + $0x30] sm:$0xff] %v1160
          %1225 = vst [vmem:[%s211 + $0x38] sm:$0xff] %v1161
          %1226 = vst [vmem:[%s211 + $0x40] sm:$0xff] %v1162
          %1227 = vst [vmem:[%s211 + $0x48] sm:$0xff] %v1163
          %1228 = vst [vmem:[%s211 + $0x50] sm:$0xff] %v1164
          %1229 = vst [vmem:[%s211 + $0x58] sm:$0xff] %v1165
          %1230 = vst [vmem:[%s211 + $0x60] sm:$0xff] %v1166
          %1231 = vst [vmem:[%s211 + $0x68] sm:$0xff] %v1167
          %1232 = vst [vmem:[%s211 + $0x70] sm:$0xff] %v1168
          %1233 = vst [vmem:[%s211 + $0x78] sm:$0xff] %v1169
          %1234 = vst [vmem:[%s211 + $0x80] sm:$0xff] %v1170
          %1235 = vst [vmem:[%s211 + $0x88] sm:$0xff] %v1171
          %1236 = vst [vmem:[%s211 + $0x90] sm:$0xff] %v1172
          %1237 = vst [vmem:[%s211 + $0x98] sm:$0xff] %v1173
          %1238 = vst [vmem:[%s211 + $0xa0] sm:$0xff] %v1174
          %1239 = vst [vmem:[%s211 + $0xa8] sm:$0xff] %v1175
          %1240 = vst [vmem:[%s211 + $0xb0] sm:$0xff] %v1176
          %1241 = vst [vmem:[%s211 + $0xb8] sm:$0xff] %v1177
          %1242 = vst [vmem:[%s211 + $0xc0] sm:$0xff] %v1178
          %1243 = vst [vmem:[%s211 + $0xc8] sm:$0xff] %v1179
          %1244 = vst [vmem:[%s211 + $0xd0] sm:$0xff] %v1180
          %1245 = vst [vmem:[%s211 + $0xd8] sm:$0xff] %v1181
          %1246 = vst [vmem:[%s211 + $0xe0] sm:$0xff] %v1182
          %1247 = vst [vmem:[%s211 + $0xe8] sm:$0xff] %v1183
          %1248 = vst [vmem:[%s211 + $0xf0] sm:$0xff] %v1184
          %1249 = vst [vmem:[%s211 + $0xf8] sm:$0xff] %v1185
        $region44: #{attention_forward.3} parent=27 // pred_fallthru
          _
        %s1250 = sand.u32 %s102, 1
        %s1251 = sand.u32 %s102, 1
        %s1252 = smul.addr %s1251, 256
        %s1253 = scalar_lea.vmem [#allocation7], %s1252
        // Predicated region
        $region45: #{attention_forward.3} parent=27 // pred_check
          %p1254 = pneg %p112
        $region46: #{attention_forward.3} parent=27 // pred_check_branch
          %1256 = sbr.rel (%p1254) target = $region48
        $region47: #{attention_forward.3} parent=27 // pred_region
          %s1257 = smul.u32 32, %s22
          %s1258 = smul.u32 2, %s23
          %s1259 = smul.addr %s1257, 6
          %s1260 = sadd.s32 %s1258, %s1259
          %s1261 = smul.addr %s1260, 4
          %s1262 = scalar_lea.vmem %s2, %s1261
          // Predicated region
          $region49: #{attention_forward.3} parent=47 // pred_check
            _
          $region50: #{attention_forward.3} parent=47 // pred_check_branch
            %1264 = sbr.rel (0) target = $region52
          $region51: #{attention_forward.3} parent=47 // pred_region
            // Predicated region
            $region53: #{attention_forward.3} parent=51 // pred_check
              _
            $region54: #{attention_forward.3} parent=51 // pred_check_branch
              %1266 = sbr.rel (0) target = $region56
            $region55: #{attention_forward.3} parent=51 // pred_region
              // Predicated region
              $region68: #{attention_forward.3} parent=55 // pred_check
                _
              $region69: #{attention_forward.3} parent=55 // pred_check_branch
                %1343 = sbr.rel (0) target = $region71
              $region70: #{attention_forward.3} parent=55 // pred_region
                loop: start=0, step=1, limit=1
                $region72: #{attention_forward.3} parent=70 // loop_pre_header
                  _
                $region73: #{attention_forward.3} parent=70 // loop_header
                  %s1345 = sphi 0, %s1349
                  %p1346 = scmp.ge.s32.totalorder %s1345, 1
                  %s1350 = sphi %s1253, %s1253
                  %s1351 = sphi %s1262, %s1262
                $region74: #{attention_forward.3} parent=70 // loop_header_branch
                  %1348 = sbr.rel (%p1346) target = $region78
                $region75: #{attention_forward.3} parent=70 // loop_body
                  %v1352 = vld [vmem:[%s1350] sm:$0xff]
                  %1353 = vst [vmem:[%s1351] sm:$0xff] %v1352
                  %v1354 = vld [vmem:[%s1350 + $0x8] sm:$0xff]
                  %1355 = vst [vmem:[%s1351 + $0x18] sm:$0xff] %v1354
                  %v1356 = vld [vmem:[%s1350 + $0x10] sm:$0xff]
                  %1357 = vst [vmem:[%s1351 + $0x30] sm:$0xff] %v1356
                  %v1358 = vld [vmem:[%s1350 + $0x18] sm:$0xff]
                  %1359 = vst [vmem:[%s1351 + $0x48] sm:$0xff] %v1358
                  %v1360 = vld [vmem:[%s1350 + $0x20] sm:$0xff]
                  %1361 = vst [vmem:[%s1351 + $0x60] sm:$0xff] %v1360
                  %v1362 = vld [vmem:[%s1350 + $0x28] sm:$0xff]
                  %1363 = vst [vmem:[%s1351 + $0x78] sm:$0xff] %v1362
                  %v1364 = vld [vmem:[%s1350 + $0x30] sm:$0xff]
                  %1365 = vst [vmem:[%s1351 + $0x90] sm:$0xff] %v1364
                  %v1366 = vld [vmem:[%s1350 + $0x38] sm:$0xff]
                  %1367 = vst [vmem:[%s1351 + $0xa8] sm:$0xff] %v1366
                  %v1368 = vld [vmem:[%s1350 + $0x40] sm:$0xff]
                  %1369 = vst [vmem:[%s1351 + $0xc0] sm:$0xff] %v1368
                  %v1370 = vld [vmem:[%s1350 + $0x48] sm:$0xff]
                  %1371 = vst [vmem:[%s1351 + $0xd8] sm:$0xff] %v1370
                  %v1372 = vld [vmem:[%s1350 + $0x50] sm:$0xff]
                  %1373 = vst [vmem:[%s1351 + $0xf0] sm:$0xff] %v1372
                  %v1374 = vld [vmem:[%s1350 + $0x58] sm:$0xff]
                  %1375 = vst [vmem:[%s1351 + $0x108] sm:$0xff] %v1374
                  %v1376 = vld [vmem:[%s1350 + $0x60] sm:$0xff]
                  %1377 = vst [vmem:[%s1351 + $0x120] sm:$0xff] %v1376
                  %v1378 = vld [vmem:[%s1350 + $0x68] sm:$0xff]
                  %1379 = vst [vmem:[%s1351 + $0x138] sm:$0xff] %v1378
                  %v1380 = vld [vmem:[%s1350 + $0x70] sm:$0xff]
                  %1381 = vst [vmem:[%s1351 + $0x150] sm:$0xff] %v1380
                  %v1382 = vld [vmem:[%s1350 + $0x78] sm:$0xff]
                  %1383 = vst [vmem:[%s1351 + $0x168] sm:$0xff] %v1382
                  %v1384 = vld [vmem:[%s1350 + $0x80] sm:$0xff]
                  %1385 = vst [vmem:[%s1351 + $0x180] sm:$0xff] %v1384
                  %v1386 = vld [vmem:[%s1350 + $0x88] sm:$0xff]
                  %1387 = vst [vmem:[%s1351 + $0x198] sm:$0xff] %v1386
                  %v1388 = vld [vmem:[%s1350 + $0x90] sm:$0xff]
                  %1389 = vst [vmem:[%s1351 + $0x1b0] sm:$0xff] %v1388
                  %v1390 = vld [vmem:[%s1350 + $0x98] sm:$0xff]
                  %1391 = vst [vmem:[%s1351 + $0x1c8] sm:$0xff] %v1390
                  %v1392 = vld [vmem:[%s1350 + $0xa0] sm:$0xff]
                  %1393 = vst [vmem:[%s1351 + $0x1e0] sm:$0xff] %v1392
                  %v1394 = vld [vmem:[%s1350 + $0xa8] sm:$0xff]
                  %1395 = vst [vmem:[%s1351 + $0x1f8] sm:$0xff] %v1394
                  %v1396 = vld [vmem:[%s1350 + $0xb0] sm:$0xff]
                  %1397 = vst [vmem:[%s1351 + $0x210] sm:$0xff] %v1396
                  %v1398 = vld [vmem:[%s1350 + $0xb8] sm:$0xff]
                  %1399 = vst [vmem:[%s1351 + $0x228] sm:$0xff] %v1398
                  %v1400 = vld [vmem:[%s1350 + $0xc0] sm:$0xff]
                  %1401 = vst [vmem:[%s1351 + $0x240] sm:$0xff] %v1400
                  %v1402 = vld [vmem:[%s1350 + $0xc8] sm:$0xff]
                  %1403 = vst [vmem:[%s1351 + $0x258] sm:$0xff] %v1402
                  %v1404 = vld [vmem:[%s1350 + $0xd0] sm:$0xff]
                  %1405 = vst [vmem:[%s1351 + $0x270] sm:$0xff] %v1404
                  %v1406 = vld [vmem:[%s1350 + $0xd8] sm:$0xff]
                  %1407 = vst [vmem:[%s1351 + $0x288] sm:$0xff] %v1406
                  %v1408 = vld [vmem:[%s1350 + $0xe0] sm:$0xff]
                  %1409 = vst [vmem:[%s1351 + $0x2a0] sm:$0xff] %v1408
                  %v1410 = vld [vmem:[%s1350 + $0xe8] sm:$0xff]
                  %1411 = vst [vmem:[%s1351 + $0x2b8] sm:$0xff] %v1410
                  %v1412 = vld [vmem:[%s1350 + $0xf0] sm:$0xff]
                  %1413 = vst [vmem:[%s1351 + $0x2d0] sm:$0xff] %v1412
                  %v1414 = vld [vmem:[%s1350 + $0xf8] sm:$0xff]
                  %1415 = vst [vmem:[%s1351 + $0x2e8] sm:$0xff] %v1414
                $region76: #{attention_forward.3} parent=70 // loop_footer
                  %s1349 = sadd.s32 1, %s1345
                $region77: #{attention_forward.3} parent=70 // loop_footer_branch
                  %1344 = sbr.rel target = $region73
                $region78: #{attention_forward.3} parent=70 // loop_exit
                  _
              $region71: #{attention_forward.3} parent=55 // pred_fallthru
                _
              // Predicated region
              $region79: #{attention_forward.3} parent=55 // pred_check
                _
              $region80: #{attention_forward.3} parent=55 // pred_check_branch
                %1417 = sbr.rel target = $region82
              $region81: #{attention_forward.3} parent=55 // pred_region
                _
              $region82: #{attention_forward.3} parent=55 // pred_fallthru
                _
            $region56: #{attention_forward.3} parent=51 // pred_fallthru
              _
            // Predicated region
            $region57: #{attention_forward.3} parent=51 // pred_check
              _
            $region58: #{attention_forward.3} parent=51 // pred_check_branch
              %1268 = sbr.rel target = $region60
            $region59: #{attention_forward.3} parent=51 // pred_region
              loop: start=0, step=1, limit=1
              $region61: #{attention_forward.3} parent=59 // loop_pre_header
                _
              $region62: #{attention_forward.3} parent=59 // loop_header
                %s1271 = sphi 0, %s1275
                %p1272 = scmp.ge.s32.totalorder %s1271, 1
                %s1276 = sphi %s1253, %s1253
                %s1277 = sphi %s1262, %s1262
              $region63: #{attention_forward.3} parent=59 // loop_header_branch
                %1274 = sbr.rel (%p1272) target = $region67
              $region64: #{attention_forward.3} parent=59 // loop_body
                %v1278 = vld [vmem:[%s1276] sm:$0xff]
                %1279 = vst [vmem:[%s1277] sm:$0xff] %v1278
                %v1280 = vld [vmem:[%s1276 + $0x8] sm:$0xff]
                %1281 = vst [vmem:[%s1277 + $0x18] sm:$0xff] %v1280
                %v1282 = vld [vmem:[%s1276 + $0x10] sm:$0xff]
                %1283 = vst [vmem:[%s1277 + $0x30] sm:$0xff] %v1282
                %v1284 = vld [vmem:[%s1276 + $0x18] sm:$0xff]
                %1285 = vst [vmem:[%s1277 + $0x48] sm:$0xff] %v1284
                %v1286 = vld [vmem:[%s1276 + $0x20] sm:$0xff]
                %1287 = vst [vmem:[%s1277 + $0x60] sm:$0xff] %v1286
                %v1288 = vld [vmem:[%s1276 + $0x28] sm:$0xff]
                %1289 = vst [vmem:[%s1277 + $0x78] sm:$0xff] %v1288
                %v1290 = vld [vmem:[%s1276 + $0x30] sm:$0xff]
                %1291 = vst [vmem:[%s1277 + $0x90] sm:$0xff] %v1290
                %v1292 = vld [vmem:[%s1276 + $0x38] sm:$0xff]
                %1293 = vst [vmem:[%s1277 + $0xa8] sm:$0xff] %v1292
                %v1294 = vld [vmem:[%s1276 + $0x40] sm:$0xff]
                %1295 = vst [vmem:[%s1277 + $0xc0] sm:$0xff] %v1294
                %v1296 = vld [vmem:[%s1276 + $0x48] sm:$0xff]
                %1297 = vst [vmem:[%s1277 + $0xd8] sm:$0xff] %v1296
                %v1298 = vld [vmem:[%s1276 + $0x50] sm:$0xff]
                %1299 = vst [vmem:[%s1277 + $0xf0] sm:$0xff] %v1298
                %v1300 = vld [vmem:[%s1276 + $0x58] sm:$0xff]
                %1301 = vst [vmem:[%s1277 + $0x108] sm:$0xff] %v1300
                %v1302 = vld [vmem:[%s1276 + $0x60] sm:$0xff]
                %1303 = vst [vmem:[%s1277 + $0x120] sm:$0xff] %v1302
                %v1304 = vld [vmem:[%s1276 + $0x68] sm:$0xff]
                %1305 = vst [vmem:[%s1277 + $0x138] sm:$0xff] %v1304
                %v1306 = vld [vmem:[%s1276 + $0x70] sm:$0xff]
                %1307 = vst [vmem:[%s1277 + $0x150] sm:$0xff] %v1306
                %v1308 = vld [vmem:[%s1276 + $0x78] sm:$0xff]
                %1309 = vst [vmem:[%s1277 + $0x168] sm:$0xff] %v1308
                %v1310 = vld [vmem:[%s1276 + $0x80] sm:$0xff]
                %1311 = vst [vmem:[%s1277 + $0x180] sm:$0xff] %v1310
                %v1312 = vld [vmem:[%s1276 + $0x88] sm:$0xff]
                %1313 = vst [vmem:[%s1277 + $0x198] sm:$0xff] %v1312
                %v1314 = vld [vmem:[%s1276 + $0x90] sm:$0xff]
                %1315 = vst [vmem:[%s1277 + $0x1b0] sm:$0xff] %v1314
                %v1316 = vld [vmem:[%s1276 + $0x98] sm:$0xff]
                %1317 = vst [vmem:[%s1277 + $0x1c8] sm:$0xff] %v1316
                %v1318 = vld [vmem:[%s1276 + $0xa0] sm:$0xff]
                %1319 = vst [vmem:[%s1277 + $0x1e0] sm:$0xff] %v1318
                %v1320 = vld [vmem:[%s1276 + $0xa8] sm:$0xff]
                %1321 = vst [vmem:[%s1277 + $0x1f8] sm:$0xff] %v1320
                %v1322 = vld [vmem:[%s1276 + $0xb0] sm:$0xff]
                %1323 = vst [vmem:[%s1277 + $0x210] sm:$0xff] %v1322
                %v1324 = vld [vmem:[%s1276 + $0xb8] sm:$0xff]
                %1325 = vst [vmem:[%s1277 + $0x228] sm:$0xff] %v1324
                %v1326 = vld [vmem:[%s1276 + $0xc0] sm:$0xff]
                %1327 = vst [vmem:[%s1277 + $0x240] sm:$0xff] %v1326
                %v1328 = vld [vmem:[%s1276 + $0xc8] sm:$0xff]
                %1329 = vst [vmem:[%s1277 + $0x258] sm:$0xff] %v1328
                %v1330 = vld [vmem:[%s1276 + $0xd0] sm:$0xff]
                %1331 = vst [vmem:[%s1277 + $0x270] sm:$0xff] %v1330
                %v1332 = vld [vmem:[%s1276 + $0xd8] sm:$0xff]
                %1333 = vst [vmem:[%s1277 + $0x288] sm:$0xff] %v1332
                %v1334 = vld [vmem:[%s1276 + $0xe0] sm:$0xff]
                %1335 = vst [vmem:[%s1277 + $0x2a0] sm:$0xff] %v1334
                %v1336 = vld [vmem:[%s1276 + $0xe8] sm:$0xff]
                %1337 = vst [vmem:[%s1277 + $0x2b8] sm:$0xff] %v1336
                %v1338 = vld [vmem:[%s1276 + $0xf0] sm:$0xff]
                %1339 = vst [vmem:[%s1277 + $0x2d0] sm:$0xff] %v1338
                %v1340 = vld [vmem:[%s1276 + $0xf8] sm:$0xff]
                %1341 = vst [vmem:[%s1277 + $0x2e8] sm:$0xff] %v1340
              $region65: #{attention_forward.3} parent=59 // loop_footer
                %s1275 = sadd.s32 1, %s1271
              $region66: #{attention_forward.3} parent=59 // loop_footer_branch
                %1270 = sbr.rel target = $region62
              $region67: #{attention_forward.3} parent=59 // loop_exit
                _
            $region60: #{attention_forward.3} parent=51 // pred_fallthru
              _
          $region52: #{attention_forward.3} parent=47 // pred_fallthru
            _
          %1418 = vnop
        $region48: #{attention_forward.3} parent=27 // pred_fallthru
          _
      $region28: #{attention_forward.3} parent=5 // pred_fallthru
        _
      %p1419 = scmp.le.s32.totalorder 2, %s12
      // Predicated region
      $region83: #{attention_forward.3} parent=5 // pred_check
        %p1420 = pneg %p1419
      $region84: #{attention_forward.3} parent=5 // pred_check_branch
        %1422 = sbr.rel (%p1420) target = $region86
      $region85: #{attention_forward.3} parent=5 // pred_region
        %s1423 = ssub.s32 %s12, 2
        // Predicated region
        $region87: #{attention_forward.3} parent=85 // pred_check
          %p1424 = pneg %p118
        $region88: #{attention_forward.3} parent=85 // pred_check_branch
          %1426 = sbr.rel (%p1424) target = $region90
        $region89: #{attention_forward.3} parent=85 // pred_region
          %s1427 = sand.u32 %s103, 1
          %s1428 = sand.u32 %s103, 1
          %s1429 = smul.addr %s1428, 256
          %s1430 = scalar_lea.vmem [#allocation7], %s1429
        $region90: #{attention_forward.3} parent=85 // pred_fallthru
          _
      $region86: #{attention_forward.3} parent=5 // pred_fallthru
        _
    $region6: #{attention_forward.3} parent=1 // loop_footer
      %s16 = sadd.s32 1, %s12
    $region7: #{attention_forward.3} parent=1 // loop_footer_branch
      %11 = sbr.rel target = $region3
    $region8: #{attention_forward.3} parent=1 // loop_exit
      _
    %1431 = vsyncpa [#allocation4], 1
    %s1432 = scalar_lea.sflag [#allocation4], 1
    %1433 = vsyncpa %s1432, 1
    %1434 = vsyncpa [#allocation6], 1
    %s1435 = scalar_lea.sflag [#allocation6], 1
    %1436 = vsyncpa %s1435, 1

// kernel: attention_forward.5
$region0: #{attention_forward.5}
  #allocation0 [shape = 'u32[]', space=smem, size = 0x4, offset = 0x4, fixed_abs, tag = 'smem constant byte address 0x4 - core index']
  #allocation1 [shape = 'u32[144,128]{1,0:T(1,128)}', space=vmem, size = 0x12000, scoped, tag = 'internal scratch']
  #allocation2 [shape = 'f32[256,256]{1,0:T(8,128)}', space=vmem, size = 0x40000, scoped, tag = 'scratch operand']
  %s0 = inlined_call_operand.vmem [shape: bf16[256,256], index: 0, kind: input, shape index: {}]
  %s1 = inlined_call_operand.vmem [shape: bf16[256,256], index: 1, kind: input, shape index: {}]
  %s2 = inlined_call_operand.vmem [shape: f32[1,256], index: 2, kind: input, shape index: {}]
  %s3 = inlined_call_operand.hbm [shape: f32[256,256], index: 3, kind: output, shape index: {}]
  %s4 = sld [smem:[#allocation0]]
  $region30: #{attention_forward.5} parent=0
    _
  %s6 = ssub.s32 1, %s4
  %s7 = scalar_select 0, %s6, %s4
  $region1: #{attention_forward.5} parent=0
    #allocation3 [shape = 'u8[262144]{0}', space=vmem, size = 0x40000, scoped, tag = 'output window, operand 0, single buffered']
    #allocation4 [shape = 's32[1]{0}', space=sflag, size = 0x4, scoped, tag = 'scoped memory for attention_forward.5']
    %8 = vsyncpa [#allocation4], 0
    // Predicated region
    $region2: #{attention_forward.5} parent=1 // pred_check
      _
    $region3: #{attention_forward.5} parent=1 // pred_check_branch
      %10 = sbr.rel (0) target = $region5
    $region4: #{attention_forward.5} parent=1 // pred_region
      _
    $region5: #{attention_forward.5} parent=1 // pred_fallthru
      _
    // Predicated region
    $region6: #{attention_forward.5} parent=1 // pred_check
      _
    $region7: #{attention_forward.5} parent=1 // pred_check_branch
      %12 = sbr.rel (0) target = $region9
    $region8: #{attention_forward.5} parent=1 // pred_region
      _
    $region9: #{attention_forward.5} parent=1 // pred_fallthru
      _
    // Predicated region
    $region10: #{attention_forward.5} parent=1 // pred_check
      _
    $region11: #{attention_forward.5} parent=1 // pred_check_branch
      %14 = sbr.rel (0) target = $region13
    $region12: #{attention_forward.5} parent=1 // pred_region
      _
    $region13: #{attention_forward.5} parent=1 // pred_fallthru
      _
    %p15 = scmp.eq.s32.totalorder 0, 0
    // Predicated region
    $region14: #{attention_forward.5} parent=1 // pred_check
      %p16 = pneg %p15
    $region15: #{attention_forward.5} parent=1 // pred_check_branch
      %18 = sbr.rel (%p16) target = $region17
    $region16: #{attention_forward.5} parent=1 // pred_region
      %19 = vst [vmem:[#allocation2] sm:$0xff] 0.0
      %20 = vst [vmem:[#allocation2 + $0x8] sm:$0xff] 0.0
      %21 = vst [vmem:[#allocation2 + $0x10] sm:$0xff] 0.0
      %22 = vst [vmem:[#allocation2 + $0x18] sm:$0xff] 0.0
      %23 = vst [vmem:[#allocation2 + $0x20] sm:$0xff] 0.0
      %24 = vst [vmem:[#allocation2 + $0x28] sm:$0xff] 0.0
      %25 = vst [vmem:[#allocation2 + $0x30] sm:$0xff] 0.0
      %26 = vst [vmem:[#allocation2 + $0x38] sm:$0xff] 0.0
      %27 = vst [vmem:[#allocation2 + $0x40] sm:$0xff] 0.0
      %28 = vst [vmem:[#allocation2 + $0x48] sm:$0xff] 0.0
      %29 = vst [vmem:[#allocation2 + $0x50] sm:$0xff] 0.0
      %30 = vst [vmem:[#allocation2 + $0x58] sm:$0xff] 0.0
      %31 = vst [vmem:[#allocation2 + $0x60] sm:$0xff] 0.0
      %32 = vst [vmem:[#allocation2 + $0x68] sm:$0xff] 0.0
      %33 = vst [vmem:[#allocation2 + $0x70] sm:$0xff] 0.0
      %34 = vst [vmem:[#allocation2 + $0x78] sm:$0xff] 0.0
      %35 = vst [vmem:[#allocation2 + $0x80] sm:$0xff] 0.0
      %36 = vst [vmem:[#allocation2 + $0x88] sm:$0xff] 0.0
      %37 = vst [vmem:[#allocation2 + $0x90] sm:$0xff] 0.0
      %38 = vst [vmem:[#allocation2 + $0x98] sm:$0xff] 0.0
      %39 = vst [vmem:[#allocation2 + $0xa0] sm:$0xff] 0.0
      %40 = vst [vmem:[#allocation2 + $0xa8] sm:$0xff] 0.0
      %41 = vst [vmem:[#allocation2 + $0xb0] sm:$0xff] 0.0
      %42 = vst [vmem:[#allocation2 + $0xb8] sm:$0xff] 0.0
      %43 = vst [vmem:[#allocation2 + $0xc0] sm:$0xff] 0.0
      %44 = vst [vmem:[#allocation2 + $0xc8] sm:$0xff] 0.0
      %45 = vst [vmem:[#allocation2 + $0xd0] sm:$0xff] 0.0
      %46 = vst [vmem:[#allocation2 + $0xd8] sm:$0xff] 0.0
      %47 = vst [vmem:[#allocation2 + $0xe0] sm:$0xff] 0.0
      %48 = vst [vmem:[#allocation2 + $0xe8] sm:$0xff] 0.0
      %49 = vst [vmem:[#allocation2 + $0xf0] sm:$0xff] 0.0
      %50 = vst [vmem:[#allocation2 + $0xf8] sm:$0xff] 0.0
      %51 = vst [vmem:[#allocation2 + $0x100] sm:$0xff] 0.0
      %52 = vst [vmem:[#allocation2 + $0x108] sm:$0xff] 0.0
      %53 = vst [vmem:[#allocation2 + $0x110] sm:$0xff] 0.0
      %54 = vst [vmem:[#allocation2 + $0x118] sm:$0xff] 0.0
      %55 = vst [vmem:[#allocation2 + $0x120] sm:$0xff] 0.0
      %56 = vst [vmem:[#allocation2 + $0x128] sm:$0xff] 0.0
      %57 = vst [vmem:[#allocation2 + $0x130] sm:$0xff] 0.0
      %58 = vst [vmem:[#allocation2 + $0x138] sm:$0xff] 0.0
      %59 = vst [vmem:[#allocation2 + $0x140] sm:$0xff] 0.0
      %60 = vst [vmem:[#allocation2 + $0x148] sm:$0xff] 0.0
      %61 = vst [vmem:[#allocation2 + $0x150] sm:$0xff] 0.0
      %62 = vst [vmem:[#allocation2 + $0x158] sm:$0xff] 0.0
      %63 = vst [vmem:[#allocation2 + $0x160] sm:$0xff] 0.0
      %64 = vst [vmem:[#allocation2 + $0x168] sm:$0xff] 0.0
      %65 = vst [vmem:[#allocation2 + $0x170] sm:$0xff] 0.0
      %66 = vst [vmem:[#allocation2 + $0x178] sm:$0xff] 0.0
      %67 = vst [vmem:[#allocation2 + $0x180] sm:$0xff] 0.0
      %68 = vst [vmem:[#allocation2 + $0x188] sm:$0xff] 0.0
      %69 = vst [vmem:[#allocation2 + $0x190] sm:$0xff] 0.0
      %70 = vst [vmem:[#allocation2 + $0x198] sm:$0xff] 0.0
      %71 = vst [vmem:[#allocation2 + $0x1a0] sm:$0xff] 0.0
      %72 = vst [vmem:[#allocation2 + $0x1a8] sm:$0xff] 0.0
      %73 = vst [vmem:[#allocation2 + $0x1b0] sm:$0xff] 0.0
      %74 = vst [vmem:[#allocation2 + $0x1b8] sm:$0xff] 0.0
      %75 = vst [vmem:[#allocation2 + $0x1c0] sm:$0xff] 0.0
      %76 = vst [vmem:[#allocation2 + $0x1c8] sm:$0xff] 0.0
      %77 = vst [vmem:[#allocation2 + $0x1d0] sm:$0xff] 0.0
      %78 = vst [vmem:[#allocation2 + $0x1d8] sm:$0xff] 0.0
      %79 = vst [vmem:[#allocation2 + $0x1e0] sm:$0xff] 0.0
      %80 = vst [vmem:[#allocation2 + $0x1e8] sm:$0xff] 0.0
      %81 = vst [vmem:[#allocation2 + $0x1f0] sm:$0xff] 0.0
      %82 = vst [vmem:[#allocation2 + $0x1f8] sm:$0xff] 0.0
    $region17: #{attention_forward.5} parent=1 // pred_fallthru
      _
    %v83 = vld [vmem:[#allocation2] sm:$0xff]
    %v84 = vld [vmem:[#allocation2 + $0x8] sm:$0xff]
    %v85 = vld [vmem:[#allocation2 + $0x10] sm:$0xff]
    %v86 = vld [vmem:[#allocation2 + $0x18] sm:$0xff]
    %v87 = vld [vmem:[#allocation2 + $0x20] sm:$0xff]
    %v88 = vld [vmem:[#allocation2 + $0x28] sm:$0xff]
    %v89 = vld [vmem:[#allocation2 + $0x30] sm:$0xff]
    %v90 = vld [vmem:[#allocation2 + $0x38] sm:$0xff]
    %v91 = vld [vmem:[#allocation2 + $0x40] sm:$0xff]
    %v92 = vld [vmem:[#allocation2 + $0x48] sm:$0xff]
    %v93 = vld [vmem:[#allocation2 + $0x50] sm:$0xff]
    %v94 = vld [vmem:[#allocation2 + $0x58] sm:$0xff]
    %v95 = vld [vmem:[#allocation2 + $0x60] sm:$0xff]
    %v96 = vld [vmem:[#allocation2 + $0x68] sm:$0xff]
    %v97 = vld [vmem:[#allocation2 + $0x70] sm:$0xff]
    %v98 = vld [vmem:[#allocation2 + $0x78] sm:$0xff]
    %v99 = vld [vmem:[#allocation2 + $0x80] sm:$0xff]
    %v100 = vld [vmem:[#allocation2 + $0x88] sm:$0xff]
    %v101 = vld [vmem:[#allocation2 + $0x90] sm:$0xff]
    %v102 = vld [vmem:[#allocation2 + $0x98] sm:$0xff]
    %v103 = vld [vmem:[#allocation2 + $0xa0] sm:$0xff]
    %v104 = vld [vmem:[#allocation2 + $0xa8] sm:$0xff]
    %v105 = vld [vmem:[#allocation2 + $0xb0] sm:$0xff]
    %v106 = vld [vmem:[#allocation2 + $0xb8] sm:$0xff]
    %v107 = vld [vmem:[#allocation2 + $0xc0] sm:$0xff]
    %v108 = vld [vmem:[#allocation2 + $0xc8] sm:$0xff]
    %v109 = vld [vmem:[#allocation2 + $0xd0] sm:$0xff]
    %v110 = vld [vmem:[#allocation2 + $0xd8] sm:$0xff]
    %v111 = vld [vmem:[#allocation2 + $0xe0] sm:$0xff]
    %v112 = vld [vmem:[#allocation2 + $0xe8] sm:$0xff]
    %v113 = vld [vmem:[#allocation2 + $0xf0] sm:$0xff]
    %v114 = vld [vmem:[#allocation2 + $0xf8] sm:$0xff]
    %v115 = vld [vmem:[#allocation2 + $0x100] sm:$0xff]
    %v116 = vld [vmem:[#allocation2 + $0x108] sm:$0xff]
    %v117 = vld [vmem:[#allocation2 + $0x110] sm:$0xff]
    %v118 = vld [vmem:[#allocation2 + $0x118] sm:$0xff]
    %v119 = vld [vmem:[#allocation2 + $0x120] sm:$0xff]
    %v120 = vld [vmem:[#allocation2 + $0x128] sm:$0xff]
    %v121 = vld [vmem:[#allocation2 + $0x130] sm:$0xff]
    %v122 = vld [vmem:[#allocation2 + $0x138] sm:$0xff]
    %v123 = vld [vmem:[#allocation2 + $0x140] sm:$0xff]
    %v124 = vld [vmem:[#allocation2 + $0x148] sm:$0xff]
    %v125 = vld [vmem:[#allocation2 + $0x150] sm:$0xff]
    %v126 = vld [vmem:[#allocation2 + $0x158] sm:$0xff]
    %v127 = vld [vmem:[#allocation2 + $0x160] sm:$0xff]
    %v128 = vld [vmem:[#allocation2 + $0x168] sm:$0xff]
    %v129 = vld [vmem:[#allocation2 + $0x170] sm:$0xff]
    %v130 = vld [vmem:[#allocation2 + $0x178] sm:$0xff]
    %v131 = vld [vmem:[#allocation2 + $0x180] sm:$0xff]
    %v132 = vld [vmem:[#allocation2 + $0x188] sm:$0xff]
    %v133 = vld [vmem:[#allocation2 + $0x190] sm:$0xff]
    %v134 = vld [vmem:[#allocation2 + $0x198] sm:$0xff]
    %v135 = vld [vmem:[#allocation2 + $0x1a0] sm:$0xff]
    %v136 = vld [vmem:[#allocation2 + $0x1a8] sm:$0xff]
    %v137 = vld [vmem:[#allocation2 + $0x1b0] sm:$0xff]
    %v138 = vld [vmem:[#allocation2 + $0x1b8] sm:$0xff]
    %v139 = vld [vmem:[#allocation2 + $0x1c0] sm:$0xff]
    %v140 = vld [vmem:[#allocation2 + $0x1c8] sm:$0xff]
    %v141 = vld [vmem:[#allocation2 + $0x1d0] sm:$0xff]
    %v142 = vld [vmem:[#allocation2 + $0x1d8] sm:$0xff]
    %v143 = vld [vmem:[#allocation2 + $0x1e0] sm:$0xff]
    %v144 = vld [vmem:[#allocation2 + $0x1e8] sm:$0xff]
    %v145 = vld [vmem:[#allocation2 + $0x1f0] sm:$0xff]
    %v146 = vld [vmem:[#allocation2 + $0x1f8] sm:$0xff]
    %v147 = vld [vmem:[%s0] sm:$0xff]
    %v148 = vld [vmem:[%s0 + $0x8] sm:$0xff]
    %v149 = vld [vmem:[%s0 + $0x10] sm:$0xff]
    %v150 = vld [vmem:[%s0 + $0x18] sm:$0xff]
    %v151 = vld [vmem:[%s0 + $0x20] sm:$0xff]
    %v152 = vld [vmem:[%s0 + $0x28] sm:$0xff]
    %v153 = vld [vmem:[%s0 + $0x30] sm:$0xff]
    %v154 = vld [vmem:[%s0 + $0x38] sm:$0xff]
    %v155 = vld [vmem:[%s0 + $0x40] sm:$0xff]
    %v156 = vld [vmem:[%s0 + $0x48] sm:$0xff]
    %v157 = vld [vmem:[%s0 + $0x50] sm:$0xff]
    %v158 = vld [vmem:[%s0 + $0x58] sm:$0xff]
    %v159 = vld [vmem:[%s0 + $0x60] sm:$0xff]
    %v160 = vld [vmem:[%s0 + $0x68] sm:$0xff]
    %v161 = vld [vmem:[%s0 + $0x70] sm:$0xff]
    %v162 = vld [vmem:[%s0 + $0x78] sm:$0xff]
    %v163 = vld [vmem:[%s0 + $0x80] sm:$0xff]
    %v164 = vld [vmem:[%s0 + $0x88] sm:$0xff]
    %v165 = vld [vmem:[%s0 + $0x90] sm:$0xff]
    %v166 = vld [vmem:[%s0 + $0x98] sm:$0xff]
    %v167 = vld [vmem:[%s0 + $0xa0] sm:$0xff]
    %v168 = vld [vmem:[%s0 + $0xa8] sm:$0xff]
    %v169 = vld [vmem:[%s0 + $0xb0] sm:$0xff]
    %v170 = vld [vmem:[%s0 + $0xb8] sm:$0xff]
    %v171 = vld [vmem:[%s0 + $0xc0] sm:$0xff]
    %v172 = vld [vmem:[%s0 + $0xc8] sm:$0xff]
    %v173 = vld [vmem:[%s0 + $0xd0] sm:$0xff]
    %v174 = vld [vmem:[%s0 + $0xd8] sm:$0xff]
    %v175 = vld [vmem:[%s0 + $0xe0] sm:$0xff]
    %v176 = vld [vmem:[%s0 + $0xe8] sm:$0xff]
    %v177 = vld [vmem:[%s0 + $0xf0] sm:$0xff]
    %v178 = vld [vmem:[%s0 + $0xf8] sm:$0xff]
    %v179 = vld [vmem:[%s1] sm:$0xff]
    %v180 = vld [vmem:[%s1 + $0x8] sm:$0xff]
    %v181 = vld [vmem:[%s1 + $0x10] sm:$0xff]
    %v182 = vld [vmem:[%s1 + $0x18] sm:$0xff]
    %v183 = vld [vmem:[%s1 + $0x20] sm:$0xff]
    %v184 = vld [vmem:[%s1 + $0x28] sm:$0xff]
    %v185 = vld [vmem:[%s1 + $0x30] sm:$0xff]
    %v186 = vld [vmem:[%s1 + $0x38] sm:$0xff]
    %v187 = vld [vmem:[%s1 + $0x40] sm:$0xff]
    %v188 = vld [vmem:[%s1 + $0x48] sm:$0xff]
    %v189 = vld [vmem:[%s1 + $0x50] sm:$0xff]
    %v190 = vld [vmem:[%s1 + $0x58] sm:$0xff]
    %v191 = vld [vmem:[%s1 + $0x60] sm:$0xff]
    %v192 = vld [vmem:[%s1 + $0x68] sm:$0xff]
    %v193 = vld [vmem:[%s1 + $0x70] sm:$0xff]
    %v194 = vld [vmem:[%s1 + $0x78] sm:$0xff]
    %v195 = vld [vmem:[%s1 + $0x80] sm:$0xff]
    %v196 = vld [vmem:[%s1 + $0x88] sm:$0xff]
    %v197 = vld [vmem:[%s1 + $0x90] sm:$0xff]
    %v198 = vld [vmem:[%s1 + $0x98] sm:$0xff]
    %v199 = vld [vmem:[%s1 + $0xa0] sm:$0xff]
    %v200 = vld [vmem:[%s1 + $0xa8] sm:$0xff]
    %v201 = vld [vmem:[%s1 + $0xb0] sm:$0xff]
    %v202 = vld [vmem:[%s1 + $0xb8] sm:$0xff]
    %v203 = vld [vmem:[%s1 + $0xc0] sm:$0xff]
    %v204 = vld [vmem:[%s1 + $0xc8] sm:$0xff]
    %v205 = vld [vmem:[%s1 + $0xd0] sm:$0xff]
    %v206 = vld [vmem:[%s1 + $0xd8] sm:$0xff]
    %v207 = vld [vmem:[%s1 + $0xe0] sm:$0xff]
    %v208 = vld [vmem:[%s1 + $0xe8] sm:$0xff]
    %v209 = vld [vmem:[%s1 + $0xf0] sm:$0xff]
    %v210 = vld [vmem:[%s1 + $0xf8] sm:$0xff]
    %v243 = vunpack.c.l.b16 %v147
    %v244 = vunpack.c.h.b16 %v147
    %v245 = vunpack.c.l.b16 %v148
    %v246 = vunpack.c.h.b16 %v148
    %v247 = vunpack.c.l.b16 %v149
    %v248 = vunpack.c.h.b16 %v149
    %v249 = vunpack.c.l.b16 %v150
    %v250 = vunpack.c.h.b16 %v150
    %v251 = vunpack.c.l.b16 %v151
    %v252 = vunpack.c.h.b16 %v151
    %v253 = vunpack.c.l.b16 %v152
    %v254 = vunpack.c.h.b16 %v152
    %v255 = vunpack.c.l.b16 %v153
    %v256 = vunpack.c.h.b16 %v153
    %v257 = vunpack.c.l.b16 %v154
    %v258 = vunpack.c.h.b16 %v154
    %v259 = vunpack.c.l.b16 %v155
    %v260 = vunpack.c.h.b16 %v155
    %v261 = vunpack.c.l.b16 %v156
    %v262 = vunpack.c.h.b16 %v156
    %v263 = vunpack.c.l.b16 %v157
    %v264 = vunpack.c.h.b16 %v157
    %v265 = vunpack.c.l.b16 %v158
    %v266 = vunpack.c.h.b16 %v158
    %v267 = vunpack.c.l.b16 %v159
    %v268 = vunpack.c.h.b16 %v159
    %v269 = vunpack.c.l.b16 %v160
    %v270 = vunpack.c.h.b16 %v160
    %v271 = vunpack.c.l.b16 %v161
    %v272 = vunpack.c.h.b16 %v161
    %v273 = vunpack.c.l.b16 %v162
    %v274 = vunpack.c.h.b16 %v162
    %v275 = vunpack.c.l.b16 %v163
    %v276 = vunpack.c.h.b16 %v163
    %v277 = vunpack.c.l.b16 %v164
    %v278 = vunpack.c.h.b16 %v164
    %v279 = vunpack.c.l.b16 %v165
    %v280 = vunpack.c.h.b16 %v165
    %v281 = vunpack.c.l.b16 %v166
    %v282 = vunpack.c.h.b16 %v166
    %v283 = vunpack.c.l.b16 %v167
    %v284 = vunpack.c.h.b16 %v167
    %v285 = vunpack.c.l.b16 %v168
    %v286 = vunpack.c.h.b16 %v168
    %v287 = vunpack.c.l.b16 %v169
    %v288 = vunpack.c.h.b16 %v169
    %v289 = vunpack.c.l.b16 %v170
    %v290 = vunpack.c.h.b16 %v170
    %v291 = vunpack.c.l.b16 %v171
    %v292 = vunpack.c.h.b16 %v171
    %v293 = vunpack.c.l.b16 %v172
    %v294 = vunpack.c.h.b16 %v172
    %v295 = vunpack.c.l.b16 %v173
    %v296 = vunpack.c.h.b16 %v173
    %v297 = vunpack.c.l.b16 %v174
    %v298 = vunpack.c.h.b16 %v174
    %v299 = vunpack.c.l.b16 %v175
    %v300 = vunpack.c.h.b16 %v175
    %v301 = vunpack.c.l.b16 %v176
    %v302 = vunpack.c.h.b16 %v176
    %v303 = vunpack.c.l.b16 %v177
    %v304 = vunpack.c.h.b16 %v177
    %v305 = vunpack.c.l.b16 %v178
    %v306 = vunpack.c.h.b16 %v178
    %v307 = vpack.c.b16 %v245, %v243
    %v308 = vpack.c.b16 %v246, %v244
    %v309 = vpack.c.b16 %v249, %v247
    %v310 = vpack.c.b16 %v250, %v248
    %v311 = vpack.c.b16 %v253, %v251
    %v312 = vpack.c.b16 %v254, %v252
    %v313 = vpack.c.b16 %v257, %v255
    %v314 = vpack.c.b16 %v258, %v256
    %v315 = vpack.c.b16 %v261, %v259
    %v316 = vpack.c.b16 %v262, %v260
    %v317 = vpack.c.b16 %v265, %v263
    %v318 = vpack.c.b16 %v266, %v264
    %v319 = vpack.c.b16 %v269, %v267
    %v320 = vpack.c.b16 %v270, %v268
    %v321 = vpack.c.b16 %v273, %v271
    %v322 = vpack.c.b16 %v274, %v272
    %v323 = vpack.c.b16 %v277, %v275
    %v324 = vpack.c.b16 %v278, %v276
    %v325 = vpack.c.b16 %v281, %v279
    %v326 = vpack.c.b16 %v282, %v280
    %v327 = vpack.c.b16 %v285, %v283
    %v328 = vpack.c.b16 %v286, %v284
    %v329 = vpack.c.b16 %v289, %v287
    %v330 = vpack.c.b16 %v290, %v288
    %v331 = vpack.c.b16 %v293, %v291
    %v332 = vpack.c.b16 %v294, %v292
    %v333 = vpack.c.b16 %v297, %v295
    %v334 = vpack.c.b16 %v298, %v296
    %v335 = vpack.c.b16 %v301, %v299
    %v336 = vpack.c.b16 %v302, %v300
    %v337 = vpack.c.b16 %v305, %v303
    %v338 = vpack.c.b16 %v306, %v304
    %v403 = vunpack.c.l.b16 %v179
    %v404 = vunpack.c.h.b16 %v179
    %v405 = vunpack.c.l.b16 %v180
    %v406 = vunpack.c.h.b16 %v180
    %v407 = vunpack.c.l.b16 %v181
    %v408 = vunpack.c.h.b16 %v181
    %v409 = vunpack.c.l.b16 %v182
    %v410 = vunpack.c.h.b16 %v182
    %v411 = vunpack.c.l.b16 %v183
    %v412 = vunpack.c.h.b16 %v183
    %v413 = vunpack.c.l.b16 %v184
    %v414 = vunpack.c.h.b16 %v184
    %v415 = vunpack.c.l.b16 %v185
    %v416 = vunpack.c.h.b16 %v185
    %v417 = vunpack.c.l.b16 %v186
    %v418 = vunpack.c.h.b16 %v186
    %v419 = vunpack.c.l.b16 %v187
    %v420 = vunpack.c.h.b16 %v187
    %v421 = vunpack.c.l.b16 %v188
    %v422 = vunpack.c.h.b16 %v188
    %v423 = vunpack.c.l.b16 %v189
    %v424 = vunpack.c.h.b16 %v189
    %v425 = vunpack.c.l.b16 %v190
    %v426 = vunpack.c.h.b16 %v190
    %v427 = vunpack.c.l.b16 %v191
    %v428 = vunpack.c.h.b16 %v191
    %v429 = vunpack.c.l.b16 %v192
    %v430 = vunpack.c.h.b16 %v192
    %v431 = vunpack.c.l.b16 %v193
    %v432 = vunpack.c.h.b16 %v193
    %v433 = vunpack.c.l.b16 %v194
    %v434 = vunpack.c.h.b16 %v194
    %v435 = vunpack.c.l.b16 %v195
    %v436 = vunpack.c.h.b16 %v195
    %v437 = vunpack.c.l.b16 %v196
    %v438 = vunpack.c.h.b16 %v196
    %v439 = vunpack.c.l.b16 %v197
    %v440 = vunpack.c.h.b16 %v197
    %v441 = vunpack.c.l.b16 %v198
    %v442 = vunpack.c.h.b16 %v198
    %v443 = vunpack.c.l.b16 %v199
    %v444 = vunpack.c.h.b16 %v199
    %v445 = vunpack.c.l.b16 %v200
    %v446 = vunpack.c.h.b16 %v200
    %v447 = vunpack.c.l.b16 %v201
    %v448 = vunpack.c.h.b16 %v201
    %v449 = vunpack.c.l.b16 %v202
    %v450 = vunpack.c.h.b16 %v202
    %v451 = vunpack.c.l.b16 %v203
    %v452 = vunpack.c.h.b16 %v203
    %v453 = vunpack.c.l.b16 %v204
    %v454 = vunpack.c.h.b16 %v204
    %v455 = vunpack.c.l.b16 %v205
    %v456 = vunpack.c.h.b16 %v205
    %v457 = vunpack.c.l.b16 %v206
    %v458 = vunpack.c.h.b16 %v206
    %v459 = vunpack.c.l.b16 %v207
    %v460 = vunpack.c.h.b16 %v207
    %v461 = vunpack.c.l.b16 %v208
    %v462 = vunpack.c.h.b16 %v208
    %v463 = vunpack.c.l.b16 %v209
    %v464 = vunpack.c.h.b16 %v209
    %v465 = vunpack.c.l.b16 %v210
    %v466 = vunpack.c.h.b16 %v210
    %v467 = vpack.c.b16 %v405, %v403
    %v468 = vpack.c.b16 %v406, %v404
    %v469 = vpack.c.b16 %v409, %v407
    %v470 = vpack.c.b16 %v410, %v408
    %v471 = vpack.c.b16 %v413, %v411
    %v472 = vpack.c.b16 %v414, %v412
    %v473 = vpack.c.b16 %v417, %v415
    %v474 = vpack.c.b16 %v418, %v416
    %v475 = vpack.c.b16 %v421, %v419
    %v476 = vpack.c.b16 %v422, %v420
    %v477 = vpack.c.b16 %v425, %v423
    %v478 = vpack.c.b16 %v426, %v424
    %v479 = vpack.c.b16 %v429, %v427
    %v480 = vpack.c.b16 %v430, %v428
    %v481 = vpack.c.b16 %v433, %v431
    %v482 = vpack.c.b16 %v434, %v432
    %v483 = vpack.c.b16 %v437, %v435
    %v484 = vpack.c.b16 %v438, %v436
    %v485 = vpack.c.b16 %v441, %v439
    %v486 = vpack.c.b16 %v442, %v440
    %v487 = vpack.c.b16 %v445, %v443
    %v488 = vpack.c.b16 %v446, %v444
    %v489 = vpack.c.b16 %v449, %v447
    %v490 = vpack.c.b16 %v450, %v448
    %v491 = vpack.c.b16 %v453, %v451
    %v492 = vpack.c.b16 %v454, %v452
    %v493 = vpack.c.b16 %v457, %v455
    %v494 = vpack.c.b16 %v458, %v456
    %v495 = vpack.c.b16 %v461, %v459
    %v496 = vpack.c.b16 %v462, %v460
    %v497 = vpack.c.b16 %v465, %v463
    %v498 = vpack.c.b16 %v466, %v464
    %531 = vmatprep.subr.bf16.mxu0 %v468
    %532 = vmatpush1.bf16.msra.mxu0 %v467
    %533 = vmatprep.subr.bf16.mxu0 %v470
    %534 = vmatpush1.bf16.msra.mxu0 %v469
    %535 = vmatprep.subr.bf16.mxu0 %v472
    %536 = vmatpush1.bf16.msra.mxu0 %v471
    %537 = vmatprep.subr.bf16.mxu0 %v474
    %538 = vmatpush1.bf16.msra.mxu0 %v473
    %539 = vmatprep.subr.bf16.mxu0 %v476
    %540 = vmatpush1.bf16.msra.mxu0 %v475
    %541 = vmatprep.subr.bf16.mxu0 %v478
    %542 = vmatpush1.bf16.msra.mxu0 %v477
    %543 = vmatprep.subr.bf16.mxu0 %v480
    %544 = vmatpush1.bf16.msra.mxu0 %v479
    %545 = vmatprep.subr.bf16.mxu0 %v482
    %546 = vmatpush1.bf16.msra.mxu0 %v481
    %547 = vmatprep.subr.bf16.mxu0 %v484
    %548 = vmatpush1.bf16.msra.mxu0 %v483
    %549 = vmatprep.subr.bf16.mxu0 %v486
    %550 = vmatpush1.bf16.msra.mxu0 %v485
    %551 = vmatprep.subr.bf16.mxu0 %v488
    %552 = vmatpush1.bf16.msra.mxu0 %v487
    %553 = vmatprep.subr.bf16.mxu0 %v490
    %554 = vmatpush1.bf16.msra.mxu0 %v489
    %555 = vmatprep.subr.bf16.mxu0 %v492
    %556 = vmatpush1.bf16.msra.mxu0 %v491
    %557 = vmatprep.subr.bf16.mxu0 %v494
    %558 = vmatpush1.bf16.msra.mxu0 %v493
    %559 = vmatprep.subr.bf16.mxu0 %v496
    %560 = vmatpush1.bf16.msra.mxu0 %v495
    %561 = vmatprep.subr.bf16.mxu0 %v498
    %562 = vmatpush1.bf16.msra.mxu0 %v497
    %563 = vmatprep.mubr.bf16.mxu0 %v308
    %564 = vmatmul.mubr.bf16.gmra.mrb[0].mxu0 %v307
    %v565 = vpop.f32.mrb[0].mxu0
    %v566 = vadd.f32 0.0, %v565
    %v567 = vpop.f32.mrb[0].mxu0
    %v568 = vadd.f32 0.0, %v567
    %v569 = vpop.f32.mrb[0].mxu0
    %v570 = vadd.f32 0.0, %v569
    %v571 = vpop.f32.mrb[0].mxu0
    %v572 = vadd.f32 0.0, %v571
    %573 = vmatprep.mubr.bf16.mxu0 %v310
    %574 = vmatmul.mubr.bf16.gmra.mrb[0].mxu0 %v309
    %v575 = vpop.f32.mrb[0].mxu0
    %v576 = vadd.f32 0.0, %v575
    %v577 = vpop.f32.mrb[0].mxu0
    %v578 = vadd.f32 0.0, %v577
    %v579 = vpop.f32.mrb[0].mxu0
    %v580 = vadd.f32 0.0, %v579
    %v581 = vpop.f32.mrb[0].mxu0
    %v582 = vadd.f32 0.0, %v581
    %583 = vmatprep.mubr.bf16.mxu0 %v312
    %584 = vmatmul.mubr.bf16.gmra.mrb[0].mxu0 %v311
    %v585 = vpop.f32.mrb[0].mxu0
    %v586 = vadd.f32 0.0, %v585
    %v587 = vpop.f32.mrb[0].mxu0
    %v588 = vadd.f32 0.0, %v587
    %v589 = vpop.f32.mrb[0].mxu0
    %v590 = vadd.f32 0.0, %v589
    %v591 = vpop.f32.mrb[0].mxu0
    %v592 = vadd.f32 0.0, %v591
    %593 = vmatprep.mubr.bf16.mxu0 %v314
    %594 = vmatmul.mubr.bf16.gmra.mrb[0].mxu0 %v313
    %v595 = vpop.f32.mrb[0].mxu0
    %v596 = vadd.f32 0.0, %v595
    %v597 = vpop.f32.mrb[0].mxu0
    %v598 = vadd.f32 0.0, %v597
    %v599 = vpop.f32.mrb[0].mxu0
    %v600 = vadd.f32 0.0, %v599
    %v601 = vpop.f32.mrb[0].mxu0
    %v602 = vadd.f32 0.0, %v601
    %603 = vmatprep.mubr.bf16.mxu0 %v316
    %604 = vmatmul.mubr.bf16.gmra.mrb[0].mxu0 %v315
    %v605 = vpop.f32.mrb[0].mxu0
    %v606 = vadd.f32 0.0, %v605
    %v607 = vpop.f32.mrb[0].mxu0
    %v608 = vadd.f32 0.0, %v607
    %v609 = vpop.f32.mrb[0].mxu0
    %v610 = vadd.f32 0.0, %v609
    %v611 = vpop.f32.mrb[0].mxu0
    %v612 = vadd.f32 0.0, %v611
    %613 = vmatprep.mubr.bf16.mxu0 %v318
    %614 = vmatmul.mubr.bf16.gmra.mrb[0].mxu0 %v317
    %v615 = vpop.f32.mrb[0].mxu0
    %v616 = vadd.f32 0.0, %v615
    %v617 = vpop.f32.mrb[0].mxu0
    %v618 = vadd.f32 0.0, %v617
    %v619 = vpop.f32.mrb[0].mxu0
    %v620 = vadd.f32 0.0, %v619
    %v621 = vpop.f32.mrb[0].mxu0
    %v622 = vadd.f32 0.0, %v621
    %623 = vmatprep.mubr.bf16.mxu0 %v320
    %624 = vmatmul.mubr.bf16.gmra.mrb[0].mxu0 %v319
    %v625 = vpop.f32.mrb[0].mxu0
    %v626 = vadd.f32 0.0, %v625
    %v627 = vpop.f32.mrb[0].mxu0
    %v628 = vadd.f32 0.0, %v627
    %v629 = vpop.f32.mrb[0].mxu0
    %v630 = vadd.f32 0.0, %v629
    %v631 = vpop.f32.mrb[0].mxu0
    %v632 = vadd.f32 0.0, %v631
    %633 = vmatprep.mubr.bf16.mxu0 %v322
    %634 = vmatmul.mubr.bf16.gmra.mrb[0].mxu0 %v321
    %v635 = vpop.f32.mrb[0].mxu0
    %v636 = vadd.f32 0.0, %v635
    %v637 = vpop.f32.mrb[0].mxu0
    %v638 = vadd.f32 0.0, %v637
    %v639 = vpop.f32.mrb[0].mxu0
    %v640 = vadd.f32 0.0, %v639
    %v641 = vpop.f32.mrb[0].mxu0
    %v642 = vadd.f32 0.0, %v641
    %643 = vmatprep.mubr.bf16.mxu0 %v324
    %644 = vmatmul.mubr.bf16.gmra.mrb[0].mxu0 %v323
    %v645 = vpop.f32.mrb[0].mxu0
    %v646 = vadd.f32 0.0, %v645
    %v647 = vpop.f32.mrb[0].mxu0
    %v648 = vadd.f32 0.0, %v647
    %v649 = vpop.f32.mrb[0].mxu0
    %v650 = vadd.f32 0.0, %v649
    %v651 = vpop.f32.mrb[0].mxu0
    %v652 = vadd.f32 0.0, %v651
    %653 = vmatprep.mubr.bf16.mxu0 %v326
    %654 = vmatmul.mubr.bf16.gmra.mrb[0].mxu0 %v325
    %v655 = vpop.f32.mrb[0].mxu0
    %v656 = vadd.f32 0.0, %v655
    %v657 = vpop.f32.mrb[0].mxu0
    %v658 = vadd.f32 0.0, %v657
    %v659 = vpop.f32.mrb[0].mxu0
    %v660 = vadd.f32 0.0, %v659
    %v661 = vpop.f32.mrb[0].mxu0
    %v662 = vadd.f32 0.0, %v661
    %663 = vmatprep.mubr.bf16.mxu0 %v328
    %664 = vmatmul.mubr.bf16.gmra.mrb[0].mxu0 %v327
    %v665 = vpop.f32.mrb[0].mxu0
    %v666 = vadd.f32 0.0, %v665
    %v667 = vpop.f32.mrb[0].mxu0
    %v668 = vadd.f32 0.0, %v667
    %v669 = vpop.f32.mrb[0].mxu0
    %v670 = vadd.f32 0.0, %v669
    %v671 = vpop.f32.mrb[0].mxu0
    %v672 = vadd.f32 0.0, %v671
    %673 = vmatprep.mubr.bf16.mxu0 %v330
    %674 = vmatmul.mubr.bf16.gmra.mrb[0].mxu0 %v329
    %v675 = vpop.f32.mrb[0].mxu0
    %v676 = vadd.f32 0.0, %v675
    %v677 = vpop.f32.mrb[0].mxu0
    %v678 = vadd.f32 0.0, %v677
    %v679 = vpop.f32.mrb[0].mxu0
    %v680 = vadd.f32 0.0, %v679
    %v681 = vpop.f32.mrb[0].mxu0
    %v682 = vadd.f32 0.0, %v681
    %683 = vmatprep.mubr.bf16.mxu0 %v332
    %684 = vmatmul.mubr.bf16.gmra.mrb[0].mxu0 %v331
    %v685 = vpop.f32.mrb[0].mxu0
    %v686 = vadd.f32 0.0, %v685
    %v687 = vpop.f32.mrb[0].mxu0
    %v688 = vadd.f32 0.0, %v687
    %v689 = vpop.f32.mrb[0].mxu0
    %v690 = vadd.f32 0.0, %v689
    %v691 = vpop.f32.mrb[0].mxu0
    %v692 = vadd.f32 0.0, %v691
    %693 = vmatprep.mubr.bf16.mxu0 %v334
    %694 = vmatmul.mubr.bf16.gmra.mrb[0].mxu0 %v333
    %v695 = vpop.f32.mrb[0].mxu0
    %v696 = vadd.f32 0.0, %v695
    %v697 = vpop.f32.mrb[0].mxu0
    %v698 = vadd.f32 0.0, %v697
    %v699 = vpop.f32.mrb[0].mxu0
    %v700 = vadd.f32 0.0, %v699
    %v701 = vpop.f32.mrb[0].mxu0
    %v702 = vadd.f32 0.0, %v701
    %703 = vmatprep.mubr.bf16.mxu0 %v336
    %704 = vmatmul.mubr.bf16.gmra.mrb[0].mxu0 %v335
    %v705 = vpop.f32.mrb[0].mxu0
    %v706 = vadd.f32 0.0, %v705
    %v707 = vpop.f32.mrb[0].mxu0
    %v708 = vadd.f32 0.0, %v707
    %v709 = vpop.f32.mrb[0].mxu0
    %v710 = vadd.f32 0.0, %v709
    %v711 = vpop.f32.mrb[0].mxu0
    %v712 = vadd.f32 0.0, %v711
    %713 = vmatprep.mubr.bf16.mxu0 %v338
    %714 = vmatmul.mubr.bf16.gmra.mrb[0].mxu0 %v337
    %v715 = vpop.f32.mrb[0].mxu0
    %v716 = vadd.f32 0.0, %v715
    %v717 = vpop.f32.mrb[0].mxu0
    %v718 = vadd.f32 0.0, %v717
    %v719 = vpop.f32.mrb[0].mxu0
    %v720 = vadd.f32 0.0, %v719
    %v721 = vpop.f32.mrb[0].mxu0
    %v722 = vadd.f32 0.0, %v721
    %723 = vdwg.mxu0
    %v724 = vadd.f32 %v83, %v566
    %v725 = vadd.f32 %v84, %v568
    %v726 = vadd.f32 %v85, %v570
    %v727 = vadd.f32 %v86, %v572
    %v728 = vadd.f32 %v87, %v576
    %v729 = vadd.f32 %v88, %v578
    %v730 = vadd.f32 %v89, %v580
    %v731 = vadd.f32 %v90, %v582
    %v732 = vadd.f32 %v91, %v586
    %v733 = vadd.f32 %v92, %v588
    %v734 = vadd.f32 %v93, %v590
    %v735 = vadd.f32 %v94, %v592
    %v736 = vadd.f32 %v95, %v596
    %v737 = vadd.f32 %v96, %v598
    %v738 = vadd.f32 %v97, %v600
    %v739 = vadd.f32 %v98, %v602
    %v740 = vadd.f32 %v99, %v606
    %v741 = vadd.f32 %v100, %v608
    %v742 = vadd.f32 %v101, %v610
    %v743 = vadd.f32 %v102, %v612
    %v744 = vadd.f32 %v103, %v616
    %v745 = vadd.f32 %v104, %v618
    %v746 = vadd.f32 %v105, %v620
    %v747 = vadd.f32 %v106, %v622
    %v748 = vadd.f32 %v107, %v626
    %v749 = vadd.f32 %v108, %v628
    %v750 = vadd.f32 %v109, %v630
    %v751 = vadd.f32 %v110, %v632
    %v752 = vadd.f32 %v111, %v636
    %v753 = vadd.f32 %v112, %v638
    %v754 = vadd.f32 %v113, %v640
    %v755 = vadd.f32 %v114, %v642
    %v756 = vadd.f32 %v115, %v646
    %v757 = vadd.f32 %v116, %v648
    %v758 = vadd.f32 %v117, %v650
    %v759 = vadd.f32 %v118, %v652
    %v760 = vadd.f32 %v119, %v656
    %v761 = vadd.f32 %v120, %v658
    %v762 = vadd.f32 %v121, %v660
    %v763 = vadd.f32 %v122, %v662
    %v764 = vadd.f32 %v123, %v666
    %v765 = vadd.f32 %v124, %v668
    %v766 = vadd.f32 %v125, %v670
    %v767 = vadd.f32 %v126, %v672
    %v768 = vadd.f32 %v127, %v676
    %v769 = vadd.f32 %v128, %v678
    %v770 = vadd.f32 %v129, %v680
    %v771 = vadd.f32 %v130, %v682
    %v772 = vadd.f32 %v131, %v686
    %v773 = vadd.f32 %v132, %v688
    %v774 = vadd.f32 %v133, %v690
    %v775 = vadd.f32 %v134, %v692
    %v776 = vadd.f32 %v135, %v696
    %v777 = vadd.f32 %v136, %v698
    %v778 = vadd.f32 %v137, %v700
    %v779 = vadd.f32 %v138, %v702
    %v780 = vadd.f32 %v139, %v706
    %v781 = vadd.f32 %v140, %v708
    %v782 = vadd.f32 %v141, %v710
    %v783 = vadd.f32 %v142, %v712
    %v784 = vadd.f32 %v143, %v716
    %v785 = vadd.f32 %v144, %v718
    %v786 = vadd.f32 %v145, %v720
    %v787 = vadd.f32 %v146, %v722
    %788 = vst [vmem:[#allocation2] sm:$0xff] %v724
    %789 = vst [vmem:[#allocation2 + $0x8] sm:$0xff] %v725
    %790 = vst [vmem:[#allocation2 + $0x10] sm:$0xff] %v726
    %791 = vst [vmem:[#allocation2 + $0x18] sm:$0xff] %v727
    %792 = vst [vmem:[#allocation2 + $0x20] sm:$0xff] %v728
    %793 = vst [vmem:[#allocation2 + $0x28] sm:$0xff] %v729
    %794 = vst [vmem:[#allocation2 + $0x30] sm:$0xff] %v730
    %795 = vst [vmem:[#allocation2 + $0x38] sm:$0xff] %v731
    %796 = vst [vmem:[#allocation2 + $0x40] sm:$0xff] %v732
    %797 = vst [vmem:[#allocation2 + $0x48] sm:$0xff] %v733
    %798 = vst [vmem:[#allocation2 + $0x50] sm:$0xff] %v734
    %799 = vst [vmem:[#allocation2 + $0x58] sm:$0xff] %v735
    %800 = vst [vmem:[#allocation2 + $0x60] sm:$0xff] %v736
    %801 = vst [vmem:[#allocation2 + $0x68] sm:$0xff] %v737
    %802 = vst [vmem:[#allocation2 + $0x70] sm:$0xff] %v738
    %803 = vst [vmem:[#allocation2 + $0x78] sm:$0xff] %v739
    %804 = vst [vmem:[#allocation2 + $0x80] sm:$0xff] %v740
    %805 = vst [vmem:[#allocation2 + $0x88] sm:$0xff] %v741
    %806 = vst [vmem:[#allocation2 + $0x90] sm:$0xff] %v742
    %807 = vst [vmem:[#allocation2 + $0x98] sm:$0xff] %v743
    %808 = vst [vmem:[#allocation2 + $0xa0] sm:$0xff] %v744
    %809 = vst [vmem:[#allocation2 + $0xa8] sm:$0xff] %v745
    %810 = vst [vmem:[#allocation2 + $0xb0] sm:$0xff] %v746
    %811 = vst [vmem:[#allocation2 + $0xb8] sm:$0xff] %v747
    %812 = vst [vmem:[#allocation2 + $0xc0] sm:$0xff] %v748
    %813 = vst [vmem:[#allocation2 + $0xc8] sm:$0xff] %v749
    %814 = vst [vmem:[#allocation2 + $0xd0] sm:$0xff] %v750
    %815 = vst [vmem:[#allocation2 + $0xd8] sm:$0xff] %v751
    %816 = vst [vmem:[#allocation2 + $0xe0] sm:$0xff] %v752
    %817 = vst [vmem:[#allocation2 + $0xe8] sm:$0xff] %v753
    %818 = vst [vmem:[#allocation2 + $0xf0] sm:$0xff] %v754
    %819 = vst [vmem:[#allocation2 + $0xf8] sm:$0xff] %v755
    %820 = vst [vmem:[#allocation2 + $0x100] sm:$0xff] %v756
    %821 = vst [vmem:[#allocation2 + $0x108] sm:$0xff] %v757
    %822 = vst [vmem:[#allocation2 + $0x110] sm:$0xff] %v758
    %823 = vst [vmem:[#allocation2 + $0x118] sm:$0xff] %v759
    %824 = vst [vmem:[#allocation2 + $0x120] sm:$0xff] %v760
    %825 = vst [vmem:[#allocation2 + $0x128] sm:$0xff] %v761
    %826 = vst [vmem:[#allocation2 + $0x130] sm:$0xff] %v762
    %827 = vst [vmem:[#allocation2 + $0x138] sm:$0xff] %v763
    %828 = vst [vmem:[#allocation2 + $0x140] sm:$0xff] %v764
    %829 = vst [vmem:[#allocation2 + $0x148] sm:$0xff] %v765
    %830 = vst [vmem:[#allocation2 + $0x150] sm:$0xff] %v766
    %831 = vst [vmem:[#allocation2 + $0x158] sm:$0xff] %v767
    %832 = vst [vmem:[#allocation2 + $0x160] sm:$0xff] %v768
    %833 = vst [vmem:[#allocation2 + $0x168] sm:$0xff] %v769
    %834 = vst [vmem:[#allocation2 + $0x170] sm:$0xff] %v770
    %835 = vst [vmem:[#allocation2 + $0x178] sm:$0xff] %v771
    %836 = vst [vmem:[#allocation2 + $0x180] sm:$0xff] %v772
    %837 = vst [vmem:[#allocation2 + $0x188] sm:$0xff] %v773
    %838 = vst [vmem:[#allocation2 + $0x190] sm:$0xff] %v774
    %839 = vst [vmem:[#allocation2 + $0x198] sm:$0xff] %v775
    %840 = vst [vmem:[#allocation2 + $0x1a0] sm:$0xff] %v776
    %841 = vst [vmem:[#allocation2 + $0x1a8] sm:$0xff] %v777
    %842 = vst [vmem:[#allocation2 + $0x1b0] sm:$0xff] %v778
    %843 = vst [vmem:[#allocation2 + $0x1b8] sm:$0xff] %v779
    %844 = vst [vmem:[#allocation2 + $0x1c0] sm:$0xff] %v780
    %845 = vst [vmem:[#allocation2 + $0x1c8] sm:$0xff] %v781
    %846 = vst [vmem:[#allocation2 + $0x1d0] sm:$0xff] %v782
    %847 = vst [vmem:[#allocation2 + $0x1d8] sm:$0xff] %v783
    %848 = vst [vmem:[#allocation2 + $0x1e0] sm:$0xff] %v784
    %849 = vst [vmem:[#allocation2 + $0x1e8] sm:$0xff] %v785
    %850 = vst [vmem:[#allocation2 + $0x1f0] sm:$0xff] %v786
    %851 = vst [vmem:[#allocation2 + $0x1f8] sm:$0xff] %v787
    // Predicated region
    $region18: #{attention_forward.5} parent=1 // pred_check
      %p852 = pneg %p15
    $region19: #{attention_forward.5} parent=1 // pred_check_branch
      %854 = sbr.rel (%p852) target = $region21
    $region20: #{attention_forward.5} parent=1 // pred_region
      %v855 = vld [vmem:[#allocation2] sm:$0xff]
      %v856 = vld [vmem:[#allocation2 + $0x8] sm:$0xff]
      %v857 = vld [vmem:[#allocation2 + $0x10] sm:$0xff]
      %v858 = vld [vmem:[#allocation2 + $0x18] sm:$0xff]
      %v859 = vld [vmem:[#allocation2 + $0x20] sm:$0xff]
      %v860 = vld [vmem:[#allocation2 + $0x28] sm:$0xff]
      %v861 = vld [vmem:[#allocation2 + $0x30] sm:$0xff]
      %v862 = vld [vmem:[#allocation2 + $0x38] sm:$0xff]
      %v863 = vld [vmem:[#allocation2 + $0x40] sm:$0xff]
      %v864 = vld [vmem:[#allocation2 + $0x48] sm:$0xff]
      %v865 = vld [vmem:[#allocation2 + $0x50] sm:$0xff]
      %v866 = vld [vmem:[#allocation2 + $0x58] sm:$0xff]
      %v867 = vld [vmem:[#allocation2 + $0x60] sm:$0xff]
      %v868 = vld [vmem:[#allocation2 + $0x68] sm:$0xff]
      %v869 = vld [vmem:[#allocation2 + $0x70] sm:$0xff]
      %v870 = vld [vmem:[#allocation2 + $0x78] sm:$0xff]
      %v871 = vld [vmem:[#allocation2 + $0x80] sm:$0xff]
      %v872 = vld [vmem:[#allocation2 + $0x88] sm:$0xff]
      %v873 = vld [vmem:[#allocation2 + $0x90] sm:$0xff]
      %v874 = vld [vmem:[#allocation2 + $0x98] sm:$0xff]
      %v875 = vld [vmem:[#allocation2 + $0xa0] sm:$0xff]
      %v876 = vld [vmem:[#allocation2 + $0xa8] sm:$0xff]
      %v877 = vld [vmem:[#allocation2 + $0xb0] sm:$0xff]
      %v878 = vld [vmem:[#allocation2 + $0xb8] sm:$0xff]
      %v879 = vld [vmem:[#allocation2 + $0xc0] sm:$0xff]
      %v880 = vld [vmem:[#allocation2 + $0xc8] sm:$0xff]
      %v881 = vld [vmem:[#allocation2 + $0xd0] sm:$0xff]
      %v882 = vld [vmem:[#allocation2 + $0xd8] sm:$0xff]
      %v883 = vld [vmem:[#allocation2 + $0xe0] sm:$0xff]
      %v884 = vld [vmem:[#allocation2 + $0xe8] sm:$0xff]
      %v885 = vld [vmem:[#allocation2 + $0xf0] sm:$0xff]
      %v886 = vld [vmem:[#allocation2 + $0xf8] sm:$0xff]
      %v887 = vld [vmem:[#allocation2 + $0x100] sm:$0xff]
      %v888 = vld [vmem:[#allocation2 + $0x108] sm:$0xff]
      %v889 = vld [vmem:[#allocation2 + $0x110] sm:$0xff]
      %v890 = vld [vmem:[#allocation2 + $0x118] sm:$0xff]
      %v891 = vld [vmem:[#allocation2 + $0x120] sm:$0xff]
      %v892 = vld [vmem:[#allocation2 + $0x128] sm:$0xff]
      %v893 = vld [vmem:[#allocation2 + $0x130] sm:$0xff]
      %v894 = vld [vmem:[#allocation2 + $0x138] sm:$0xff]
      %v895 = vld [vmem:[#allocation2 + $0x140] sm:$0xff]
      %v896 = vld [vmem:[#allocation2 + $0x148] sm:$0xff]
      %v897 = vld [vmem:[#allocation2 + $0x150] sm:$0xff]
      %v898 = vld [vmem:[#allocation2 + $0x158] sm:$0xff]
      %v899 = vld [vmem:[#allocation2 + $0x160] sm:$0xff]
      %v900 = vld [vmem:[#allocation2 + $0x168] sm:$0xff]
      %v901 = vld [vmem:[#allocation2 + $0x170] sm:$0xff]
      %v902 = vld [vmem:[#allocation2 + $0x178] sm:$0xff]
      %v903 = vld [vmem:[#allocation2 + $0x180] sm:$0xff]
      %v904 = vld [vmem:[#allocation2 + $0x188] sm:$0xff]
      %v905 = vld [vmem:[#allocation2 + $0x190] sm:$0xff]
      %v906 = vld [vmem:[#allocation2 + $0x198] sm:$0xff]
      %v907 = vld [vmem:[#allocation2 + $0x1a0] sm:$0xff]
      %v908 = vld [vmem:[#allocation2 + $0x1a8] sm:$0xff]
      %v909 = vld [vmem:[#allocation2 + $0x1b0] sm:$0xff]
      %v910 = vld [vmem:[#allocation2 + $0x1b8] sm:$0xff]
      %v911 = vld [vmem:[#allocation2 + $0x1c0] sm:$0xff]
      %v912 = vld [vmem:[#allocation2 + $0x1c8] sm:$0xff]
      %v913 = vld [vmem:[#allocation2 + $0x1d0] sm:$0xff]
      %v914 = vld [vmem:[#allocation2 + $0x1d8] sm:$0xff]
      %v915 = vld [vmem:[#allocation2 + $0x1e0] sm:$0xff]
      %v916 = vld [vmem:[#allocation2 + $0x1e8] sm:$0xff]
      %v917 = vld [vmem:[#allocation2 + $0x1f0] sm:$0xff]
      %v918 = vld [vmem:[#allocation2 + $0x1f8] sm:$0xff]
      %v919 = vld [vmem:[%s2] sm:$0x3]
      %v921 = vlaneseq
      %v922 = vshrl.u32 %v921, 7
      %v923 = vsub.s32 0, %v922
      %v924 = vrot.slane %v919, %v923
      %v925 = vlaneseq
      %v926 = vshrl.u32 %v925, 7
      %v927 = vsub.s32 1, %v926
      %v928 = vrot.slane %v919, %v927
      %v931 = vadd.f32 %v855, %v924
      %v932 = vadd.f32 %v856, %v928
      %v933 = vadd.f32 %v857, %v924
      %v934 = vadd.f32 %v858, %v928
      %v935 = vadd.f32 %v859, %v924
      %v936 = vadd.f32 %v860, %v928
      %v937 = vadd.f32 %v861, %v924
      %v938 = vadd.f32 %v862, %v928
      %v939 = vadd.f32 %v863, %v924
      %v940 = vadd.f32 %v864, %v928
      %v941 = vadd.f32 %v865, %v924
      %v942 = vadd.f32 %v866, %v928
      %v943 = vadd.f32 %v867, %v924
      %v944 = vadd.f32 %v868, %v928
      %v945 = vadd.f32 %v869, %v924
      %v946 = vadd.f32 %v870, %v928
      %v947 = vadd.f32 %v871, %v924
      %v948 = vadd.f32 %v872, %v928
      %v949 = vadd.f32 %v873, %v924
      %v950 = vadd.f32 %v874, %v928
      %v951 = vadd.f32 %v875, %v924
      %v952 = vadd.f32 %v876, %v928
      %v953 = vadd.f32 %v877, %v924
      %v954 = vadd.f32 %v878, %v928
      %v955 = vadd.f32 %v879, %v924
      %v956 = vadd.f32 %v880, %v928
      %v957 = vadd.f32 %v881, %v924
      %v958 = vadd.f32 %v882, %v928
      %v959 = vadd.f32 %v883, %v924
      %v960 = vadd.f32 %v884, %v928
      %v961 = vadd.f32 %v885, %v924
      %v962 = vadd.f32 %v886, %v928
      %v963 = vadd.f32 %v887, %v924
      %v964 = vadd.f32 %v888, %v928
      %v965 = vadd.f32 %v889, %v924
      %v966 = vadd.f32 %v890, %v928
      %v967 = vadd.f32 %v891, %v924
      %v968 = vadd.f32 %v892, %v928
      %v969 = vadd.f32 %v893, %v924
      %v970 = vadd.f32 %v894, %v928
      %v971 = vadd.f32 %v895, %v924
      %v972 = vadd.f32 %v896, %v928
      %v973 = vadd.f32 %v897, %v924
      %v974 = vadd.f32 %v898, %v928
      %v975 = vadd.f32 %v899, %v924
      %v976 = vadd.f32 %v900, %v928
      %v977 = vadd.f32 %v901, %v924
      %v978 = vadd.f32 %v902, %v928
      %v979 = vadd.f32 %v903, %v924
      %v980 = vadd.f32 %v904, %v928
      %v981 = vadd.f32 %v905, %v924
      %v982 = vadd.f32 %v906, %v928
      %v983 = vadd.f32 %v907, %v924
      %v984 = vadd.f32 %v908, %v928
      %v985 = vadd.f32 %v909, %v924
      %v986 = vadd.f32 %v910, %v928
      %v987 = vadd.f32 %v911, %v924
      %v988 = vadd.f32 %v912, %v928
      %v989 = vadd.f32 %v913, %v924
      %v990 = vadd.f32 %v914, %v928
      %v991 = vadd.f32 %v915, %v924
      %v992 = vadd.f32 %v916, %v928
      %v993 = vadd.f32 %v917, %v924
      %v994 = vadd.f32 %v918, %v928
      %995 = vst [vmem:[#allocation3] sm:$0xff] %v931
      %996 = vst [vmem:[#allocation3 + $0x8] sm:$0xff] %v932
      %997 = vst [vmem:[#allocation3 + $0x10] sm:$0xff] %v933
      %998 = vst [vmem:[#allocation3 + $0x18] sm:$0xff] %v934
      %999 = vst [vmem:[#allocation3 + $0x20] sm:$0xff] %v935
      %1000 = vst [vmem:[#allocation3 + $0x28] sm:$0xff] %v936
      %1001 = vst [vmem:[#allocation3 + $0x30] sm:$0xff] %v937
      %1002 = vst [vmem:[#allocation3 + $0x38] sm:$0xff] %v938
      %1003 = vst [vmem:[#allocation3 + $0x40] sm:$0xff] %v939
      %1004 = vst [vmem:[#allocation3 + $0x48] sm:$0xff] %v940
      %1005 = vst [vmem:[#allocation3 + $0x50] sm:$0xff] %v941
      %1006 = vst [vmem:[#allocation3 + $0x58] sm:$0xff] %v942
      %1007 = vst [vmem:[#allocation3 + $0x60] sm:$0xff] %v943
      %1008 = vst [vmem:[#allocation3 + $0x68] sm:$0xff] %v944
      %1009 = vst [vmem:[#allocation3 + $0x70] sm:$0xff] %v945
      %1010 = vst [vmem:[#allocation3 + $0x78] sm:$0xff] %v946
      %1011 = vst [vmem:[#allocation3 + $0x80] sm:$0xff] %v947
      %1012 = vst [vmem:[#allocation3 + $0x88] sm:$0xff] %v948
      %1013 = vst [vmem:[#allocation3 + $0x90] sm:$0xff] %v949
      %1014 = vst [vmem:[#allocation3 + $0x98] sm:$0xff] %v950
      %1015 = vst [vmem:[#allocation3 + $0xa0] sm:$0xff] %v951
      %1016 = vst [vmem:[#allocation3 + $0xa8] sm:$0xff] %v952
      %1017 = vst [vmem:[#allocation3 + $0xb0] sm:$0xff] %v953
      %1018 = vst [vmem:[#allocation3 + $0xb8] sm:$0xff] %v954
      %1019 = vst [vmem:[#allocation3 + $0xc0] sm:$0xff] %v955
      %1020 = vst [vmem:[#allocation3 + $0xc8] sm:$0xff] %v956
      %1021 = vst [vmem:[#allocation3 + $0xd0] sm:$0xff] %v957
      %1022 = vst [vmem:[#allocation3 + $0xd8] sm:$0xff] %v958
      %1023 = vst [vmem:[#allocation3 + $0xe0] sm:$0xff] %v959
      %1024 = vst [vmem:[#allocation3 + $0xe8] sm:$0xff] %v960
      %1025 = vst [vmem:[#allocation3 + $0xf0] sm:$0xff] %v961
      %1026 = vst [vmem:[#allocation3 + $0xf8] sm:$0xff] %v962
      %1027 = vst [vmem:[#allocation3 + $0x100] sm:$0xff] %v963
      %1028 = vst [vmem:[#allocation3 + $0x108] sm:$0xff] %v964
      %1029 = vst [vmem:[#allocation3 + $0x110] sm:$0xff] %v965
      %1030 = vst [vmem:[#allocation3 + $0x118] sm:$0xff] %v966
      %1031 = vst [vmem:[#allocation3 + $0x120] sm:$0xff] %v967
      %1032 = vst [vmem:[#allocation3 + $0x128] sm:$0xff] %v968
      %1033 = vst [vmem:[#allocation3 + $0x130] sm:$0xff] %v969
      %1034 = vst [vmem:[#allocation3 + $0x138] sm:$0xff] %v970
      %1035 = vst [vmem:[#allocation3 + $0x140] sm:$0xff] %v971
      %1036 = vst [vmem:[#allocation3 + $0x148] sm:$0xff] %v972
      %1037 = vst [vmem:[#allocation3 + $0x150] sm:$0xff] %v973
      %1038 = vst [vmem:[#allocation3 + $0x158] sm:$0xff] %v974
      %1039 = vst [vmem:[#allocation3 + $0x160] sm:$0xff] %v975
      %1040 = vst [vmem:[#allocation3 + $0x168] sm:$0xff] %v976
      %1041 = vst [vmem:[#allocation3 + $0x170] sm:$0xff] %v977
      %1042 = vst [vmem:[#allocation3 + $0x178] sm:$0xff] %v978
      %1043 = vst [vmem:[#allocation3 + $0x180] sm:$0xff] %v979
      %1044 = vst [vmem:[#allocation3 + $0x188] sm:$0xff] %v980
      %1045 = vst [vmem:[#allocation3 + $0x190] sm:$0xff] %v981
      %1046 = vst [vmem:[#allocation3 + $0x198] sm:$0xff] %v982
      %1047 = vst [vmem:[#allocation3 + $0x1a0] sm:$0xff] %v983
      %1048 = vst [vmem:[#allocation3 + $0x1a8] sm:$0xff] %v984
      %1049 = vst [vmem:[#allocation3 + $0x1b0] sm:$0xff] %v985
      %1050 = vst [vmem:[#allocation3 + $0x1b8] sm:$0xff] %v986
      %1051 = vst [vmem:[#allocation3 + $0x1c0] sm:$0xff] %v987
      %1052 = vst [vmem:[#allocation3 + $0x1c8] sm:$0xff] %v988
      %1053 = vst [vmem:[#allocation3 + $0x1d0] sm:$0xff] %v989
      %1054 = vst [vmem:[#allocation3 + $0x1d8] sm:$0xff] %v990
      %1055 = vst [vmem:[#allocation3 + $0x1e0] sm:$0xff] %v991
      %1056 = vst [vmem:[#allocation3 + $0x1e8] sm:$0xff] %v992
      %1057 = vst [vmem:[#allocation3 + $0x1f0] sm:$0xff] %v993
      %1058 = vst [vmem:[#allocation3 + $0x1f8] sm:$0xff] %v994
    $region21: #{attention_forward.5} parent=1 // pred_fallthru
      _
    // Predicated region
    $region22: #{attention_forward.5} parent=1 // pred_check
      _
    $region23: #{attention_forward.5} parent=1 // pred_check_branch
      %1060 = sbr.rel (0) target = $region25
    $region24: #{attention_forward.5} parent=1 // pred_region
      %s1062 = ssub.s32 8192, 8192
      %1063 = vsyncadd [#allocation4], %s1062
      %s1064 = sshll.u32 [#allocation3], 4
      %s1065 = int_to_ptr.vmem [resolvable:$true] %s1064
      %1070 = dma.vmem_to_hbm [thread:$0]  %s1065, 8192, %s3, [#allocation4], 256, 256, 16
    $region25: #{attention_forward.5} parent=1 // pred_fallthru
      _
    // Predicated region
    $region26: #{attention_forward.5} parent=1 // pred_check
      _
    $region27: #{attention_forward.5} parent=1 // pred_check_branch
      %1072 = sbr.rel (0) target = $region29
    $region28: #{attention_forward.5} parent=1 // pred_region
      %1073 = dma.done [#allocation4], 8192
    $region29: #{attention_forward.5} parent=1 // pred_fallthru
      _
    %1074 = vsyncpa [#allocation4], 1

</llo_original>
